<compile_context>
chip_gen: v6e
topology: v6e:2x2x1
jax: 0.10.0
libtpu: 0.0.40
codegen_flags: <defaults>
</compile_context>

<pallas_src>
import jax
import jax.numpy as jnp
from jax.experimental import pallas as pl
from jax.experimental.pallas import tpu as pltpu

# Logical (PyTorch) dims.
LATENT_DIM = 100
HIDDEN = 500
OUTPUT_DIM = 28 * 28  # 784
BN_EPS = 1e-5

# Lane-padded dims (multiples of 128).
LATENT_P = 128
HIDDEN_P = 512
OUT_P = 1024  # 784 -> 1024 so every output block is lane-dense


def _tensorcores_per_chip():
    """2 TensorCores on v7x, 1 on v5e/v6e (best-effort; default 1)."""
    try:
        kind = jax.devices()[0].device_kind.lower()
    except Exception:
        return 1
    return 2 if "v7" in kind else 1


def _softplus(x):
    # Numerically stable softplus; equivalent to torch.nn.Softplus (beta=1).
    return jnp.maximum(x, 0.0) + jnp.log1p(jnp.exp(-jnp.abs(x)))


def _batchnorm_train(h, gamma, beta):
    # BatchNorm1d training-mode semantics: biased variance over the batch axis.
    # gamma is folded into the inv-std on the (1, F) row before broadcasting.
    mean = jnp.mean(h, axis=0, keepdims=True)
    centered = h - mean
    var = jnp.mean(centered * centered, axis=0, keepdims=True)
    scale = jax.lax.rsqrt(var + BN_EPS) * gamma        # (1, F)
    return centered * scale + beta


def generator_kernel(noise_ref,
                     w1_ref, b1_ref, g1_ref, be1_ref,
                     w2_ref, b2_ref, g2_ref, be2_ref,
                     w3_ref, b3_ref,
                     out_ref):
    x = noise_ref[...].astype(jnp.bfloat16)            # (bn_batch, 128)

    # --- Block 1: Linear -> Softplus -> BatchNorm1d -------------------------
    h = jnp.dot(x, w1_ref[...], preferred_element_type=jnp.float32) + b1_ref[...]
    h = _softplus(h)
    h = _batchnorm_train(h, g1_ref[...], be1_ref[...])

    # --- Block 2: Linear -> Softplus -> BatchNorm1d -------------------------
    h = jnp.dot(h.astype(jnp.bfloat16), w2_ref[...],
                preferred_element_type=jnp.float32) + b2_ref[...]
    h = _softplus(h)
    h = _batchnorm_train(h, g2_ref[...], be2_ref[...])

    # --- Block 3 (this step's N-slice): weight-norm Linear -> Sigmoid -------
    y = jnp.dot(h.astype(jnp.bfloat16), w3_ref[...],
                preferred_element_type=jnp.float32) + b3_ref[...]
    e = jnp.exp(-y)
    s = pl.reciprocal(1.0 + e, approx=True)            # EUP slot
    out_ref[...] = jnp.minimum(s, 1.0)                 # guard approx overshoot


def generator_forward(noise, packed_params, *, bn_batch=None, n_split=None,
                      unpad_output=True):
    """Run the generator.

    noise:         (N, 100) f32 (a (N, 128) pre-padded array is also accepted).
    packed_params: output of pack_params().
    bn_batch:      BatchNorm batch size. Default: N (single batch, identical to
                   one module call).  If bn_batch < N, the N rows are processed
                   as N // bn_batch independent BN batches inside ONE
                   pallas_call (weights DMA'd once) -- equivalent to calling
                   the module once per chunk.
    n_split:       Override the output-column split of the last layer.
    """
    (w1, b1, g1, be1, w2, b2, g2, be2, w3, b3) = packed_params
    total = noise.shape[0]
    bn_batch = total if bn_batch is None else int(bn_batch)

    if bn_batch < 2:
        # PyTorch's BatchNorm1d raises for batch size 1 in training mode.
        raise ValueError("BatchNorm1d training-mode stats require batch >= 2")
    if total % bn_batch != 0:
        raise ValueError("noise rows must be a multiple of bn_batch")
    n_chunks = total // bn_batch
    if n_chunks > 1 and bn_batch % 8 != 0:
        raise ValueError("bn_batch must be a multiple of 8 when chunking")

    if n_split is None:
        # Megacore N-split only pays off with 2 TensorCores AND a large enough
        # MXU M dim; otherwise it just duplicates blocks 1-2 on a serial grid.
        # With multiple chunks the chunk axis already feeds both cores.
        n_split = 2 if (_tensorcores_per_chip() >= 2
                        and bn_batch >= 128 and n_chunks == 1) else 1
    out_block = OUT_P // n_split

    # Pad latent dim 100 -> 128 with zeros (zero weight rows make this exact).
    noise = noise.astype(jnp.float32)
    if noise.shape[1] != LATENT_P:
        noise = jnp.pad(noise, ((0, 0), (0, LATENT_P - noise.shape[1])))

    # Resident (constant-index) operands: single-buffer them when the grid has
    # more than one step (second pipeline buffer is dead VMEM for these).
    single_buffer = (n_chunks * n_split) > 1

    def param_spec(shape):
        index_map = lambda c, i: (0, 0)
        if single_buffer:
            try:
                return pl.BlockSpec(shape, index_map,
                                    pipeline_mode=pl.Buffered(1))
            except (TypeError, AttributeError):
                pass  # older Pallas: fall back to default buffering
        return pl.BlockSpec(shape, index_map)

    # w3/b3 keep default double-buffering when split so the next column block
    # prefetches during compute; when not split they are resident too.
    if n_split == 1:
        w3_spec = param_spec((HIDDEN_P, out_block))
        b3_spec = param_spec((1, out_block))
    else:
        w3_spec = pl.BlockSpec((HIDDEN_P, out_block), lambda c, i: (0, i))
        b3_spec = pl.BlockSpec((1, out_block), lambda c, i: (0, i))

    # ~1.7 MiB of bf16 weights (+ buffers) plus f32 activations that scale with
    # bn_batch; keep the scoped limit modest but batch-aware.
    vmem_limit = int(min(56 << 20, (16 << 20) + 2 * bn_batch * 48 * 1024))

    out_p = pl.pallas_call(
        generator_kernel,
        out_shape=jax.ShapeDtypeStruct((total, OUT_P), jnp.float32),
        grid=(n_chunks, n_split),
        in_specs=[
            pl.BlockSpec((bn_batch, LATENT_P), lambda c, i: (c, 0)),
            param_spec((LATENT_P, HIDDEN_P)), param_spec((1, HIDDEN_P)),
            param_spec((1, HIDDEN_P)), param_spec((1, HIDDEN_P)),
            param_spec((HIDDEN_P, HIDDEN_P)), param_spec((1, HIDDEN_P)),
            param_spec((1, HIDDEN_P)), param_spec((1, HIDDEN_P)),
            w3_spec,
            b3_spec,
        ],
        out_specs=pl.BlockSpec((bn_batch, out_block), lambda c, i: (c, i)),
        compiler_params=pltpu.CompilerParams(
            # chunks and column-splits are independent work items
            dimension_semantics=("parallel", "parallel"),
            vmem_limit_bytes=vmem_limit,
        ),
    )(noise, w1, b1, g1, be1, w2, b2, g2, be2, w3, b3)

    # Slice the lane padding back off (784 real output features), unless the
    # caller prefers the padded slab (fuses the slice into the consumer).
    return out_p[:, :OUTPUT_DIM] if unpad_output else out_p


def init_params(key):
    """Deterministic parameter init mimicking PyTorch defaults (uniform +-1/sqrt(fan_in))."""
    ks = jax.random.split(key, 6)

    def linear_init(kw, kb, fan_in, fan_out):
        bound = 1.0 / jnp.sqrt(jnp.float32(fan_in))
        # stored as (in, out) — transpose of PyTorch's (out, in)
        w = jax.random.uniform(kw, (fan_in, fan_out), jnp.float32, -bound, bound)
        b = jax.random.uniform(kb, (1, fan_out), jnp.float32, -bound, bound)
        return w, b

    w1, b1 = linear_init(ks[0], ks[1], LATENT_DIM, HIDDEN)
    w2, b2 = linear_init(ks[2], ks[3], HIDDEN, HIDDEN)
    v3, b3 = linear_init(ks[4], ks[5], HIDDEN, OUTPUT_DIM)

    # BatchNorm1d affine params: gamma=1, beta=0 (fresh module).
    g1 = jnp.ones((1, HIDDEN), jnp.float32)
    be1 = jnp.zeros((1, HIDDEN), jnp.float32)
    g2 = jnp.ones((1, HIDDEN), jnp.float32)
    be2 = jnp.zeros((1, HIDDEN), jnp.float32)

    # weight_norm (dim=0 in PyTorch => per-output-row norm). At init g = ||v||,
    # so the effective weight equals v; keep the general formula anyway.
    # v3 here is (in, out): per-output norm is over the `in` axis (axis=0).
    v_norm = jnp.sqrt(jnp.sum(v3 * v3, axis=0, keepdims=True))  # (1, out)
    g3 = v_norm                                                  # init value of g
    w3_eff = v3 * (g3 / v_norm)                                  # (in, out)

    return (w1, b1, g1, be1, w2, b2, g2, be2, w3_eff, b3)


def pack_params(params):
    """Pad to lane multiples of 128 and cast weight matrices to bf16 (one-time)."""
    (w1, b1, g1, be1, w2, b2, g2, be2, w3_eff, b3) = params

    def pad2(a, rows, cols):
        return jnp.pad(a, ((0, rows - a.shape[0]), (0, cols - a.shape[1])))

    w1p = pad2(w1, LATENT_P, HIDDEN_P).astype(jnp.bfloat16)
    w2p = pad2(w2, HIDDEN_P, HIDDEN_P).astype(jnp.bfloat16)
    w3p = pad2(w3_eff, HIDDEN_P, OUT_P).astype(jnp.bfloat16)

    b1p = pad2(b1, 1, HIDDEN_P)
    g1p = pad2(g1, 1, HIDDEN_P)    # padded gamma/beta are 0 -> padded BN cols are 0
    be1p = pad2(be1, 1, HIDDEN_P)
    b2p = pad2(b2, 1, HIDDEN_P)
    g2p = pad2(g2, 1, HIDDEN_P)
    be2p = pad2(be2, 1, HIDDEN_P)
    b3p = pad2(b3, 1, OUT_P)

    return (w1p, b1p, g1p, be1p, w2p, b2p, g2p, be2p, w3p, b3p)


if __name__ == "__main__":
    key = jax.random.PRNGKey(0)
    k_params, k_noise = jax.random.split(key)

    params = init_params(k_params)
    packed = pack_params(params)

    batch = 8
    noise = jax.random.normal(k_noise, (batch, LATENT_DIM), jnp.float32)

    out = generator_forward(noise, packed)
    out = jax.block_until_ready(out)

    assert out.shape == (batch, OUTPUT_DIM)
    assert bool(jnp.all(jnp.isfinite(out)))
    assert bool(jnp.all((out >= 0.0) & (out <= 1.0)))  # sigmoid range
    print("KERNEL_OK")
</pallas_src>

<mosaic_0001>
module attributes {stable_mosaic.version = 11 : i64} {
  func.func @generator_kernel(%arg0: i32, %arg1: i32, %arg2: memref<8x128xf32, #tpu.memory_space<vmem>>, %arg3: memref<128x512xbf16, #tpu.memory_space<vmem>>, %arg4: memref<1x512xf32, #tpu.memory_space<vmem>>, %arg5: memref<1x512xf32, #tpu.memory_space<vmem>>, %arg6: memref<1x512xf32, #tpu.memory_space<vmem>>, %arg7: memref<512x512xbf16, #tpu.memory_space<vmem>>, %arg8: memref<1x512xf32, #tpu.memory_space<vmem>>, %arg9: memref<1x512xf32, #tpu.memory_space<vmem>>, %arg10: memref<1x512xf32, #tpu.memory_space<vmem>>, %arg11: memref<512x1024xbf16, #tpu.memory_space<vmem>>, %arg12: memref<1x1024xf32, #tpu.memory_space<vmem>>, %arg13: memref<8x1024xf32, #tpu.memory_space<vmem>>) attributes {dimension_semantics = [#tpu.dimension_semantics<parallel>, #tpu.dimension_semantics<parallel>], iteration_bounds = array<i64: 1, 1>, scalar_prefetch = 0 : i64, scratch_operands = 0 : i64, tpu.core_type = #tpu.core_type<tc>, window_params = [{transform_indices = @transform_0, window_bounds = array<i64: 8, 128>}, {pipeline_mode = #tpu.pipeline_mode<synchronous>, transform_indices = @transform_1, window_bounds = array<i64: 128, 512>}, {pipeline_mode = #tpu.pipeline_mode<synchronous>, transform_indices = @transform_2, window_bounds = array<i64: 1, 512>}, {pipeline_mode = #tpu.pipeline_mode<synchronous>, transform_indices = @transform_3, window_bounds = array<i64: 1, 512>}, {pipeline_mode = #tpu.pipeline_mode<synchronous>, transform_indices = @transform_4, window_bounds = array<i64: 1, 512>}, {pipeline_mode = #tpu.pipeline_mode<synchronous>, transform_indices = @transform_5, window_bounds = array<i64: 512, 512>}, {pipeline_mode = #tpu.pipeline_mode<synchronous>, transform_indices = @transform_6, window_bounds = array<i64: 1, 512>}, {pipeline_mode = #tpu.pipeline_mode<synchronous>, transform_indices = @transform_7, window_bounds = array<i64: 1, 512>}, {pipeline_mode = #tpu.pipeline_mode<synchronous>, transform_indices = @transform_8, window_bounds = array<i64: 1, 512>}, {pipeline_mode = #tpu.pipeline_mode<synchronous>, transform_indices = @transform_9, window_bounds = array<i64: 512, 1024>}, {pipeline_mode = #tpu.pipeline_mode<synchronous>, transform_indices = @transform_10, window_bounds = array<i64: 1, 1024>}, {transform_indices = @transform_11, window_bounds = array<i64: 8, 1024>}]} {
    %c0 = arith.constant 0 : index
    %c0_0 = arith.constant 0 : index
    %0 = vector.load %arg2[%c0, %c0_0] : memref<8x128xf32, #tpu.memory_space<vmem>>, vector<8x128xf32>
    %1 = arith.truncf %0 : vector<8x128xf32> to vector<8x128xbf16>
    %c0_1 = arith.constant 0 : index
    %c0_2 = arith.constant 0 : index
    %2 = vector.load %arg3[%c0_1, %c0_2] : memref<128x512xbf16, #tpu.memory_space<vmem>>, vector<128x512xbf16>
    %cst = arith.constant dense<0.000000e+00> : vector<8x512xf32>
    %3 = tpu.matmul %1, %2, %cst {dimension_numbers = #tpu.dot_dimension_numbers<[1], [0], [0], [1], [0, 0, 1, 1], [], []>} : vector<8x128xbf16>, vector<128x512xbf16>, vector<8x512xf32> -> vector<8x512xf32>
    %c0_3 = arith.constant 0 : index
    %c0_4 = arith.constant 0 : index
    %4 = vector.load %arg4[%c0_3, %c0_4] : memref<1x512xf32, #tpu.memory_space<vmem>>, vector<1x512xf32>
    %5 = vector.broadcast %4 : vector<1x512xf32> to vector<8x512xf32>
    %6 = arith.addf %3, %5 : vector<8x512xf32>
    %cst_5 = arith.constant 0.000000e+00 : f32
    %7 = vector.broadcast %cst_5 : f32 to vector<8x512xf32>
    %8 = arith.maximumf %6, %7 : vector<8x512xf32>
    %9 = math.absf %6 : vector<8x512xf32>
    %cst_6 = arith.constant 0.000000e+00 : f32
    %10 = vector.broadcast %cst_6 : f32 to vector<8x512xf32>
    %11 = arith.subf %10, %9 : vector<8x512xf32>
    %12 = math.exp %11 : vector<8x512xf32>
    %13 = math.log1p %12 : vector<8x512xf32>
    %14 = arith.addf %8, %13 : vector<8x512xf32>
    %c0_7 = arith.constant 0 : index
    %c0_8 = arith.constant 0 : index
    %15 = vector.load %arg5[%c0_7, %c0_8] : memref<1x512xf32, #tpu.memory_space<vmem>>, vector<1x512xf32>
    %c0_9 = arith.constant 0 : index
    %c0_10 = arith.constant 0 : index
    %16 = vector.load %arg6[%c0_9, %c0_10] : memref<1x512xf32, #tpu.memory_space<vmem>>, vector<1x512xf32>
    %cst_11 = arith.constant dense<0.000000e+00> : vector<512xf32>
    %17 = vector.multi_reduction <add>, %14, %cst_11 [0] : vector<8x512xf32> to vector<512xf32>
    %18 = vector.shape_cast %17 : vector<512xf32> to vector<1x512xf32>
    %cst_12 = arith.constant 8.000000e+00 : f32
    %19 = vector.broadcast %cst_12 : f32 to vector<1x512xf32>
    %20 = arith.divf %18, %19 : vector<1x512xf32>
    %21 = vector.broadcast %20 : vector<1x512xf32> to vector<8x512xf32>
    %22 = arith.subf %14, %21 : vector<8x512xf32>
    %23 = arith.mulf %22, %22 : vector<8x512xf32>
    %cst_13 = arith.constant dense<0.000000e+00> : vector<512xf32>
    %24 = vector.multi_reduction <add>, %23, %cst_13 [0] : vector<8x512xf32> to vector<512xf32>
    %25 = vector.shape_cast %24 : vector<512xf32> to vector<1x512xf32>
    %cst_14 = arith.constant 8.000000e+00 : f32
    %26 = vector.broadcast %cst_14 : f32 to vector<1x512xf32>
    %27 = arith.divf %25, %26 : vector<1x512xf32>
    %cst_15 = arith.constant 9.99999974E-6 : f32
    %28 = vector.broadcast %cst_15 : f32 to vector<1x512xf32>
    %29 = arith.addf %27, %28 : vector<1x512xf32>
    %30 = math.rsqrt %29 : vector<1x512xf32>
    %31 = arith.mulf %30, %15 : vector<1x512xf32>
    %32 = vector.broadcast %31 : vector<1x512xf32> to vector<8x512xf32>
    %33 = arith.mulf %22, %32 : vector<8x512xf32>
    %34 = vector.broadcast %16 : vector<1x512xf32> to vector<8x512xf32>
    %35 = arith.addf %33, %34 : vector<8x512xf32>
    %36 = arith.truncf %35 : vector<8x512xf32> to vector<8x512xbf16>
    %c0_16 = arith.constant 0 : index
    %c0_17 = arith.constant 0 : index
    %37 = vector.load %arg7[%c0_16, %c0_17] : memref<512x512xbf16, #tpu.memory_space<vmem>>, vector<512x512xbf16>
    %cst_18 = arith.constant dense<0.000000e+00> : vector<8x512xf32>
    %38 = tpu.matmul %36, %37, %cst_18 {dimension_numbers = #tpu.dot_dimension_numbers<[1], [0], [0], [1], [0, 0, 1, 1], [], []>} : vector<8x512xbf16>, vector<512x512xbf16>, vector<8x512xf32> -> vector<8x512xf32>
    %c0_19 = arith.constant 0 : index
    %c0_20 = arith.constant 0 : index
    %39 = vector.load %arg8[%c0_19, %c0_20] : memref<1x512xf32, #tpu.memory_space<vmem>>, vector<1x512xf32>
    %40 = vector.broadcast %39 : vector<1x512xf32> to vector<8x512xf32>
    %41 = arith.addf %38, %40 : vector<8x512xf32>
    %cst_21 = arith.constant 0.000000e+00 : f32
    %42 = vector.broadcast %cst_21 : f32 to vector<8x512xf32>
    %43 = arith.maximumf %41, %42 : vector<8x512xf32>
    %44 = math.absf %41 : vector<8x512xf32>
    %cst_22 = arith.constant 0.000000e+00 : f32
    %45 = vector.broadcast %cst_22 : f32 to vector<8x512xf32>
    %46 = arith.subf %45, %44 : vector<8x512xf32>
    %47 = math.exp %46 : vector<8x512xf32>
    %48 = math.log1p %47 : vector<8x512xf32>
    %49 = arith.addf %43, %48 : vector<8x512xf32>
    %c0_23 = arith.constant 0 : index
    %c0_24 = arith.constant 0 : index
    %50 = vector.load %arg9[%c0_23, %c0_24] : memref<1x512xf32, #tpu.memory_space<vmem>>, vector<1x512xf32>
    %c0_25 = arith.constant 0 : index
    %c0_26 = arith.constant 0 : index
    %51 = vector.load %arg10[%c0_25, %c0_26] : memref<1x512xf32, #tpu.memory_space<vmem>>, vector<1x512xf32>
    %cst_27 = arith.constant dense<0.000000e+00> : vector<512xf32>
    %52 = vector.multi_reduction <add>, %49, %cst_27 [0] : vector<8x512xf32> to vector<512xf32>
    %53 = vector.shape_cast %52 : vector<512xf32> to vector<1x512xf32>
    %cst_28 = arith.constant 8.000000e+00 : f32
    %54 = vector.broadcast %cst_28 : f32 to vector<1x512xf32>
    %55 = arith.divf %53, %54 : vector<1x512xf32>
    %56 = vector.broadcast %55 : vector<1x512xf32> to vector<8x512xf32>
    %57 = arith.subf %49, %56 : vector<8x512xf32>
    %58 = arith.mulf %57, %57 : vector<8x512xf32>
    %cst_29 = arith.constant dense<0.000000e+00> : vector<512xf32>
    %59 = vector.multi_reduction <add>, %58, %cst_29 [0] : vector<8x512xf32> to vector<512xf32>
    %60 = vector.shape_cast %59 : vector<512xf32> to vector<1x512xf32>
    %cst_30 = arith.constant 8.000000e+00 : f32
    %61 = vector.broadcast %cst_30 : f32 to vector<1x512xf32>
    %62 = arith.divf %60, %61 : vector<1x512xf32>
    %cst_31 = arith.constant 9.99999974E-6 : f32
    %63 = vector.broadcast %cst_31 : f32 to vector<1x512xf32>
    %64 = arith.addf %62, %63 : vector<1x512xf32>
    %65 = math.rsqrt %64 : vector<1x512xf32>
    %66 = arith.mulf %65, %50 : vector<1x512xf32>
    %67 = vector.broadcast %66 : vector<1x512xf32> to vector<8x512xf32>
    %68 = arith.mulf %57, %67 : vector<8x512xf32>
    %69 = vector.broadcast %51 : vector<1x512xf32> to vector<8x512xf32>
    %70 = arith.addf %68, %69 : vector<8x512xf32>
    %71 = arith.truncf %70 : vector<8x512xf32> to vector<8x512xbf16>
    %c0_32 = arith.constant 0 : index
    %c0_33 = arith.constant 0 : index
    %72 = vector.load %arg11[%c0_32, %c0_33] : memref<512x1024xbf16, #tpu.memory_space<vmem>>, vector<512x1024xbf16>
    %cst_34 = arith.constant dense<0.000000e+00> : vector<8x1024xf32>
    %73 = tpu.matmul %71, %72, %cst_34 {dimension_numbers = #tpu.dot_dimension_numbers<[1], [0], [0], [1], [0, 0, 1, 1], [], []>} : vector<8x512xbf16>, vector<512x1024xbf16>, vector<8x1024xf32> -> vector<8x1024xf32>
    %c0_35 = arith.constant 0 : index
    %c0_36 = arith.constant 0 : index
    %74 = vector.load %arg12[%c0_35, %c0_36] : memref<1x1024xf32, #tpu.memory_space<vmem>>, vector<1x1024xf32>
    %75 = vector.broadcast %74 : vector<1x1024xf32> to vector<8x1024xf32>
    %76 = arith.addf %73, %75 : vector<8x1024xf32>
    %cst_37 = arith.constant 0.000000e+00 : f32
    %77 = vector.broadcast %cst_37 : f32 to vector<8x1024xf32>
    %78 = arith.subf %77, %76 : vector<8x1024xf32>
    %79 = math.exp %78 : vector<8x1024xf32>
    %cst_38 = arith.constant 1.000000e+00 : f32
    %80 = vector.broadcast %cst_38 : f32 to vector<8x1024xf32>
    %81 = arith.addf %80, %79 : vector<8x1024xf32>
    %82 = tpu.reciprocal %81 {approx = true} : vector<8x1024xf32> -> vector<8x1024xf32>
    %cst_39 = arith.constant 1.000000e+00 : f32
    %83 = vector.broadcast %cst_39 : f32 to vector<8x1024xf32>
    %84 = arith.minimumf %82, %83 : vector<8x1024xf32>
    %c0_40 = arith.constant 0 : index
    %c0_41 = arith.constant 0 : index
    %85 = vector.load %arg13[%c0_40, %c0_41] : memref<8x1024xf32, #tpu.memory_space<vmem>>, vector<8x1024xf32>
    tpu.vector_store %arg13[%c0_40, %c0_41], %84 {strides = array<i32>} : memref<8x1024xf32, #tpu.memory_space<vmem>>, vector<8x1024xf32>,
    return
  }
  func.func @transform_0(%arg0: i32, %arg1: i32) -> (i32, i32) {
    %c0_i32 = arith.constant 0 : i32
    %c0_i32_0 = arith.constant 0 : i32
    return %arg0, %c0_i32 : i32, i32
  }
  func.func @transform_1(%arg0: i32, %arg1: i32) -> (i32, i32) {
    %c0_i32 = arith.constant 0 : i32
    %c0_i32_0 = arith.constant 0 : i32
    %c0_i32_1 = arith.constant 0 : i32
    return %c0_i32, %c0_i32_0 : i32, i32
  }
  func.func @transform_2(%arg0: i32, %arg1: i32) -> (i32, i32) {
    %c0_i32 = arith.constant 0 : i32
    %c0_i32_0 = arith.constant 0 : i32
    %c0_i32_1 = arith.constant 0 : i32
    return %c0_i32, %c0_i32_0 : i32, i32
  }
  func.func @transform_3(%arg0: i32, %arg1: i32) -> (i32, i32) {
    %c0_i32 = arith.constant 0 : i32
    %c0_i32_0 = arith.constant 0 : i32
    %c0_i32_1 = arith.constant 0 : i32
    return %c0_i32, %c0_i32_0 : i32, i32
  }
  func.func @transform_4(%arg0: i32, %arg1: i32) -> (i32, i32) {
    %c0_i32 = arith.constant 0 : i32
    %c0_i32_0 = arith.constant 0 : i32
    %c0_i32_1 = arith.constant 0 : i32
    return %c0_i32, %c0_i32_0 : i32, i32
  }
  func.func @transform_5(%arg0: i32, %arg1: i32) -> (i32, i32) {
    %c0_i32 = arith.constant 0 : i32
    %c0_i32_0 = arith.constant 0 : i32
    %c0_i32_1 = arith.constant 0 : i32
    return %c0_i32, %c0_i32_0 : i32, i32
  }
  func.func @transform_6(%arg0: i32, %arg1: i32) -> (i32, i32) {
    %c0_i32 = arith.constant 0 : i32
    %c0_i32_0 = arith.constant 0 : i32
    %c0_i32_1 = arith.constant 0 : i32
    return %c0_i32, %c0_i32_0 : i32, i32
  }
  func.func @transform_7(%arg0: i32, %arg1: i32) -> (i32, i32) {
    %c0_i32 = arith.constant 0 : i32
    %c0_i32_0 = arith.constant 0 : i32
    %c0_i32_1 = arith.constant 0 : i32
    return %c0_i32, %c0_i32_0 : i32, i32
  }
  func.func @transform_8(%arg0: i32, %arg1: i32) -> (i32, i32) {
    %c0_i32 = arith.constant 0 : i32
    %c0_i32_0 = arith.constant 0 : i32
    %c0_i32_1 = arith.constant 0 : i32
    return %c0_i32, %c0_i32_0 : i32, i32
  }
  func.func @transform_9(%arg0: i32, %arg1: i32) -> (i32, i32) {
    %c0_i32 = arith.constant 0 : i32
    %c0_i32_0 = arith.constant 0 : i32
    %c0_i32_1 = arith.constant 0 : i32
    return %c0_i32, %c0_i32_0 : i32, i32
  }
  func.func @transform_10(%arg0: i32, %arg1: i32) -> (i32, i32) {
    %c0_i32 = arith.constant 0 : i32
    %c0_i32_0 = arith.constant 0 : i32
    %c0_i32_1 = arith.constant 0 : i32
    return %c0_i32, %c0_i32_0 : i32, i32
  }
  func.func @transform_11(%arg0: i32, %arg1: i32) -> (i32, i32) {
    %c0_i32 = arith.constant 0 : i32
    return %arg0, %arg1 : i32, i32
  }
}

</mosaic_0001>

<llo_original>
// kernel: tpu_custom_call.1
$region0: #{tpu_custom_call.1}
  #allocation0 [shape = 'u32[]', space=smem, size = 0x4, offset = 0x4, fixed_abs, tag = 'smem constant byte address 0x4 - core index']
  #allocation1 [shape = 'u32[144,128]{1,0:T(1,128)}', space=vmem, size = 0x12000, scoped, tag = 'internal scratch']
  %s0 = inlined_call_operand.hbm [shape: f32[8,128], index: 0, kind: input, shape index: {}]
  %s1 = inlined_call_operand.hbm [shape: bf16[128,512], index: 1, kind: input, shape index: {}]
  %s2 = inlined_call_operand.hbm [shape: f32[1,512], index: 2, kind: input, shape index: {}]
  %s3 = inlined_call_operand.vmem [shape: f32[1,512], index: 3, kind: input, shape index: {}]
  %s4 = inlined_call_operand.hbm [shape: f32[1,512], index: 4, kind: input, shape index: {}]
  %s5 = inlined_call_operand.hbm [shape: bf16[512,512], index: 5, kind: input, shape index: {}]
  %s6 = inlined_call_operand.vmem [shape: f32[1,512], index: 6, kind: input, shape index: {}]
  %s7 = inlined_call_operand.hbm [shape: f32[1,512], index: 7, kind: input, shape index: {}]
  %s8 = inlined_call_operand.hbm [shape: f32[1,512], index: 8, kind: input, shape index: {}]
  %s9 = inlined_call_operand.hbm [shape: bf16[512,1024], index: 9, kind: input, shape index: {}]
  %s10 = inlined_call_operand.vmem [shape: f32[1,1024], index: 10, kind: input, shape index: {}]
  %s11 = inlined_call_operand.hbm [shape: f32[8,1024], index: 11, kind: output, shape index: {}]
  %s12 = sld [smem:[#allocation0]]
  $region86: #{tpu_custom_call.1} parent=0
    _
  %s14 = ssub.s32 1, %s12
  %s15 = scalar_select 0, %s14, %s12
  $region1: #{tpu_custom_call.1} parent=0
    #allocation2 [shape = 'u8[4096]{0}', space=vmem, size = 0x1000, scoped, tag = 'input window, operand 0, single buffered']
    #allocation3 [shape = 's32[1]{0}', space=sflag, size = 0x4, scoped, tag = 'scoped memory for tpu_custom_call.1']
    #allocation4 [shape = 's32[1]{0}', space=sflag, size = 0x4, scoped, tag = 'scoped memory for tpu_custom_call.1']
    #allocation5 [shape = 'u8[131072]{0}', space=vmem, size = 0x20000, scoped, tag = 'input window, operand 1, single buffered']
    #allocation6 [shape = 's32[1]{0}', space=sflag, size = 0x4, scoped, tag = 'scoped memory for tpu_custom_call.1']
    #allocation7 [shape = 'u8[2048]{0}', space=vmem, size = 0x800, scoped, tag = 'input window, operand 2, single buffered']
    #allocation8 [shape = 'u8[2048]{0}', space=vmem, size = 0x800, scoped, tag = 'input window, operand 4, single buffered']
    #allocation9 [shape = 's32[1]{0}', space=sflag, size = 0x4, scoped, tag = 'scoped memory for tpu_custom_call.1']
    #allocation10 [shape = 'u8[524288]{0}', space=vmem, size = 0x80000, scoped, tag = 'input window, operand 5, single buffered']
    #allocation11 [shape = 'u8[2048]{0}', space=vmem, size = 0x800, scoped, tag = 'input window, operand 7, single buffered']
    #allocation12 [shape = 's32[1]{0}', space=sflag, size = 0x4, scoped, tag = 'scoped memory for tpu_custom_call.1']
    #allocation13 [shape = 'u8[2048]{0}', space=vmem, size = 0x800, scoped, tag = 'input window, operand 8, single buffered']
    #allocation14 [shape = 'u8[1048576]{0}', space=vmem, size = 0x100000, scoped, tag = 'input window, operand 9, single buffered']
    #allocation15 [shape = 's32[1]{0}', space=sflag, size = 0x4, scoped, tag = 'scoped memory for tpu_custom_call.1']
    #allocation16 [shape = 'u8[32768]{0}', space=vmem, size = 0x8000, scoped, tag = 'output window, operand 0, single buffered']
    %16 = vsyncpa [#allocation3], 0
    %17 = vsyncpa [#allocation6], 0
    %18 = vsyncpa [#allocation9], 0
    %19 = vsyncpa [#allocation12], 0
    %20 = vsyncpa [#allocation15], 0
    %21 = vsyncpa [#allocation4], 0
    // Predicated region
    $region2: #{tpu_custom_call.1} parent=1 // pred_check
      _
    $region3: #{tpu_custom_call.1} parent=1 // pred_check_branch
      %23 = sbr.rel (0) target = $region5
    $region4: #{tpu_custom_call.1} parent=1 // pred_region
      %s25 = ssub.s32 128, 128
      %26 = vsyncadd [#allocation3], %s25
      %s28 = sshll.u32 [#allocation2], 4
      %s29 = int_to_ptr.vmem [resolvable:$true] %s28
      %31 = dma.hbm_to_vmem [thread:$0]  %s0, 128, %s29, [#allocation3]
    $region5: #{tpu_custom_call.1} parent=1 // pred_fallthru
      _
    // Predicated region
    $region6: #{tpu_custom_call.1} parent=1 // pred_check
      _
    $region7: #{tpu_custom_call.1} parent=1 // pred_check_branch
      %33 = sbr.rel (0) target = $region9
    $region8: #{tpu_custom_call.1} parent=1 // pred_region
      %s35 = ssub.s32 4096, 4096
      %36 = vsyncadd [#allocation6], %s35
      %s37 = sshll.u32 [#allocation5], 4
      %s38 = int_to_ptr.vmem [resolvable:$true] %s37
      %43 = dma.hbm_to_vmem [thread:$0]  %s1, 4096, %s38, [#allocation6], 256, 256, 16
    $region9: #{tpu_custom_call.1} parent=1 // pred_fallthru
      _
    // Predicated region
    $region10: #{tpu_custom_call.1} parent=1 // pred_check
      _
    $region11: #{tpu_custom_call.1} parent=1 // pred_check_branch
      %45 = sbr.rel (0) target = $region13
    $region12: #{tpu_custom_call.1} parent=1 // pred_region
      %s47 = ssub.s32 64, 64
      %48 = vsyncadd [#allocation6], %s47
      %s50 = sshll.u32 [#allocation7], 4
      %s51 = int_to_ptr.vmem [resolvable:$true] %s50
      %53 = dma.hbm_to_vmem [thread:$0]  %s2, 64, %s51, [#allocation6]
    $region13: #{tpu_custom_call.1} parent=1 // pred_fallthru
      _
    // Predicated region
    $region14: #{tpu_custom_call.1} parent=1 // pred_check
      _
    $region15: #{tpu_custom_call.1} parent=1 // pred_check_branch
      %55 = sbr.rel (0) target = $region17
    $region16: #{tpu_custom_call.1} parent=1 // pred_region
      _
    $region17: #{tpu_custom_call.1} parent=1 // pred_fallthru
      _
    // Predicated region
    $region18: #{tpu_custom_call.1} parent=1 // pred_check
      _
    $region19: #{tpu_custom_call.1} parent=1 // pred_check_branch
      %57 = sbr.rel (0) target = $region21
    $region20: #{tpu_custom_call.1} parent=1 // pred_region
      %s59 = ssub.s32 64, 64
      %60 = vsyncadd [#allocation9], %s59
      %s62 = sshll.u32 [#allocation8], 4
      %s63 = int_to_ptr.vmem [resolvable:$true] %s62
      %65 = dma.hbm_to_vmem [thread:$0]  %s4, 64, %s63, [#allocation9]
    $region21: #{tpu_custom_call.1} parent=1 // pred_fallthru
      _
    // Predicated region
    $region22: #{tpu_custom_call.1} parent=1 // pred_check
      _
    $region23: #{tpu_custom_call.1} parent=1 // pred_check_branch
      %67 = sbr.rel (0) target = $region25
    $region24: #{tpu_custom_call.1} parent=1 // pred_region
      %s69 = ssub.s32 16384, 16384
      %70 = vsyncadd [#allocation9], %s69
      %s71 = sshll.u32 [#allocation10], 4
      %s72 = int_to_ptr.vmem [resolvable:$true] %s71
      %77 = dma.hbm_to_vmem [thread:$0]  %s5, 16384, %s72, [#allocation9], 256, 256, 16
    $region25: #{tpu_custom_call.1} parent=1 // pred_fallthru
      _
    // Predicated region
    $region26: #{tpu_custom_call.1} parent=1 // pred_check
      _
    $region27: #{tpu_custom_call.1} parent=1 // pred_check_branch
      %79 = sbr.rel (0) target = $region29
    $region28: #{tpu_custom_call.1} parent=1 // pred_region
      _
    $region29: #{tpu_custom_call.1} parent=1 // pred_fallthru
      _
    // Predicated region
    $region30: #{tpu_custom_call.1} parent=1 // pred_check
      _
    $region31: #{tpu_custom_call.1} parent=1 // pred_check_branch
      %81 = sbr.rel (0) target = $region33
    $region32: #{tpu_custom_call.1} parent=1 // pred_region
      %s83 = ssub.s32 64, 64
      %84 = vsyncadd [#allocation12], %s83
      %s86 = sshll.u32 [#allocation11], 4
      %s87 = int_to_ptr.vmem [resolvable:$true] %s86
      %89 = dma.hbm_to_vmem [thread:$0]  %s7, 64, %s87, [#allocation12]
    $region33: #{tpu_custom_call.1} parent=1 // pred_fallthru
      _
    // Predicated region
    $region34: #{tpu_custom_call.1} parent=1 // pred_check
      _
    $region35: #{tpu_custom_call.1} parent=1 // pred_check_branch
      %91 = sbr.rel (0) target = $region37
    $region36: #{tpu_custom_call.1} parent=1 // pred_region
      %s93 = ssub.s32 64, 64
      %94 = vsyncadd [#allocation12], %s93
      %s96 = sshll.u32 [#allocation13], 4
      %s97 = int_to_ptr.vmem [resolvable:$true] %s96
      %99 = dma.hbm_to_vmem [thread:$0]  %s8, 64, %s97, [#allocation12]
    $region37: #{tpu_custom_call.1} parent=1 // pred_fallthru
      _
    // Predicated region
    $region38: #{tpu_custom_call.1} parent=1 // pred_check
      _
    $region39: #{tpu_custom_call.1} parent=1 // pred_check_branch
      %101 = sbr.rel (0) target = $region41
    $region40: #{tpu_custom_call.1} parent=1 // pred_region
      %s103 = ssub.s32 32768, 32768
      %104 = vsyncadd [#allocation15], %s103
      %s105 = sshll.u32 [#allocation14], 4
      %s106 = int_to_ptr.vmem [resolvable:$true] %s105
      %111 = dma.hbm_to_vmem [thread:$0]  %s9, 32768, %s106, [#allocation15], 512, 512, 32
    $region41: #{tpu_custom_call.1} parent=1 // pred_fallthru
      _
    // Predicated region
    $region42: #{tpu_custom_call.1} parent=1 // pred_check
      _
    $region43: #{tpu_custom_call.1} parent=1 // pred_check_branch
      %113 = sbr.rel (0) target = $region45
    $region44: #{tpu_custom_call.1} parent=1 // pred_region
      _
    $region45: #{tpu_custom_call.1} parent=1 // pred_fallthru
      _
    // Predicated region
    $region46: #{tpu_custom_call.1} parent=1 // pred_check
      _
    $region47: #{tpu_custom_call.1} parent=1 // pred_check_branch
      %115 = sbr.rel (0) target = $region49
    $region48: #{tpu_custom_call.1} parent=1 // pred_region
      %116 = dma.done [#allocation3], 128
    $region49: #{tpu_custom_call.1} parent=1 // pred_fallthru
      _
    // Predicated region
    $region50: #{tpu_custom_call.1} parent=1 // pred_check
      _
    $region51: #{tpu_custom_call.1} parent=1 // pred_check_branch
      %118 = sbr.rel (0) target = $region53
    $region52: #{tpu_custom_call.1} parent=1 // pred_region
      %119 = dma.done [#allocation6], 4096
    $region53: #{tpu_custom_call.1} parent=1 // pred_fallthru
      _
    // Predicated region
    $region54: #{tpu_custom_call.1} parent=1 // pred_check
      _
    $region55: #{tpu_custom_call.1} parent=1 // pred_check_branch
      %121 = sbr.rel (0) target = $region57
    $region56: #{tpu_custom_call.1} parent=1 // pred_region
      %122 = dma.done [#allocation6], 64
    $region57: #{tpu_custom_call.1} parent=1 // pred_fallthru
      _
    // Predicated region
    $region58: #{tpu_custom_call.1} parent=1 // pred_check
      _
    $region59: #{tpu_custom_call.1} parent=1 // pred_check_branch
      %124 = sbr.rel (0) target = $region61
    $region60: #{tpu_custom_call.1} parent=1 // pred_region
      %125 = dma.done [#allocation9], 64
    $region61: #{tpu_custom_call.1} parent=1 // pred_fallthru
      _
    // Predicated region
    $region62: #{tpu_custom_call.1} parent=1 // pred_check
      _
    $region63: #{tpu_custom_call.1} parent=1 // pred_check_branch
      %127 = sbr.rel (0) target = $region65
    $region64: #{tpu_custom_call.1} parent=1 // pred_region
      %128 = dma.done [#allocation9], 16384
    $region65: #{tpu_custom_call.1} parent=1 // pred_fallthru
      _
    // Predicated region
    $region66: #{tpu_custom_call.1} parent=1 // pred_check
      _
    $region67: #{tpu_custom_call.1} parent=1 // pred_check_branch
      %130 = sbr.rel (0) target = $region69
    $region68: #{tpu_custom_call.1} parent=1 // pred_region
      %131 = dma.done [#allocation12], 64
    $region69: #{tpu_custom_call.1} parent=1 // pred_fallthru
      _
    // Predicated region
    $region70: #{tpu_custom_call.1} parent=1 // pred_check
      _
    $region71: #{tpu_custom_call.1} parent=1 // pred_check_branch
      %133 = sbr.rel (0) target = $region73
    $region72: #{tpu_custom_call.1} parent=1 // pred_region
      %134 = dma.done [#allocation12], 64
    $region73: #{tpu_custom_call.1} parent=1 // pred_fallthru
      _
    // Predicated region
    $region74: #{tpu_custom_call.1} parent=1 // pred_check
      _
    $region75: #{tpu_custom_call.1} parent=1 // pred_check_branch
      %136 = sbr.rel (0) target = $region77
    $region76: #{tpu_custom_call.1} parent=1 // pred_region
      %137 = dma.done [#allocation15], 32768
    $region77: #{tpu_custom_call.1} parent=1 // pred_fallthru
      _
    %v139 = vld [vmem:[#allocation2] sm:$0xff]
    %v140 = vpack.c.bf16 %v139, %v139
    %v141 = vld [vmem:[#allocation5] sm:$0xff]
    %v142 = vld [vmem:[#allocation5 + $0x8] sm:$0xff]
    %v143 = vld [vmem:[#allocation5 + $0x10] sm:$0xff]
    %v144 = vld [vmem:[#allocation5 + $0x18] sm:$0xff]
    %v145 = vld [vmem:[#allocation5 + $0x20] sm:$0xff]
    %v146 = vld [vmem:[#allocation5 + $0x28] sm:$0xff]
    %v147 = vld [vmem:[#allocation5 + $0x30] sm:$0xff]
    %v148 = vld [vmem:[#allocation5 + $0x38] sm:$0xff]
    %v149 = vld [vmem:[#allocation5 + $0x40] sm:$0xff]
    %v150 = vld [vmem:[#allocation5 + $0x48] sm:$0xff]
    %v151 = vld [vmem:[#allocation5 + $0x50] sm:$0xff]
    %v152 = vld [vmem:[#allocation5 + $0x58] sm:$0xff]
    %v153 = vld [vmem:[#allocation5 + $0x60] sm:$0xff]
    %v154 = vld [vmem:[#allocation5 + $0x68] sm:$0xff]
    %v155 = vld [vmem:[#allocation5 + $0x70] sm:$0xff]
    %v156 = vld [vmem:[#allocation5 + $0x78] sm:$0xff]
    %v157 = vld [vmem:[#allocation5 + $0x80] sm:$0xff]
    %v158 = vld [vmem:[#allocation5 + $0x88] sm:$0xff]
    %v159 = vld [vmem:[#allocation5 + $0x90] sm:$0xff]
    %v160 = vld [vmem:[#allocation5 + $0x98] sm:$0xff]
    %v161 = vld [vmem:[#allocation5 + $0xa0] sm:$0xff]
    %v162 = vld [vmem:[#allocation5 + $0xa8] sm:$0xff]
    %v163 = vld [vmem:[#allocation5 + $0xb0] sm:$0xff]
    %v164 = vld [vmem:[#allocation5 + $0xb8] sm:$0xff]
    %v165 = vld [vmem:[#allocation5 + $0xc0] sm:$0xff]
    %v166 = vld [vmem:[#allocation5 + $0xc8] sm:$0xff]
    %v167 = vld [vmem:[#allocation5 + $0xd0] sm:$0xff]
    %v168 = vld [vmem:[#allocation5 + $0xd8] sm:$0xff]
    %v169 = vld [vmem:[#allocation5 + $0xe0] sm:$0xff]
    %v170 = vld [vmem:[#allocation5 + $0xe8] sm:$0xff]
    %v171 = vld [vmem:[#allocation5 + $0xf0] sm:$0xff]
    %v172 = vld [vmem:[#allocation5 + $0xf8] sm:$0xff]
    %v173 = vld [vmem:[#allocation7] sm:$0xf]
    %v175 = vlaneseq
    %v176 = vshrl.u32 %v175, 7
    %v177 = vsub.s32 0, %v176
    %v178 = vrot.slane %v173, %v177
    %v179 = vlaneseq
    %v180 = vshrl.u32 %v179, 7
    %v181 = vsub.s32 1, %v180
    %v182 = vrot.slane %v173, %v181
    %v183 = vlaneseq
    %v184 = vshrl.u32 %v183, 7
    %v185 = vsub.s32 2, %v184
    %v186 = vrot.slane %v173, %v185
    %v187 = vlaneseq
    %v188 = vshrl.u32 %v187, 7
    %v189 = vsub.s32 3, %v188
    %v190 = vrot.slane %v173, %v189
    %v227 = vunpack.c.l.b16 %v141
    %v228 = vunpack.c.h.b16 %v141
    %v229 = vunpack.c.l.b16 %v142
    %v230 = vunpack.c.h.b16 %v142
    %v231 = vunpack.c.l.b16 %v143
    %v232 = vunpack.c.h.b16 %v143
    %v233 = vunpack.c.l.b16 %v144
    %v234 = vunpack.c.h.b16 %v144
    %v235 = vunpack.c.l.b16 %v145
    %v236 = vunpack.c.h.b16 %v145
    %v237 = vunpack.c.l.b16 %v146
    %v238 = vunpack.c.h.b16 %v146
    %v239 = vunpack.c.l.b16 %v147
    %v240 = vunpack.c.h.b16 %v147
    %v241 = vunpack.c.l.b16 %v148
    %v242 = vunpack.c.h.b16 %v148
    %v243 = vunpack.c.l.b16 %v149
    %v244 = vunpack.c.h.b16 %v149
    %v245 = vunpack.c.l.b16 %v150
    %v246 = vunpack.c.h.b16 %v150
    %v247 = vunpack.c.l.b16 %v151
    %v248 = vunpack.c.h.b16 %v151
    %v249 = vunpack.c.l.b16 %v152
    %v250 = vunpack.c.h.b16 %v152
    %v251 = vunpack.c.l.b16 %v153
    %v252 = vunpack.c.h.b16 %v153
    %v253 = vunpack.c.l.b16 %v154
    %v254 = vunpack.c.h.b16 %v154
    %v255 = vunpack.c.l.b16 %v155
    %v256 = vunpack.c.h.b16 %v155
    %v257 = vunpack.c.l.b16 %v156
    %v258 = vunpack.c.h.b16 %v156
    %v259 = vunpack.c.l.b16 %v157
    %v260 = vunpack.c.h.b16 %v157
    %v261 = vunpack.c.l.b16 %v158
    %v262 = vunpack.c.h.b16 %v158
    %v263 = vunpack.c.l.b16 %v159
    %v264 = vunpack.c.h.b16 %v159
    %v265 = vunpack.c.l.b16 %v160
    %v266 = vunpack.c.h.b16 %v160
    %v267 = vunpack.c.l.b16 %v161
    %v268 = vunpack.c.h.b16 %v161
    %v269 = vunpack.c.l.b16 %v162
    %v270 = vunpack.c.h.b16 %v162
    %v271 = vunpack.c.l.b16 %v163
    %v272 = vunpack.c.h.b16 %v163
    %v273 = vunpack.c.l.b16 %v164
    %v274 = vunpack.c.h.b16 %v164
    %v275 = vunpack.c.l.b16 %v165
    %v276 = vunpack.c.h.b16 %v165
    %v277 = vunpack.c.l.b16 %v166
    %v278 = vunpack.c.h.b16 %v166
    %v279 = vunpack.c.l.b16 %v167
    %v280 = vunpack.c.h.b16 %v167
    %v281 = vunpack.c.l.b16 %v168
    %v282 = vunpack.c.h.b16 %v168
    %v283 = vunpack.c.l.b16 %v169
    %v284 = vunpack.c.h.b16 %v169
    %v285 = vunpack.c.l.b16 %v170
    %v286 = vunpack.c.h.b16 %v170
    %v287 = vunpack.c.l.b16 %v171
    %v288 = vunpack.c.h.b16 %v171
    %v289 = vunpack.c.l.b16 %v172
    %v290 = vunpack.c.h.b16 %v172
    %v291 = vpack.c.b16 %v231, %v227
    %v292 = vpack.c.b16 %v232, %v228
    %v293 = vpack.c.b16 %v233, %v229
    %v294 = vpack.c.b16 %v234, %v230
    %v295 = vpack.c.b16 %v239, %v235
    %v296 = vpack.c.b16 %v240, %v236
    %v297 = vpack.c.b16 %v241, %v237
    %v298 = vpack.c.b16 %v242, %v238
    %v299 = vpack.c.b16 %v247, %v243
    %v300 = vpack.c.b16 %v248, %v244
    %v301 = vpack.c.b16 %v249, %v245
    %v302 = vpack.c.b16 %v250, %v246
    %v303 = vpack.c.b16 %v255, %v251
    %v304 = vpack.c.b16 %v256, %v252
    %v305 = vpack.c.b16 %v257, %v253
    %v306 = vpack.c.b16 %v258, %v254
    %v307 = vpack.c.b16 %v263, %v259
    %v308 = vpack.c.b16 %v264, %v260
    %v309 = vpack.c.b16 %v265, %v261
    %v310 = vpack.c.b16 %v266, %v262
    %v311 = vpack.c.b16 %v271, %v267
    %v312 = vpack.c.b16 %v272, %v268
    %v313 = vpack.c.b16 %v273, %v269
    %v314 = vpack.c.b16 %v274, %v270
    %v315 = vpack.c.b16 %v279, %v275
    %v316 = vpack.c.b16 %v280, %v276
    %v317 = vpack.c.b16 %v281, %v277
    %v318 = vpack.c.b16 %v282, %v278
    %v319 = vpack.c.b16 %v287, %v283
    %v320 = vpack.c.b16 %v288, %v284
    %v321 = vpack.c.b16 %v289, %v285
    %v322 = vpack.c.b16 %v290, %v286
    %355 = vmatprep.subr.bf16.mxu0 %v320
    %356 = vmatpush1.bf16.msra.mxu0 %v319
    %357 = vmatprep.subr.bf16.mxu0 %v316
    %358 = vmatpush1.bf16.msra.mxu0 %v315
    %359 = vmatprep.subr.bf16.mxu0 %v312
    %360 = vmatpush1.bf16.msra.mxu0 %v311
    %361 = vmatprep.subr.bf16.mxu0 %v308
    %362 = vmatpush1.bf16.msra.mxu0 %v307
    %363 = vmatprep.subr.bf16.mxu0 %v304
    %364 = vmatpush1.bf16.msra.mxu0 %v303
    %365 = vmatprep.subr.bf16.mxu0 %v300
    %366 = vmatpush1.bf16.msra.mxu0 %v299
    %367 = vmatprep.subr.bf16.mxu0 %v296
    %368 = vmatpush1.bf16.msra.mxu0 %v295
    %369 = vmatprep.subr.bf16.mxu0 %v292
    %370 = vmatpush1.bf16.msra.mxu0 %v291
    %371 = vmatprep.subr.bf16.mxu0 0
    %372 = vmatpush2.bf16.msra.mxu0 0
    %373 = vmatprep.subr.bf16.mxu0 0
    %374 = vmatpush2.bf16.msra.mxu0 0
    %375 = vmatprep.subr.bf16.mxu0 0
    %376 = vmatpush2.bf16.msra.mxu0 0
    %377 = vmatprep.subr.bf16.mxu0 0
    %378 = vmatpush2.bf16.msra.mxu0 0
    %379 = vmatprep.subr.bf16.mxu0 0
    %380 = vmatpush2.bf16.msra.mxu0 0
    %381 = vmatprep.subr.bf16.mxu0 0
    %382 = vmatpush2.bf16.msra.mxu0 0
    %383 = vmatprep.subr.bf16.mxu0 0
    %384 = vmatpush2.bf16.msra.mxu0 0
    %385 = vmatprep.subr.bf16.mxu0 0
    %386 = vmatpush2.bf16.msra.mxu0 0
    %387 = vmatprep.mubr.bf16.mxu0 0
    %388 = vmatmul.mubr.bf16.gmra.mxu0 %v140
    %v389 = vpop.f32.mrf.mxu0
    %v390 = vadd.f32 %v178, %v389
    %v391 = vpop.f32.mrf.mxu0
    %v392 = vadd.f32 %v182, %v391
    %v393 = vpop.f32.mrf.mxu0
    %v394 = vpop.f32.mrf.mxu0
    %395 = vdwg.mxu0
    %396 = vmatprep.subr.bf16.mxu0 %v322
    %397 = vmatpush1.bf16.msra.mxu0 %v321
    %398 = vmatprep.subr.bf16.mxu0 %v318
    %399 = vmatpush1.bf16.msra.mxu0 %v317
    %400 = vmatprep.subr.bf16.mxu0 %v314
    %401 = vmatpush1.bf16.msra.mxu0 %v313
    %402 = vmatprep.subr.bf16.mxu0 %v310
    %403 = vmatpush1.bf16.msra.mxu0 %v309
    %404 = vmatprep.subr.bf16.mxu0 %v306
    %405 = vmatpush1.bf16.msra.mxu0 %v305
    %406 = vmatprep.subr.bf16.mxu0 %v302
    %407 = vmatpush1.bf16.msra.mxu0 %v301
    %408 = vmatprep.subr.bf16.mxu0 %v298
    %409 = vmatpush1.bf16.msra.mxu0 %v297
    %410 = vmatprep.subr.bf16.mxu0 %v294
    %411 = vmatpush1.bf16.msra.mxu0 %v293
    %412 = vmatprep.subr.bf16.mxu0 0
    %413 = vmatpush2.bf16.msra.mxu0 0
    %414 = vmatprep.subr.bf16.mxu0 0
    %415 = vmatpush2.bf16.msra.mxu0 0
    %416 = vmatprep.subr.bf16.mxu0 0
    %417 = vmatpush2.bf16.msra.mxu0 0
    %418 = vmatprep.subr.bf16.mxu0 0
    %419 = vmatpush2.bf16.msra.mxu0 0
    %420 = vmatprep.subr.bf16.mxu0 0
    %421 = vmatpush2.bf16.msra.mxu0 0
    %422 = vmatprep.subr.bf16.mxu0 0
    %423 = vmatpush2.bf16.msra.mxu0 0
    %424 = vmatprep.subr.bf16.mxu0 0
    %425 = vmatpush2.bf16.msra.mxu0 0
    %426 = vmatprep.subr.bf16.mxu0 0
    %427 = vmatpush2.bf16.msra.mxu0 0
    %428 = vmatprep.mubr.bf16.mxu0 0
    %429 = vmatmul.mubr.bf16.gmra.mxu0 %v140
    %v430 = vpop.f32.mrf.mxu0
    %v431 = vadd.f32 %v186, %v430
    %v432 = vpop.f32.mrf.mxu0
    %v433 = vadd.f32 %v190, %v432
    %v434 = vpop.f32.mrf.mxu0
    %v435 = vpop.f32.mrf.mxu0
    %436 = vdwg.mxu0
    %v437 = vmax.f32 %v390, 0.0
    %v438 = vmax.f32 %v392, 0.0
    %v439 = vmax.f32 %v431, 0.0
    %v440 = vmax.f32 %v433, 0.0
    %v441 = vand.u32 2147483647, %v390
    %v442 = vand.u32 2147483647, %v392
    %v443 = vand.u32 2147483647, %v431
    %v444 = vand.u32 2147483647, %v433
    %v445 = vsub.f32 0.0, %v441
    %v446 = vsub.f32 0.0, %v442
    %v447 = vsub.f32 0.0, %v443
    %v448 = vsub.f32 0.0, %v444
    %v449 = vmul.f32 %v445, 1.442695
    %v450 = vpow.pop %v449
    %v451 = vmul.f32 %v446, 1.442695
    %v452 = vpow.pop %v451
    %v453 = vmul.f32 %v447, 1.442695
    %v454 = vpow.pop %v453
    %v455 = vmul.f32 %v448, 1.442695
    %v456 = vpow.pop %v455
    %v457 = vadd.f32 %v450, 1.0
    %v458 = vlog2.pop %v457
    %v459 = vmul.f32 %v458, 0.6931472
    %v460 = vmul.f32 -0.5, %v450
    %v461 = vadd.f32 %v460, 1.0
    %v462 = vmul.f32 %v461, %v450
    %v463 = vand.u32 2147483647, %v450
    %vm464 = vcmp.lt.f32.partialorder %v463, 0.0004427343
    %v465 = vsel %vm464, %v462, %v459
    %v466 = vadd.f32 %v452, 1.0
    %v467 = vlog2.pop %v466
    %v468 = vmul.f32 %v467, 0.6931472
    %v469 = vmul.f32 -0.5, %v452
    %v470 = vadd.f32 %v469, 1.0
    %v471 = vmul.f32 %v470, %v452
    %v472 = vand.u32 2147483647, %v452
    %vm473 = vcmp.lt.f32.partialorder %v472, 0.0004427343
    %v474 = vsel %vm473, %v471, %v468
    %v475 = vadd.f32 %v454, 1.0
    %v476 = vlog2.pop %v475
    %v477 = vmul.f32 %v476, 0.6931472
    %v478 = vmul.f32 -0.5, %v454
    %v479 = vadd.f32 %v478, 1.0
    %v480 = vmul.f32 %v479, %v454
    %v481 = vand.u32 2147483647, %v454
    %vm482 = vcmp.lt.f32.partialorder %v481, 0.0004427343
    %v483 = vsel %vm482, %v480, %v477
    %v484 = vadd.f32 %v456, 1.0
    %v485 = vlog2.pop %v484
    %v486 = vmul.f32 %v485, 0.6931472
    %v487 = vmul.f32 -0.5, %v456
    %v488 = vadd.f32 %v487, 1.0
    %v489 = vmul.f32 %v488, %v456
    %v490 = vand.u32 2147483647, %v456
    %vm491 = vcmp.lt.f32.partialorder %v490, 0.0004427343
    %v492 = vsel %vm491, %v489, %v486
    %v493 = vadd.f32 %v437, %v465
    %v494 = vadd.f32 %v438, %v474
    %v495 = vadd.f32 %v439, %v483
    %v496 = vadd.f32 %v440, %v492
    %v497 = vld [vmem:[%s3] sm:$0xf]
    %v498 = vld [vmem:[#allocation8] sm:$0xf]
    %v499 = vrot.slane %v493, 4
    %v500 = vadd.f32 %v493, %v499
    %v501 = vrot.slane %v500, 2
    %v502 = vadd.f32 %v500, %v501
    %v503 = vrot.slane %v502, 1
    %v504 = vadd.f32 %v502, %v503
    %v505 = vrot.slane %v494, 4
    %v506 = vadd.f32 %v494, %v505
    %v507 = vrot.slane %v506, 2
    %v508 = vadd.f32 %v506, %v507
    %v509 = vrot.slane %v508, 1
    %v510 = vadd.f32 %v508, %v509
    %v511 = vrot.slane %v495, 4
    %v512 = vadd.f32 %v495, %v511
    %v513 = vrot.slane %v512, 2
    %v514 = vadd.f32 %v512, %v513
    %v515 = vrot.slane %v514, 1
    %v516 = vadd.f32 %v514, %v515
    %v517 = vrot.slane %v496, 4
    %v518 = vadd.f32 %v496, %v517
    %v519 = vrot.slane %v518, 2
    %v520 = vadd.f32 %v518, %v519
    %v521 = vrot.slane %v520, 1
    %v522 = vadd.f32 %v520, %v521
    %v523 = vrcp.pop 8.0
    %v524 = vmul.f32 %v504, %v523
    %v525 = vmul.f32 %v510, %v523
    %v526 = vmul.f32 %v516, %v523
    %v527 = vmul.f32 %v522, %v523
    %v528 = vsub.f32 %v493, %v524
    %v529 = vsub.f32 %v494, %v525
    %v530 = vsub.f32 %v495, %v526
    %v531 = vsub.f32 %v496, %v527
    %v532 = vmul.f32 %v528, %v528
    %v533 = vmul.f32 %v529, %v529
    %v534 = vmul.f32 %v530, %v530
    %v535 = vmul.f32 %v531, %v531
    %v536 = vrot.slane %v532, 4
    %v537 = vadd.f32 %v532, %v536
    %v538 = vrot.slane %v537, 2
    %v539 = vadd.f32 %v537, %v538
    %v540 = vrot.slane %v539, 1
    %v541 = vadd.f32 %v539, %v540
    %v542 = vrot.slane %v533, 4
    %v543 = vadd.f32 %v533, %v542
    %v544 = vrot.slane %v543, 2
    %v545 = vadd.f32 %v543, %v544
    %v546 = vrot.slane %v545, 1
    %v547 = vadd.f32 %v545, %v546
    %v548 = vrot.slane %v534, 4
    %v549 = vadd.f32 %v534, %v548
    %v550 = vrot.slane %v549, 2
    %v551 = vadd.f32 %v549, %v550
    %v552 = vrot.slane %v551, 1
    %v553 = vadd.f32 %v551, %v552
    %v554 = vrot.slane %v535, 4
    %v555 = vadd.f32 %v535, %v554
    %v556 = vrot.slane %v555, 2
    %v557 = vadd.f32 %v555, %v556
    %v558 = vrot.slane %v557, 1
    %v559 = vadd.f32 %v557, %v558
    %v560 = vmul.f32 %v541, %v523
    %v561 = vmul.f32 %v547, %v523
    %v562 = vmul.f32 %v553, %v523
    %v563 = vmul.f32 %v559, %v523
    %v564 = vadd.f32 %v560, 1e-05
    %v565 = vadd.f32 %v561, 1e-05
    %v566 = vadd.f32 %v562, 1e-05
    %v567 = vadd.f32 %v563, 1e-05
    %v568 = vrsqrt.pop %v564
    %v569 = vrsqrt.pop %v565
    %v570 = vrsqrt.pop %v566
    %v571 = vrsqrt.pop %v567
    %v573 = vlaneseq
    %v574 = vshrl.u32 %v573, 7
    %v575 = vsub.s32 0, %v574
    %v576 = vrot.slane %v497, %v575
    %v577 = vlaneseq
    %v578 = vshrl.u32 %v577, 7
    %v579 = vsub.s32 1, %v578
    %v580 = vrot.slane %v497, %v579
    %v581 = vlaneseq
    %v582 = vshrl.u32 %v581, 7
    %v583 = vsub.s32 2, %v582
    %v584 = vrot.slane %v497, %v583
    %v585 = vlaneseq
    %v586 = vshrl.u32 %v585, 7
    %v587 = vsub.s32 3, %v586
    %v588 = vrot.slane %v497, %v587
    %v593 = vmul.f32 %v568, %v576
    %v594 = vmul.f32 %v569, %v580
    %v595 = vmul.f32 %v570, %v584
    %v596 = vmul.f32 %v571, %v588
    %v597 = vlaneseq
    %v598 = vshrl.u32 %v597, 7
    %v599 = vsub.s32 0, %v598
    %v600 = vrot.slane %v593, %v599
    %v601 = vlaneseq
    %v602 = vshrl.u32 %v601, 7
    %v603 = vsub.s32 0, %v602
    %v604 = vrot.slane %v594, %v603
    %v605 = vlaneseq
    %v606 = vshrl.u32 %v605, 7
    %v607 = vsub.s32 0, %v606
    %v608 = vrot.slane %v595, %v607
    %v609 = vlaneseq
    %v610 = vshrl.u32 %v609, 7
    %v611 = vsub.s32 0, %v610
    %v612 = vrot.slane %v596, %v611
    %v613 = vmul.f32 %v528, %v600
    %v614 = vmul.f32 %v529, %v604
    %v615 = vmul.f32 %v530, %v608
    %v616 = vmul.f32 %v531, %v612
    %v618 = vlaneseq
    %v619 = vshrl.u32 %v618, 7
    %v620 = vsub.s32 0, %v619
    %v621 = vrot.slane %v498, %v620
    %v622 = vlaneseq
    %v623 = vshrl.u32 %v622, 7
    %v624 = vsub.s32 1, %v623
    %v625 = vrot.slane %v498, %v624
    %v626 = vlaneseq
    %v627 = vshrl.u32 %v626, 7
    %v628 = vsub.s32 2, %v627
    %v629 = vrot.slane %v498, %v628
    %v630 = vlaneseq
    %v631 = vshrl.u32 %v630, 7
    %v632 = vsub.s32 3, %v631
    %v633 = vrot.slane %v498, %v632
    %v638 = vadd.f32 %v613, %v621
    %v639 = vadd.f32 %v614, %v625
    %v640 = vadd.f32 %v615, %v629
    %v641 = vadd.f32 %v616, %v633
    %v642 = vpack.c.bf16 %v638, %v638
    %v643 = vpack.c.bf16 %v639, %v639
    %v644 = vpack.c.bf16 %v640, %v640
    %v645 = vpack.c.bf16 %v641, %v641
    %v646 = vld [vmem:[#allocation10] sm:$0xff]
    %v647 = vld [vmem:[#allocation10 + $0x8] sm:$0xff]
    %v648 = vld [vmem:[#allocation10 + $0x10] sm:$0xff]
    %v649 = vld [vmem:[#allocation10 + $0x18] sm:$0xff]
    %v650 = vld [vmem:[#allocation10 + $0x20] sm:$0xff]
    %v651 = vld [vmem:[#allocation10 + $0x28] sm:$0xff]
    %v652 = vld [vmem:[#allocation10 + $0x30] sm:$0xff]
    %v653 = vld [vmem:[#allocation10 + $0x38] sm:$0xff]
    %v654 = vld [vmem:[#allocation10 + $0x40] sm:$0xff]
    %v655 = vld [vmem:[#allocation10 + $0x48] sm:$0xff]
    %v656 = vld [vmem:[#allocation10 + $0x50] sm:$0xff]
    %v657 = vld [vmem:[#allocation10 + $0x58] sm:$0xff]
    %v658 = vld [vmem:[#allocation10 + $0x60] sm:$0xff]
    %v659 = vld [vmem:[#allocation10 + $0x68] sm:$0xff]
    %v660 = vld [vmem:[#allocation10 + $0x70] sm:$0xff]
    %v661 = vld [vmem:[#allocation10 + $0x78] sm:$0xff]
    %v662 = vld [vmem:[#allocation10 + $0x80] sm:$0xff]
    %v663 = vld [vmem:[#allocation10 + $0x88] sm:$0xff]
    %v664 = vld [vmem:[#allocation10 + $0x90] sm:$0xff]
    %v665 = vld [vmem:[#allocation10 + $0x98] sm:$0xff]
    %v666 = vld [vmem:[#allocation10 + $0xa0] sm:$0xff]
    %v667 = vld [vmem:[#allocation10 + $0xa8] sm:$0xff]
    %v668 = vld [vmem:[#allocation10 + $0xb0] sm:$0xff]
    %v669 = vld [vmem:[#allocation10 + $0xb8] sm:$0xff]
    %v670 = vld [vmem:[#allocation10 + $0xc0] sm:$0xff]
    %v671 = vld [vmem:[#allocation10 + $0xc8] sm:$0xff]
    %v672 = vld [vmem:[#allocation10 + $0xd0] sm:$0xff]
    %v673 = vld [vmem:[#allocation10 + $0xd8] sm:$0xff]
    %v674 = vld [vmem:[#allocation10 + $0xe0] sm:$0xff]
    %v675 = vld [vmem:[#allocation10 + $0xe8] sm:$0xff]
    %v676 = vld [vmem:[#allocation10 + $0xf0] sm:$0xff]
    %v677 = vld [vmem:[#allocation10 + $0xf8] sm:$0xff]
    %v678 = vld [vmem:[#allocation10 + $0x100] sm:$0xff]
    %v679 = vld [vmem:[#allocation10 + $0x108] sm:$0xff]
    %v680 = vld [vmem:[#allocation10 + $0x110] sm:$0xff]
    %v681 = vld [vmem:[#allocation10 + $0x118] sm:$0xff]
    %v682 = vld [vmem:[#allocation10 + $0x120] sm:$0xff]
    %v683 = vld [vmem:[#allocation10 + $0x128] sm:$0xff]
    %v684 = vld [vmem:[#allocation10 + $0x130] sm:$0xff]
    %v685 = vld [vmem:[#allocation10 + $0x138] sm:$0xff]
    %v686 = vld [vmem:[#allocation10 + $0x140] sm:$0xff]
    %v687 = vld [vmem:[#allocation10 + $0x148] sm:$0xff]
    %v688 = vld [vmem:[#allocation10 + $0x150] sm:$0xff]
    %v689 = vld [vmem:[#allocation10 + $0x158] sm:$0xff]
    %v690 = vld [vmem:[#allocation10 + $0x160] sm:$0xff]
    %v691 = vld [vmem:[#allocation10 + $0x168] sm:$0xff]
    %v692 = vld [vmem:[#allocation10 + $0x170] sm:$0xff]
    %v693 = vld [vmem:[#allocation10 + $0x178] sm:$0xff]
    %v694 = vld [vmem:[#allocation10 + $0x180] sm:$0xff]
    %v695 = vld [vmem:[#allocation10 + $0x188] sm:$0xff]
    %v696 = vld [vmem:[#allocation10 + $0x190] sm:$0xff]
    %v697 = vld [vmem:[#allocation10 + $0x198] sm:$0xff]
    %v698 = vld [vmem:[#allocation10 + $0x1a0] sm:$0xff]
    %v699 = vld [vmem:[#allocation10 + $0x1a8] sm:$0xff]
    %v700 = vld [vmem:[#allocation10 + $0x1b0] sm:$0xff]
    %v701 = vld [vmem:[#allocation10 + $0x1b8] sm:$0xff]
    %v702 = vld [vmem:[#allocation10 + $0x1c0] sm:$0xff]
    %v703 = vld [vmem:[#allocation10 + $0x1c8] sm:$0xff]
    %v704 = vld [vmem:[#allocation10 + $0x1d0] sm:$0xff]
    %v705 = vld [vmem:[#allocation10 + $0x1d8] sm:$0xff]
    %v706 = vld [vmem:[#allocation10 + $0x1e0] sm:$0xff]
    %v707 = vld [vmem:[#allocation10 + $0x1e8] sm:$0xff]
    %v708 = vld [vmem:[#allocation10 + $0x1f0] sm:$0xff]
    %v709 = vld [vmem:[#allocation10 + $0x1f8] sm:$0xff]
    %v710 = vld [vmem:[#allocation10 + $0x200] sm:$0xff]
    %v711 = vld [vmem:[#allocation10 + $0x208] sm:$0xff]
    %v712 = vld [vmem:[#allocation10 + $0x210] sm:$0xff]
    %v713 = vld [vmem:[#allocation10 + $0x218] sm:$0xff]
    %v714 = vld [vmem:[#allocation10 + $0x220] sm:$0xff]
    %v715 = vld [vmem:[#allocation10 + $0x228] sm:$0xff]
    %v716 = vld [vmem:[#allocation10 + $0x230] sm:$0xff]
    %v717 = vld [vmem:[#allocation10 + $0x238] sm:$0xff]
    %v718 = vld [vmem:[#allocation10 + $0x240] sm:$0xff]
    %v719 = vld [vmem:[#allocation10 + $0x248] sm:$0xff]
    %v720 = vld [vmem:[#allocation10 + $0x250] sm:$0xff]
    %v721 = vld [vmem:[#allocation10 + $0x258] sm:$0xff]
    %v722 = vld [vmem:[#allocation10 + $0x260] sm:$0xff]
    %v723 = vld [vmem:[#allocation10 + $0x268] sm:$0xff]
    %v724 = vld [vmem:[#allocation10 + $0x270] sm:$0xff]
    %v725 = vld [vmem:[#allocation10 + $0x278] sm:$0xff]
    %v726 = vld [vmem:[#allocation10 + $0x280] sm:$0xff]
    %v727 = vld [vmem:[#allocation10 + $0x288] sm:$0xff]
    %v728 = vld [vmem:[#allocation10 + $0x290] sm:$0xff]
    %v729 = vld [vmem:[#allocation10 + $0x298] sm:$0xff]
    %v730 = vld [vmem:[#allocation10 + $0x2a0] sm:$0xff]
    %v731 = vld [vmem:[#allocation10 + $0x2a8] sm:$0xff]
    %v732 = vld [vmem:[#allocation10 + $0x2b0] sm:$0xff]
    %v733 = vld [vmem:[#allocation10 + $0x2b8] sm:$0xff]
    %v734 = vld [vmem:[#allocation10 + $0x2c0] sm:$0xff]
    %v735 = vld [vmem:[#allocation10 + $0x2c8] sm:$0xff]
    %v736 = vld [vmem:[#allocation10 + $0x2d0] sm:$0xff]
    %v737 = vld [vmem:[#allocation10 + $0x2d8] sm:$0xff]
    %v738 = vld [vmem:[#allocation10 + $0x2e0] sm:$0xff]
    %v739 = vld [vmem:[#allocation10 + $0x2e8] sm:$0xff]
    %v740 = vld [vmem:[#allocation10 + $0x2f0] sm:$0xff]
    %v741 = vld [vmem:[#allocation10 + $0x2f8] sm:$0xff]
    %v742 = vld [vmem:[#allocation10 + $0x300] sm:$0xff]
    %v743 = vld [vmem:[#allocation10 + $0x308] sm:$0xff]
    %v744 = vld [vmem:[#allocation10 + $0x310] sm:$0xff]
    %v745 = vld [vmem:[#allocation10 + $0x318] sm:$0xff]
    %v746 = vld [vmem:[#allocation10 + $0x320] sm:$0xff]
    %v747 = vld [vmem:[#allocation10 + $0x328] sm:$0xff]
    %v748 = vld [vmem:[#allocation10 + $0x330] sm:$0xff]
    %v749 = vld [vmem:[#allocation10 + $0x338] sm:$0xff]
    %v750 = vld [vmem:[#allocation10 + $0x340] sm:$0xff]
    %v751 = vld [vmem:[#allocation10 + $0x348] sm:$0xff]
    %v752 = vld [vmem:[#allocation10 + $0x350] sm:$0xff]
    %v753 = vld [vmem:[#allocation10 + $0x358] sm:$0xff]
    %v754 = vld [vmem:[#allocation10 + $0x360] sm:$0xff]
    %v755 = vld [vmem:[#allocation10 + $0x368] sm:$0xff]
    %v756 = vld [vmem:[#allocation10 + $0x370] sm:$0xff]
    %v757 = vld [vmem:[#allocation10 + $0x378] sm:$0xff]
    %v758 = vld [vmem:[#allocation10 + $0x380] sm:$0xff]
    %v759 = vld [vmem:[#allocation10 + $0x388] sm:$0xff]
    %v760 = vld [vmem:[#allocation10 + $0x390] sm:$0xff]
    %v761 = vld [vmem:[#allocation10 + $0x398] sm:$0xff]
    %v762 = vld [vmem:[#allocation10 + $0x3a0] sm:$0xff]
    %v763 = vld [vmem:[#allocation10 + $0x3a8] sm:$0xff]
    %v764 = vld [vmem:[#allocation10 + $0x3b0] sm:$0xff]
    %v765 = vld [vmem:[#allocation10 + $0x3b8] sm:$0xff]
    %v766 = vld [vmem:[#allocation10 + $0x3c0] sm:$0xff]
    %v767 = vld [vmem:[#allocation10 + $0x3c8] sm:$0xff]
    %v768 = vld [vmem:[#allocation10 + $0x3d0] sm:$0xff]
    %v769 = vld [vmem:[#allocation10 + $0x3d8] sm:$0xff]
    %v770 = vld [vmem:[#allocation10 + $0x3e0] sm:$0xff]
    %v771 = vld [vmem:[#allocation10 + $0x3e8] sm:$0xff]
    %v772 = vld [vmem:[#allocation10 + $0x3f0] sm:$0xff]
    %v773 = vld [vmem:[#allocation10 + $0x3f8] sm:$0xff]
    %v774 = vld [vmem:[%s6] sm:$0xf]
    %v776 = vlaneseq
    %v777 = vshrl.u32 %v776, 7
    %v778 = vsub.s32 0, %v777
    %v779 = vrot.slane %v774, %v778
    %v780 = vlaneseq
    %v781 = vshrl.u32 %v780, 7
    %v782 = vsub.s32 1, %v781
    %v783 = vrot.slane %v774, %v782
    %v784 = vlaneseq
    %v785 = vshrl.u32 %v784, 7
    %v786 = vsub.s32 2, %v785
    %v787 = vrot.slane %v774, %v786
    %v788 = vlaneseq
    %v789 = vshrl.u32 %v788, 7
    %v790 = vsub.s32 3, %v789
    %v791 = vrot.slane %v774, %v790
    %v924 = vunpack.c.l.b16 %v646
    %v925 = vunpack.c.h.b16 %v646
    %v926 = vunpack.c.l.b16 %v647
    %v927 = vunpack.c.h.b16 %v647
    %v928 = vunpack.c.l.b16 %v648
    %v929 = vunpack.c.h.b16 %v648
    %v930 = vunpack.c.l.b16 %v649
    %v931 = vunpack.c.h.b16 %v649
    %v932 = vunpack.c.l.b16 %v650
    %v933 = vunpack.c.h.b16 %v650
    %v934 = vunpack.c.l.b16 %v651
    %v935 = vunpack.c.h.b16 %v651
    %v936 = vunpack.c.l.b16 %v652
    %v937 = vunpack.c.h.b16 %v652
    %v938 = vunpack.c.l.b16 %v653
    %v939 = vunpack.c.h.b16 %v653
    %v940 = vunpack.c.l.b16 %v654
    %v941 = vunpack.c.h.b16 %v654
    %v942 = vunpack.c.l.b16 %v655
    %v943 = vunpack.c.h.b16 %v655
    %v944 = vunpack.c.l.b16 %v656
    %v945 = vunpack.c.h.b16 %v656
    %v946 = vunpack.c.l.b16 %v657
    %v947 = vunpack.c.h.b16 %v657
    %v948 = vunpack.c.l.b16 %v658
    %v949 = vunpack.c.h.b16 %v658
    %v950 = vunpack.c.l.b16 %v659
    %v951 = vunpack.c.h.b16 %v659
    %v952 = vunpack.c.l.b16 %v660
    %v953 = vunpack.c.h.b16 %v660
    %v954 = vunpack.c.l.b16 %v661
    %v955 = vunpack.c.h.b16 %v661
    %v956 = vunpack.c.l.b16 %v662
    %v957 = vunpack.c.h.b16 %v662
    %v958 = vunpack.c.l.b16 %v663
    %v959 = vunpack.c.h.b16 %v663
    %v960 = vunpack.c.l.b16 %v664
    %v961 = vunpack.c.h.b16 %v664
    %v962 = vunpack.c.l.b16 %v665
    %v963 = vunpack.c.h.b16 %v665
    %v964 = vunpack.c.l.b16 %v666
    %v965 = vunpack.c.h.b16 %v666
    %v966 = vunpack.c.l.b16 %v667
    %v967 = vunpack.c.h.b16 %v667
    %v968 = vunpack.c.l.b16 %v668
    %v969 = vunpack.c.h.b16 %v668
    %v970 = vunpack.c.l.b16 %v669
    %v971 = vunpack.c.h.b16 %v669
    %v972 = vunpack.c.l.b16 %v670
    %v973 = vunpack.c.h.b16 %v670
    %v974 = vunpack.c.l.b16 %v671
    %v975 = vunpack.c.h.b16 %v671
    %v976 = vunpack.c.l.b16 %v672
    %v977 = vunpack.c.h.b16 %v672
    %v978 = vunpack.c.l.b16 %v673
    %v979 = vunpack.c.h.b16 %v673
    %v980 = vunpack.c.l.b16 %v674
    %v981 = vunpack.c.h.b16 %v674
    %v982 = vunpack.c.l.b16 %v675
    %v983 = vunpack.c.h.b16 %v675
    %v984 = vunpack.c.l.b16 %v676
    %v985 = vunpack.c.h.b16 %v676
    %v986 = vunpack.c.l.b16 %v677
    %v987 = vunpack.c.h.b16 %v677
    %v988 = vunpack.c.l.b16 %v678
    %v989 = vunpack.c.h.b16 %v678
    %v990 = vunpack.c.l.b16 %v679
    %v991 = vunpack.c.h.b16 %v679
    %v992 = vunpack.c.l.b16 %v680
    %v993 = vunpack.c.h.b16 %v680
    %v994 = vunpack.c.l.b16 %v681
    %v995 = vunpack.c.h.b16 %v681
    %v996 = vunpack.c.l.b16 %v682
    %v997 = vunpack.c.h.b16 %v682
    %v998 = vunpack.c.l.b16 %v683
    %v999 = vunpack.c.h.b16 %v683
    %v1000 = vunpack.c.l.b16 %v684
    %v1001 = vunpack.c.h.b16 %v684
    %v1002 = vunpack.c.l.b16 %v685
    %v1003 = vunpack.c.h.b16 %v685
    %v1004 = vunpack.c.l.b16 %v686
    %v1005 = vunpack.c.h.b16 %v686
    %v1006 = vunpack.c.l.b16 %v687
    %v1007 = vunpack.c.h.b16 %v687
    %v1008 = vunpack.c.l.b16 %v688
    %v1009 = vunpack.c.h.b16 %v688
    %v1010 = vunpack.c.l.b16 %v689
    %v1011 = vunpack.c.h.b16 %v689
    %v1012 = vunpack.c.l.b16 %v690
    %v1013 = vunpack.c.h.b16 %v690
    %v1014 = vunpack.c.l.b16 %v691
    %v1015 = vunpack.c.h.b16 %v691
    %v1016 = vunpack.c.l.b16 %v692
    %v1017 = vunpack.c.h.b16 %v692
    %v1018 = vunpack.c.l.b16 %v693
    %v1019 = vunpack.c.h.b16 %v693
    %v1020 = vunpack.c.l.b16 %v694
    %v1021 = vunpack.c.h.b16 %v694
    %v1022 = vunpack.c.l.b16 %v695
    %v1023 = vunpack.c.h.b16 %v695
    %v1024 = vunpack.c.l.b16 %v696
    %v1025 = vunpack.c.h.b16 %v696
    %v1026 = vunpack.c.l.b16 %v697
    %v1027 = vunpack.c.h.b16 %v697
    %v1028 = vunpack.c.l.b16 %v698
    %v1029 = vunpack.c.h.b16 %v698
    %v1030 = vunpack.c.l.b16 %v699
    %v1031 = vunpack.c.h.b16 %v699
    %v1032 = vunpack.c.l.b16 %v700
    %v1033 = vunpack.c.h.b16 %v700
    %v1034 = vunpack.c.l.b16 %v701
    %v1035 = vunpack.c.h.b16 %v701
    %v1036 = vunpack.c.l.b16 %v702
    %v1037 = vunpack.c.h.b16 %v702
    %v1038 = vunpack.c.l.b16 %v703
    %v1039 = vunpack.c.h.b16 %v703
    %v1040 = vunpack.c.l.b16 %v704
    %v1041 = vunpack.c.h.b16 %v704
    %v1042 = vunpack.c.l.b16 %v705
    %v1043 = vunpack.c.h.b16 %v705
    %v1044 = vunpack.c.l.b16 %v706
    %v1045 = vunpack.c.h.b16 %v706
    %v1046 = vunpack.c.l.b16 %v707
    %v1047 = vunpack.c.h.b16 %v707
    %v1048 = vunpack.c.l.b16 %v708
    %v1049 = vunpack.c.h.b16 %v708
    %v1050 = vunpack.c.l.b16 %v709
    %v1051 = vunpack.c.h.b16 %v709
    %v1052 = vunpack.c.l.b16 %v710
    %v1053 = vunpack.c.h.b16 %v710
    %v1054 = vunpack.c.l.b16 %v711
    %v1055 = vunpack.c.h.b16 %v711
    %v1056 = vunpack.c.l.b16 %v712
    %v1057 = vunpack.c.h.b16 %v712
    %v1058 = vunpack.c.l.b16 %v713
    %v1059 = vunpack.c.h.b16 %v713
    %v1060 = vunpack.c.l.b16 %v714
    %v1061 = vunpack.c.h.b16 %v714
    %v1062 = vunpack.c.l.b16 %v715
    %v1063 = vunpack.c.h.b16 %v715
    %v1064 = vunpack.c.l.b16 %v716
    %v1065 = vunpack.c.h.b16 %v716
    %v1066 = vunpack.c.l.b16 %v717
    %v1067 = vunpack.c.h.b16 %v717
    %v1068 = vunpack.c.l.b16 %v718
    %v1069 = vunpack.c.h.b16 %v718
    %v1070 = vunpack.c.l.b16 %v719
    %v1071 = vunpack.c.h.b16 %v719
    %v1072 = vunpack.c.l.b16 %v720
    %v1073 = vunpack.c.h.b16 %v720
    %v1074 = vunpack.c.l.b16 %v721
    %v1075 = vunpack.c.h.b16 %v721
    %v1076 = vunpack.c.l.b16 %v722
    %v1077 = vunpack.c.h.b16 %v722
    %v1078 = vunpack.c.l.b16 %v723
    %v1079 = vunpack.c.h.b16 %v723
    %v1080 = vunpack.c.l.b16 %v724
    %v1081 = vunpack.c.h.b16 %v724
    %v1082 = vunpack.c.l.b16 %v725
    %v1083 = vunpack.c.h.b16 %v725
    %v1084 = vunpack.c.l.b16 %v726
    %v1085 = vunpack.c.h.b16 %v726
    %v1086 = vunpack.c.l.b16 %v727
    %v1087 = vunpack.c.h.b16 %v727
    %v1088 = vunpack.c.l.b16 %v728
    %v1089 = vunpack.c.h.b16 %v728
    %v1090 = vunpack.c.l.b16 %v729
    %v1091 = vunpack.c.h.b16 %v729
    %v1092 = vunpack.c.l.b16 %v730
    %v1093 = vunpack.c.h.b16 %v730
    %v1094 = vunpack.c.l.b16 %v731
    %v1095 = vunpack.c.h.b16 %v731
    %v1096 = vunpack.c.l.b16 %v732
    %v1097 = vunpack.c.h.b16 %v732
    %v1098 = vunpack.c.l.b16 %v733
    %v1099 = vunpack.c.h.b16 %v733
    %v1100 = vunpack.c.l.b16 %v734
    %v1101 = vunpack.c.h.b16 %v734
    %v1102 = vunpack.c.l.b16 %v735
    %v1103 = vunpack.c.h.b16 %v735
    %v1104 = vunpack.c.l.b16 %v736
    %v1105 = vunpack.c.h.b16 %v736
    %v1106 = vunpack.c.l.b16 %v737
    %v1107 = vunpack.c.h.b16 %v737
    %v1108 = vunpack.c.l.b16 %v738
    %v1109 = vunpack.c.h.b16 %v738
    %v1110 = vunpack.c.l.b16 %v739
    %v1111 = vunpack.c.h.b16 %v739
    %v1112 = vunpack.c.l.b16 %v740
    %v1113 = vunpack.c.h.b16 %v740
    %v1114 = vunpack.c.l.b16 %v741
    %v1115 = vunpack.c.h.b16 %v741
    %v1116 = vunpack.c.l.b16 %v742
    %v1117 = vunpack.c.h.b16 %v742
    %v1118 = vunpack.c.l.b16 %v743
    %v1119 = vunpack.c.h.b16 %v743
    %v1120 = vunpack.c.l.b16 %v744
    %v1121 = vunpack.c.h.b16 %v744
    %v1122 = vunpack.c.l.b16 %v745
    %v1123 = vunpack.c.h.b16 %v745
    %v1124 = vunpack.c.l.b16 %v746
    %v1125 = vunpack.c.h.b16 %v746
    %v1126 = vunpack.c.l.b16 %v747
    %v1127 = vunpack.c.h.b16 %v747
    %v1128 = vunpack.c.l.b16 %v748
    %v1129 = vunpack.c.h.b16 %v748
    %v1130 = vunpack.c.l.b16 %v749
    %v1131 = vunpack.c.h.b16 %v749
    %v1132 = vunpack.c.l.b16 %v750
    %v1133 = vunpack.c.h.b16 %v750
    %v1134 = vunpack.c.l.b16 %v751
    %v1135 = vunpack.c.h.b16 %v751
    %v1136 = vunpack.c.l.b16 %v752
    %v1137 = vunpack.c.h.b16 %v752
    %v1138 = vunpack.c.l.b16 %v753
    %v1139 = vunpack.c.h.b16 %v753
    %v1140 = vunpack.c.l.b16 %v754
    %v1141 = vunpack.c.h.b16 %v754
    %v1142 = vunpack.c.l.b16 %v755
    %v1143 = vunpack.c.h.b16 %v755
    %v1144 = vunpack.c.l.b16 %v756
    %v1145 = vunpack.c.h.b16 %v756
    %v1146 = vunpack.c.l.b16 %v757
    %v1147 = vunpack.c.h.b16 %v757
    %v1148 = vunpack.c.l.b16 %v758
    %v1149 = vunpack.c.h.b16 %v758
    %v1150 = vunpack.c.l.b16 %v759
    %v1151 = vunpack.c.h.b16 %v759
    %v1152 = vunpack.c.l.b16 %v760
    %v1153 = vunpack.c.h.b16 %v760
    %v1154 = vunpack.c.l.b16 %v761
    %v1155 = vunpack.c.h.b16 %v761
    %v1156 = vunpack.c.l.b16 %v762
    %v1157 = vunpack.c.h.b16 %v762
    %v1158 = vunpack.c.l.b16 %v763
    %v1159 = vunpack.c.h.b16 %v763
    %v1160 = vunpack.c.l.b16 %v764
    %v1161 = vunpack.c.h.b16 %v764
    %v1162 = vunpack.c.l.b16 %v765
    %v1163 = vunpack.c.h.b16 %v765
    %v1164 = vunpack.c.l.b16 %v766
    %v1165 = vunpack.c.h.b16 %v766
    %v1166 = vunpack.c.l.b16 %v767
    %v1167 = vunpack.c.h.b16 %v767
    %v1168 = vunpack.c.l.b16 %v768
    %v1169 = vunpack.c.h.b16 %v768
    %v1170 = vunpack.c.l.b16 %v769
    %v1171 = vunpack.c.h.b16 %v769
    %v1172 = vunpack.c.l.b16 %v770
    %v1173 = vunpack.c.h.b16 %v770
    %v1174 = vunpack.c.l.b16 %v771
    %v1175 = vunpack.c.h.b16 %v771
    %v1176 = vunpack.c.l.b16 %v772
    %v1177 = vunpack.c.h.b16 %v772
    %v1178 = vunpack.c.l.b16 %v773
    %v1179 = vunpack.c.h.b16 %v773
    %v1180 = vpack.c.b16 %v928, %v924
    %v1181 = vpack.c.b16 %v929, %v925
    %v1182 = vpack.c.b16 %v930, %v926
    %v1183 = vpack.c.b16 %v931, %v927
    %v1184 = vpack.c.b16 %v936, %v932
    %v1185 = vpack.c.b16 %v937, %v933
    %v1186 = vpack.c.b16 %v938, %v934
    %v1187 = vpack.c.b16 %v939, %v935
    %v1188 = vpack.c.b16 %v944, %v940
    %v1189 = vpack.c.b16 %v945, %v941
    %v1190 = vpack.c.b16 %v946, %v942
    %v1191 = vpack.c.b16 %v947, %v943
    %v1192 = vpack.c.b16 %v952, %v948
    %v1193 = vpack.c.b16 %v953, %v949
    %v1194 = vpack.c.b16 %v954, %v950
    %v1195 = vpack.c.b16 %v955, %v951
    %v1196 = vpack.c.b16 %v960, %v956
    %v1197 = vpack.c.b16 %v961, %v957
    %v1198 = vpack.c.b16 %v962, %v958
    %v1199 = vpack.c.b16 %v963, %v959
    %v1200 = vpack.c.b16 %v968, %v964
    %v1201 = vpack.c.b16 %v969, %v965
    %v1202 = vpack.c.b16 %v970, %v966
    %v1203 = vpack.c.b16 %v971, %v967
    %v1204 = vpack.c.b16 %v976, %v972
    %v1205 = vpack.c.b16 %v977, %v973
    %v1206 = vpack.c.b16 %v978, %v974
    %v1207 = vpack.c.b16 %v979, %v975
    %v1208 = vpack.c.b16 %v984, %v980
    %v1209 = vpack.c.b16 %v985, %v981
    %v1210 = vpack.c.b16 %v986, %v982
    %v1211 = vpack.c.b16 %v987, %v983
    %v1212 = vpack.c.b16 %v992, %v988
    %v1213 = vpack.c.b16 %v993, %v989
    %v1214 = vpack.c.b16 %v994, %v990
    %v1215 = vpack.c.b16 %v995, %v991
    %v1216 = vpack.c.b16 %v1000, %v996
    %v1217 = vpack.c.b16 %v1001, %v997
    %v1218 = vpack.c.b16 %v1002, %v998
    %v1219 = vpack.c.b16 %v1003, %v999
    %v1220 = vpack.c.b16 %v1008, %v1004
    %v1221 = vpack.c.b16 %v1009, %v1005
    %v1222 = vpack.c.b16 %v1010, %v1006
    %v1223 = vpack.c.b16 %v1011, %v1007
    %v1224 = vpack.c.b16 %v1016, %v1012
    %v1225 = vpack.c.b16 %v1017, %v1013
    %v1226 = vpack.c.b16 %v1018, %v1014
    %v1227 = vpack.c.b16 %v1019, %v1015
    %v1228 = vpack.c.b16 %v1024, %v1020
    %v1229 = vpack.c.b16 %v1025, %v1021
    %v1230 = vpack.c.b16 %v1026, %v1022
    %v1231 = vpack.c.b16 %v1027, %v1023
    %v1232 = vpack.c.b16 %v1032, %v1028
    %v1233 = vpack.c.b16 %v1033, %v1029
    %v1234 = vpack.c.b16 %v1034, %v1030
    %v1235 = vpack.c.b16 %v1035, %v1031
    %v1236 = vpack.c.b16 %v1040, %v1036
    %v1237 = vpack.c.b16 %v1041, %v1037
    %v1238 = vpack.c.b16 %v1042, %v1038
    %v1239 = vpack.c.b16 %v1043, %v1039
    %v1240 = vpack.c.b16 %v1048, %v1044
    %v1241 = vpack.c.b16 %v1049, %v1045
    %v1242 = vpack.c.b16 %v1050, %v1046
    %v1243 = vpack.c.b16 %v1051, %v1047
    %v1244 = vpack.c.b16 %v1056, %v1052
    %v1245 = vpack.c.b16 %v1057, %v1053
    %v1246 = vpack.c.b16 %v1058, %v1054
    %v1247 = vpack.c.b16 %v1059, %v1055
    %v1248 = vpack.c.b16 %v1064, %v1060
    %v1249 = vpack.c.b16 %v1065, %v1061
    %v1250 = vpack.c.b16 %v1066, %v1062
    %v1251 = vpack.c.b16 %v1067, %v1063
    %v1252 = vpack.c.b16 %v1072, %v1068
    %v1253 = vpack.c.b16 %v1073, %v1069
    %v1254 = vpack.c.b16 %v1074, %v1070
    %v1255 = vpack.c.b16 %v1075, %v1071
    %v1256 = vpack.c.b16 %v1080, %v1076
    %v1257 = vpack.c.b16 %v1081, %v1077
    %v1258 = vpack.c.b16 %v1082, %v1078
    %v1259 = vpack.c.b16 %v1083, %v1079
    %v1260 = vpack.c.b16 %v1088, %v1084
    %v1261 = vpack.c.b16 %v1089, %v1085
    %v1262 = vpack.c.b16 %v1090, %v1086
    %v1263 = vpack.c.b16 %v1091, %v1087
    %v1264 = vpack.c.b16 %v1096, %v1092
    %v1265 = vpack.c.b16 %v1097, %v1093
    %v1266 = vpack.c.b16 %v1098, %v1094
    %v1267 = vpack.c.b16 %v1099, %v1095
    %v1268 = vpack.c.b16 %v1104, %v1100
    %v1269 = vpack.c.b16 %v1105, %v1101
    %v1270 = vpack.c.b16 %v1106, %v1102
    %v1271 = vpack.c.b16 %v1107, %v1103
    %v1272 = vpack.c.b16 %v1112, %v1108
    %v1273 = vpack.c.b16 %v1113, %v1109
    %v1274 = vpack.c.b16 %v1114, %v1110
    %v1275 = vpack.c.b16 %v1115, %v1111
    %v1276 = vpack.c.b16 %v1120, %v1116
    %v1277 = vpack.c.b16 %v1121, %v1117
    %v1278 = vpack.c.b16 %v1122, %v1118
    %v1279 = vpack.c.b16 %v1123, %v1119
    %v1280 = vpack.c.b16 %v1128, %v1124
    %v1281 = vpack.c.b16 %v1129, %v1125
    %v1282 = vpack.c.b16 %v1130, %v1126
    %v1283 = vpack.c.b16 %v1131, %v1127
    %v1284 = vpack.c.b16 %v1136, %v1132
    %v1285 = vpack.c.b16 %v1137, %v1133
    %v1286 = vpack.c.b16 %v1138, %v1134
    %v1287 = vpack.c.b16 %v1139, %v1135
    %v1288 = vpack.c.b16 %v1144, %v1140
    %v1289 = vpack.c.b16 %v1145, %v1141
    %v1290 = vpack.c.b16 %v1146, %v1142
    %v1291 = vpack.c.b16 %v1147, %v1143
    %v1292 = vpack.c.b16 %v1152, %v1148
    %v1293 = vpack.c.b16 %v1153, %v1149
    %v1294 = vpack.c.b16 %v1154, %v1150
    %v1295 = vpack.c.b16 %v1155, %v1151
    %v1296 = vpack.c.b16 %v1160, %v1156
    %v1297 = vpack.c.b16 %v1161, %v1157
    %v1298 = vpack.c.b16 %v1162, %v1158
    %v1299 = vpack.c.b16 %v1163, %v1159
    %v1300 = vpack.c.b16 %v1168, %v1164
    %v1301 = vpack.c.b16 %v1169, %v1165
    %v1302 = vpack.c.b16 %v1170, %v1166
    %v1303 = vpack.c.b16 %v1171, %v1167
    %v1304 = vpack.c.b16 %v1176, %v1172
    %v1305 = vpack.c.b16 %v1177, %v1173
    %v1306 = vpack.c.b16 %v1178, %v1174
    %v1307 = vpack.c.b16 %v1179, %v1175
    %1436 = vmatprep.subr.bf16.mxu0 %v1209
    %1437 = vmatpush1.bf16.msra.mxu0 %v1208
    %1438 = vmatprep.subr.bf16.mxu0 %v1205
    %1439 = vmatpush1.bf16.msra.mxu0 %v1204
    %1440 = vmatprep.subr.bf16.mxu0 %v1201
    %1441 = vmatpush1.bf16.msra.mxu0 %v1200
    %1442 = vmatprep.subr.bf16.mxu0 %v1197
    %1443 = vmatpush1.bf16.msra.mxu0 %v1196
    %1444 = vmatprep.subr.bf16.mxu0 %v1193
    %1445 = vmatpush1.bf16.msra.mxu0 %v1192
    %1446 = vmatprep.subr.bf16.mxu0 %v1189
    %1447 = vmatpush1.bf16.msra.mxu0 %v1188
    %1448 = vmatprep.subr.bf16.mxu0 %v1185
    %1449 = vmatpush1.bf16.msra.mxu0 %v1184
    %1450 = vmatprep.subr.bf16.mxu0 %v1181
    %1451 = vmatpush1.bf16.msra.mxu0 %v1180
    %1452 = vmatprep.subr.bf16.mxu0 %v1241
    %1453 = vmatpush2.bf16.msra.mxu0 %v1240
    %1454 = vmatprep.subr.bf16.mxu0 %v1237
    %1455 = vmatpush2.bf16.msra.mxu0 %v1236
    %1456 = vmatprep.subr.bf16.mxu0 %v1233
    %1457 = vmatpush2.bf16.msra.mxu0 %v1232
    %1458 = vmatprep.subr.bf16.mxu0 %v1229
    %1459 = vmatpush2.bf16.msra.mxu0 %v1228
    %1460 = vmatprep.subr.bf16.mxu0 %v1225
    %1461 = vmatpush2.bf16.msra.mxu0 %v1224
    %1462 = vmatprep.subr.bf16.mxu0 %v1221
    %1463 = vmatpush2.bf16.msra.mxu0 %v1220
    %1464 = vmatprep.subr.bf16.mxu0 %v1217
    %1465 = vmatpush2.bf16.msra.mxu0 %v1216
    %1466 = vmatprep.subr.bf16.mxu0 %v1213
    %1467 = vmatpush2.bf16.msra.mxu0 %v1212
    %1468 = vmatprep.mubr.bf16.mxu0 %v643
    %1469 = vmatmul.mubr.bf16.gmra.mxu0 %v642
    %v1470 = vpop.f32.mrf.mxu0
    %v1471 = vadd.f32 %v779, %v1470
    %v1472 = vpop.f32.mrf.mxu0
    %v1473 = vadd.f32 %v783, %v1472
    %v1474 = vpop.f32.mrf.mxu0
    %v1475 = vpop.f32.mrf.mxu0
    %1476 = vdwg.mxu0
    %1477 = vmatprep.subr.bf16.mxu0 %v1273
    %1478 = vmatpush1.bf16.msra.mxu0 %v1272
    %1479 = vmatprep.subr.bf16.mxu0 %v1269
    %1480 = vmatpush1.bf16.msra.mxu0 %v1268
    %1481 = vmatprep.subr.bf16.mxu0 %v1265
    %1482 = vmatpush1.bf16.msra.mxu0 %v1264
    %1483 = vmatprep.subr.bf16.mxu0 %v1261
    %1484 = vmatpush1.bf16.msra.mxu0 %v1260
    %1485 = vmatprep.subr.bf16.mxu0 %v1257
    %1486 = vmatpush1.bf16.msra.mxu0 %v1256
    %1487 = vmatprep.subr.bf16.mxu0 %v1253
    %1488 = vmatpush1.bf16.msra.mxu0 %v1252
    %1489 = vmatprep.subr.bf16.mxu0 %v1249
    %1490 = vmatpush1.bf16.msra.mxu0 %v1248
    %1491 = vmatprep.subr.bf16.mxu0 %v1245
    %1492 = vmatpush1.bf16.msra.mxu0 %v1244
    %1493 = vmatprep.subr.bf16.mxu0 %v1305
    %1494 = vmatpush2.bf16.msra.mxu0 %v1304
    %1495 = vmatprep.subr.bf16.mxu0 %v1301
    %1496 = vmatpush2.bf16.msra.mxu0 %v1300
    %1497 = vmatprep.subr.bf16.mxu0 %v1297
    %1498 = vmatpush2.bf16.msra.mxu0 %v1296
    %1499 = vmatprep.subr.bf16.mxu0 %v1293
    %1500 = vmatpush2.bf16.msra.mxu0 %v1292
    %1501 = vmatprep.subr.bf16.mxu0 %v1289
    %1502 = vmatpush2.bf16.msra.mxu0 %v1288
    %1503 = vmatprep.subr.bf16.mxu0 %v1285
    %1504 = vmatpush2.bf16.msra.mxu0 %v1284
    %1505 = vmatprep.subr.bf16.mxu0 %v1281
    %1506 = vmatpush2.bf16.msra.mxu0 %v1280
    %1507 = vmatprep.subr.bf16.mxu0 %v1277
    %1508 = vmatpush2.bf16.msra.mxu0 %v1276
    %1509 = vmatprep.mubr.bf16.mxu0 %v645
    %1510 = vmatmul.mubr.bf16.gmra.mxu0 %v644
    %v1511 = vpop.f32.mrf.mxu0
    %v1512 = vadd.f32 %v1471, %v1511
    %v1513 = vpop.f32.mrf.mxu0
    %v1514 = vadd.f32 %v1473, %v1513
    %v1515 = vpop.f32.mrf.mxu0
    %v1516 = vpop.f32.mrf.mxu0
    %1517 = vdwg.mxu0
    %1518 = vmatprep.subr.bf16.mxu0 %v1211
    %1519 = vmatpush1.bf16.msra.mxu0 %v1210
    %1520 = vmatprep.subr.bf16.mxu0 %v1207
    %1521 = vmatpush1.bf16.msra.mxu0 %v1206
    %1522 = vmatprep.subr.bf16.mxu0 %v1203
    %1523 = vmatpush1.bf16.msra.mxu0 %v1202
    %1524 = vmatprep.subr.bf16.mxu0 %v1199
    %1525 = vmatpush1.bf16.msra.mxu0 %v1198
    %1526 = vmatprep.subr.bf16.mxu0 %v1195
    %1527 = vmatpush1.bf16.msra.mxu0 %v1194
    %1528 = vmatprep.subr.bf16.mxu0 %v1191
    %1529 = vmatpush1.bf16.msra.mxu0 %v1190
    %1530 = vmatprep.subr.bf16.mxu0 %v1187
    %1531 = vmatpush1.bf16.msra.mxu0 %v1186
    %1532 = vmatprep.subr.bf16.mxu0 %v1183
    %1533 = vmatpush1.bf16.msra.mxu0 %v1182
    %1534 = vmatprep.subr.bf16.mxu0 %v1243
    %1535 = vmatpush2.bf16.msra.mxu0 %v1242
    %1536 = vmatprep.subr.bf16.mxu0 %v1239
    %1537 = vmatpush2.bf16.msra.mxu0 %v1238
    %1538 = vmatprep.subr.bf16.mxu0 %v1235
    %1539 = vmatpush2.bf16.msra.mxu0 %v1234
    %1540 = vmatprep.subr.bf16.mxu0 %v1231
    %1541 = vmatpush2.bf16.msra.mxu0 %v1230
    %1542 = vmatprep.subr.bf16.mxu0 %v1227
    %1543 = vmatpush2.bf16.msra.mxu0 %v1226
    %1544 = vmatprep.subr.bf16.mxu0 %v1223
    %1545 = vmatpush2.bf16.msra.mxu0 %v1222
    %1546 = vmatprep.subr.bf16.mxu0 %v1219
    %1547 = vmatpush2.bf16.msra.mxu0 %v1218
    %1548 = vmatprep.subr.bf16.mxu0 %v1215
    %1549 = vmatpush2.bf16.msra.mxu0 %v1214
    %1550 = vmatprep.mubr.bf16.mxu0 %v643
    %1551 = vmatmul.mubr.bf16.gmra.mxu0 %v642
    %v1552 = vpop.f32.mrf.mxu0
    %v1553 = vadd.f32 %v787, %v1552
    %v1554 = vpop.f32.mrf.mxu0
    %v1555 = vadd.f32 %v791, %v1554
    %v1556 = vpop.f32.mrf.mxu0
    %v1557 = vpop.f32.mrf.mxu0
    %1558 = vdwg.mxu0
    %1559 = vmatprep.subr.bf16.mxu0 %v1275
    %1560 = vmatpush1.bf16.msra.mxu0 %v1274
    %1561 = vmatprep.subr.bf16.mxu0 %v1271
    %1562 = vmatpush1.bf16.msra.mxu0 %v1270
    %1563 = vmatprep.subr.bf16.mxu0 %v1267
    %1564 = vmatpush1.bf16.msra.mxu0 %v1266
    %1565 = vmatprep.subr.bf16.mxu0 %v1263
    %1566 = vmatpush1.bf16.msra.mxu0 %v1262
    %1567 = vmatprep.subr.bf16.mxu0 %v1259
    %1568 = vmatpush1.bf16.msra.mxu0 %v1258
    %1569 = vmatprep.subr.bf16.mxu0 %v1255
    %1570 = vmatpush1.bf16.msra.mxu0 %v1254
    %1571 = vmatprep.subr.bf16.mxu0 %v1251
    %1572 = vmatpush1.bf16.msra.mxu0 %v1250
    %1573 = vmatprep.subr.bf16.mxu0 %v1247
    %1574 = vmatpush1.bf16.msra.mxu0 %v1246
    %1575 = vmatprep.subr.bf16.mxu0 %v1307
    %1576 = vmatpush2.bf16.msra.mxu0 %v1306
    %1577 = vmatprep.subr.bf16.mxu0 %v1303
    %1578 = vmatpush2.bf16.msra.mxu0 %v1302
    %1579 = vmatprep.subr.bf16.mxu0 %v1299
    %1580 = vmatpush2.bf16.msra.mxu0 %v1298
    %1581 = vmatprep.subr.bf16.mxu0 %v1295
    %1582 = vmatpush2.bf16.msra.mxu0 %v1294
    %1583 = vmatprep.subr.bf16.mxu0 %v1291
    %1584 = vmatpush2.bf16.msra.mxu0 %v1290
    %1585 = vmatprep.subr.bf16.mxu0 %v1287
    %1586 = vmatpush2.bf16.msra.mxu0 %v1286
    %1587 = vmatprep.subr.bf16.mxu0 %v1283
    %1588 = vmatpush2.bf16.msra.mxu0 %v1282
    %1589 = vmatprep.subr.bf16.mxu0 %v1279
    %1590 = vmatpush2.bf16.msra.mxu0 %v1278
    %1591 = vmatprep.mubr.bf16.mxu0 %v645
    %1592 = vmatmul.mubr.bf16.gmra.mxu0 %v644
    %v1593 = vpop.f32.mrf.mxu0
    %v1594 = vadd.f32 %v1553, %v1593
    %v1595 = vpop.f32.mrf.mxu0
    %v1596 = vadd.f32 %v1555, %v1595
    %v1597 = vpop.f32.mrf.mxu0
    %v1598 = vpop.f32.mrf.mxu0
    %1599 = vdwg.mxu0
    %v1600 = vmax.f32 %v1512, 0.0
    %v1601 = vmax.f32 %v1514, 0.0
    %v1602 = vmax.f32 %v1594, 0.0
    %v1603 = vmax.f32 %v1596, 0.0
    %v1604 = vand.u32 2147483647, %v1512
    %v1605 = vand.u32 2147483647, %v1514
    %v1606 = vand.u32 2147483647, %v1594
    %v1607 = vand.u32 2147483647, %v1596
    %v1608 = vsub.f32 0.0, %v1604
    %v1609 = vsub.f32 0.0, %v1605
    %v1610 = vsub.f32 0.0, %v1606
    %v1611 = vsub.f32 0.0, %v1607
    %v1612 = vmul.f32 %v1608, 1.442695
    %v1613 = vpow.pop %v1612
    %v1614 = vmul.f32 %v1609, 1.442695
    %v1615 = vpow.pop %v1614
    %v1616 = vmul.f32 %v1610, 1.442695
    %v1617 = vpow.pop %v1616
    %v1618 = vmul.f32 %v1611, 1.442695
    %v1619 = vpow.pop %v1618
    %v1620 = vadd.f32 %v1613, 1.0
    %v1621 = vlog2.pop %v1620
    %v1622 = vmul.f32 %v1621, 0.6931472
    %v1623 = vmul.f32 -0.5, %v1613
    %v1624 = vadd.f32 %v1623, 1.0
    %v1625 = vmul.f32 %v1624, %v1613
    %v1626 = vand.u32 2147483647, %v1613
    %vm1627 = vcmp.lt.f32.partialorder %v1626, 0.0004427343
    %v1628 = vsel %vm1627, %v1625, %v1622
    %v1629 = vadd.f32 %v1615, 1.0
    %v1630 = vlog2.pop %v1629
    %v1631 = vmul.f32 %v1630, 0.6931472
    %v1632 = vmul.f32 -0.5, %v1615
    %v1633 = vadd.f32 %v1632, 1.0
    %v1634 = vmul.f32 %v1633, %v1615
    %v1635 = vand.u32 2147483647, %v1615
    %vm1636 = vcmp.lt.f32.partialorder %v1635, 0.0004427343
    %v1637 = vsel %vm1636, %v1634, %v1631
    %v1638 = vadd.f32 %v1617, 1.0
    %v1639 = vlog2.pop %v1638
    %v1640 = vmul.f32 %v1639, 0.6931472
    %v1641 = vmul.f32 -0.5, %v1617
    %v1642 = vadd.f32 %v1641, 1.0
    %v1643 = vmul.f32 %v1642, %v1617
    %v1644 = vand.u32 2147483647, %v1617
    %vm1645 = vcmp.lt.f32.partialorder %v1644, 0.0004427343
    %v1646 = vsel %vm1645, %v1643, %v1640
    %v1647 = vadd.f32 %v1619, 1.0
    %v1648 = vlog2.pop %v1647
    %v1649 = vmul.f32 %v1648, 0.6931472
    %v1650 = vmul.f32 -0.5, %v1619
    %v1651 = vadd.f32 %v1650, 1.0
    %v1652 = vmul.f32 %v1651, %v1619
    %v1653 = vand.u32 2147483647, %v1619
    %vm1654 = vcmp.lt.f32.partialorder %v1653, 0.0004427343
    %v1655 = vsel %vm1654, %v1652, %v1649
    %v1656 = vadd.f32 %v1600, %v1628
    %v1657 = vadd.f32 %v1601, %v1637
    %v1658 = vadd.f32 %v1602, %v1646
    %v1659 = vadd.f32 %v1603, %v1655
    %v1660 = vld [vmem:[#allocation11] sm:$0xf]
    %v1661 = vld [vmem:[#allocation13] sm:$0xf]
    %v1662 = vrot.slane %v1656, 4
    %v1663 = vadd.f32 %v1656, %v1662
    %v1664 = vrot.slane %v1663, 2
    %v1665 = vadd.f32 %v1663, %v1664
    %v1666 = vrot.slane %v1665, 1
    %v1667 = vadd.f32 %v1665, %v1666
    %v1668 = vrot.slane %v1657, 4
    %v1669 = vadd.f32 %v1657, %v1668
    %v1670 = vrot.slane %v1669, 2
    %v1671 = vadd.f32 %v1669, %v1670
    %v1672 = vrot.slane %v1671, 1
    %v1673 = vadd.f32 %v1671, %v1672
    %v1674 = vrot.slane %v1658, 4
    %v1675 = vadd.f32 %v1658, %v1674
    %v1676 = vrot.slane %v1675, 2
    %v1677 = vadd.f32 %v1675, %v1676
    %v1678 = vrot.slane %v1677, 1
    %v1679 = vadd.f32 %v1677, %v1678
    %v1680 = vrot.slane %v1659, 4
    %v1681 = vadd.f32 %v1659, %v1680
    %v1682 = vrot.slane %v1681, 2
    %v1683 = vadd.f32 %v1681, %v1682
    %v1684 = vrot.slane %v1683, 1
    %v1685 = vadd.f32 %v1683, %v1684
    %v1686 = vmul.f32 %v1667, %v523
    %v1687 = vmul.f32 %v1673, %v523
    %v1688 = vmul.f32 %v1679, %v523
    %v1689 = vmul.f32 %v1685, %v523
    %v1690 = vsub.f32 %v1656, %v1686
    %v1691 = vsub.f32 %v1657, %v1687
    %v1692 = vsub.f32 %v1658, %v1688
    %v1693 = vsub.f32 %v1659, %v1689
    %v1694 = vmul.f32 %v1690, %v1690
    %v1695 = vmul.f32 %v1691, %v1691
    %v1696 = vmul.f32 %v1692, %v1692
    %v1697 = vmul.f32 %v1693, %v1693
    %v1698 = vrot.slane %v1694, 4
    %v1699 = vadd.f32 %v1694, %v1698
    %v1700 = vrot.slane %v1699, 2
    %v1701 = vadd.f32 %v1699, %v1700
    %v1702 = vrot.slane %v1701, 1
    %v1703 = vadd.f32 %v1701, %v1702
    %v1704 = vrot.slane %v1695, 4
    %v1705 = vadd.f32 %v1695, %v1704
    %v1706 = vrot.slane %v1705, 2
    %v1707 = vadd.f32 %v1705, %v1706
    %v1708 = vrot.slane %v1707, 1
    %v1709 = vadd.f32 %v1707, %v1708
    %v1710 = vrot.slane %v1696, 4
    %v1711 = vadd.f32 %v1696, %v1710
    %v1712 = vrot.slane %v1711, 2
    %v1713 = vadd.f32 %v1711, %v1712
    %v1714 = vrot.slane %v1713, 1
    %v1715 = vadd.f32 %v1713, %v1714
    %v1716 = vrot.slane %v1697, 4
    %v1717 = vadd.f32 %v1697, %v1716
    %v1718 = vrot.slane %v1717, 2
    %v1719 = vadd.f32 %v1717, %v1718
    %v1720 = vrot.slane %v1719, 1
    %v1721 = vadd.f32 %v1719, %v1720
    %v1722 = vmul.f32 %v1703, %v523
    %v1723 = vmul.f32 %v1709, %v523
    %v1724 = vmul.f32 %v1715, %v523
    %v1725 = vmul.f32 %v1721, %v523
    %v1726 = vadd.f32 %v1722, 1e-05
    %v1727 = vadd.f32 %v1723, 1e-05
    %v1728 = vadd.f32 %v1724, 1e-05
    %v1729 = vadd.f32 %v1725, 1e-05
    %v1730 = vrsqrt.pop %v1726
    %v1731 = vrsqrt.pop %v1727
    %v1732 = vrsqrt.pop %v1728
    %v1733 = vrsqrt.pop %v1729
    %v1735 = vlaneseq
    %v1736 = vshrl.u32 %v1735, 7
    %v1737 = vsub.s32 0, %v1736
    %v1738 = vrot.slane %v1660, %v1737
    %v1739 = vlaneseq
    %v1740 = vshrl.u32 %v1739, 7
    %v1741 = vsub.s32 1, %v1740
    %v1742 = vrot.slane %v1660, %v1741
    %v1743 = vlaneseq
    %v1744 = vshrl.u32 %v1743, 7
    %v1745 = vsub.s32 2, %v1744
    %v1746 = vrot.slane %v1660, %v1745
    %v1747 = vlaneseq
    %v1748 = vshrl.u32 %v1747, 7
    %v1749 = vsub.s32 3, %v1748
    %v1750 = vrot.slane %v1660, %v1749
    %v1755 = vmul.f32 %v1730, %v1738
    %v1756 = vmul.f32 %v1731, %v1742
    %v1757 = vmul.f32 %v1732, %v1746
    %v1758 = vmul.f32 %v1733, %v1750
    %v1759 = vlaneseq
    %v1760 = vshrl.u32 %v1759, 7
    %v1761 = vsub.s32 0, %v1760
    %v1762 = vrot.slane %v1755, %v1761
    %v1763 = vlaneseq
    %v1764 = vshrl.u32 %v1763, 7
    %v1765 = vsub.s32 0, %v1764
    %v1766 = vrot.slane %v1756, %v1765
    %v1767 = vlaneseq
    %v1768 = vshrl.u32 %v1767, 7
    %v1769 = vsub.s32 0, %v1768
    %v1770 = vrot.slane %v1757, %v1769
    %v1771 = vlaneseq
    %v1772 = vshrl.u32 %v1771, 7
    %v1773 = vsub.s32 0, %v1772
    %v1774 = vrot.slane %v1758, %v1773
    %v1775 = vmul.f32 %v1690, %v1762
    %v1776 = vmul.f32 %v1691, %v1766
    %v1777 = vmul.f32 %v1692, %v1770
    %v1778 = vmul.f32 %v1693, %v1774
    %v1780 = vlaneseq
    %v1781 = vshrl.u32 %v1780, 7
    %v1782 = vsub.s32 0, %v1781
    %v1783 = vrot.slane %v1661, %v1782
    %v1784 = vlaneseq
    %v1785 = vshrl.u32 %v1784, 7
    %v1786 = vsub.s32 1, %v1785
    %v1787 = vrot.slane %v1661, %v1786
    %v1788 = vlaneseq
    %v1789 = vshrl.u32 %v1788, 7
    %v1790 = vsub.s32 2, %v1789
    %v1791 = vrot.slane %v1661, %v1790
    %v1792 = vlaneseq
    %v1793 = vshrl.u32 %v1792, 7
    %v1794 = vsub.s32 3, %v1793
    %v1795 = vrot.slane %v1661, %v1794
    %v1800 = vadd.f32 %v1775, %v1783
    %v1801 = vadd.f32 %v1776, %v1787
    %v1802 = vadd.f32 %v1777, %v1791
    %v1803 = vadd.f32 %v1778, %v1795
    %v1804 = vpack.c.bf16 %v1800, %v1800
    %v1805 = vpack.c.bf16 %v1801, %v1801
    %v1806 = vpack.c.bf16 %v1802, %v1802
    %v1807 = vpack.c.bf16 %v1803, %v1803
    %v1808 = vld [vmem:[#allocation14] sm:$0xff]
    %v1809 = vld [vmem:[#allocation14 + $0x8] sm:$0xff]
    %v1810 = vld [vmem:[#allocation14 + $0x10] sm:$0xff]
    %v1811 = vld [vmem:[#allocation14 + $0x18] sm:$0xff]
    %v1812 = vld [vmem:[#allocation14 + $0x20] sm:$0xff]
    %v1813 = vld [vmem:[#allocation14 + $0x28] sm:$0xff]
    %v1814 = vld [vmem:[#allocation14 + $0x30] sm:$0xff]
    %v1815 = vld [vmem:[#allocation14 + $0x38] sm:$0xff]
    %v1816 = vld [vmem:[#allocation14 + $0x40] sm:$0xff]
    %v1817 = vld [vmem:[#allocation14 + $0x48] sm:$0xff]
    %v1818 = vld [vmem:[#allocation14 + $0x50] sm:$0xff]
    %v1819 = vld [vmem:[#allocation14 + $0x58] sm:$0xff]
    %v1820 = vld [vmem:[#allocation14 + $0x60] sm:$0xff]
    %v1821 = vld [vmem:[#allocation14 + $0x68] sm:$0xff]
    %v1822 = vld [vmem:[#allocation14 + $0x70] sm:$0xff]
    %v1823 = vld [vmem:[#allocation14 + $0x78] sm:$0xff]
    %v1824 = vld [vmem:[#allocation14 + $0x80] sm:$0xff]
    %v1825 = vld [vmem:[#allocation14 + $0x88] sm:$0xff]
    %v1826 = vld [vmem:[#allocation14 + $0x90] sm:$0xff]
    %v1827 = vld [vmem:[#allocation14 + $0x98] sm:$0xff]
    %v1828 = vld [vmem:[#allocation14 + $0xa0] sm:$0xff]
    %v1829 = vld [vmem:[#allocation14 + $0xa8] sm:$0xff]
    %v1830 = vld [vmem:[#allocation14 + $0xb0] sm:$0xff]
    %v1831 = vld [vmem:[#allocation14 + $0xb8] sm:$0xff]
    %v1832 = vld [vmem:[#allocation14 + $0xc0] sm:$0xff]
    %v1833 = vld [vmem:[#allocation14 + $0xc8] sm:$0xff]
    %v1834 = vld [vmem:[#allocation14 + $0xd0] sm:$0xff]
    %v1835 = vld [vmem:[#allocation14 + $0xd8] sm:$0xff]
    %v1836 = vld [vmem:[#allocation14 + $0xe0] sm:$0xff]
    %v1837 = vld [vmem:[#allocation14 + $0xe8] sm:$0xff]
    %v1838 = vld [vmem:[#allocation14 + $0xf0] sm:$0xff]
    %v1839 = vld [vmem:[#allocation14 + $0xf8] sm:$0xff]
    %v1840 = vld [vmem:[#allocation14 + $0x100] sm:$0xff]
    %v1841 = vld [vmem:[#allocation14 + $0x108] sm:$0xff]
    %v1842 = vld [vmem:[#allocation14 + $0x110] sm:$0xff]
    %v1843 = vld [vmem:[#allocation14 + $0x118] sm:$0xff]
    %v1844 = vld [vmem:[#allocation14 + $0x120] sm:$0xff]
    %v1845 = vld [vmem:[#allocation14 + $0x128] sm:$0xff]
    %v1846 = vld [vmem:[#allocation14 + $0x130] sm:$0xff]
    %v1847 = vld [vmem:[#allocation14 + $0x138] sm:$0xff]
    %v1848 = vld [vmem:[#allocation14 + $0x140] sm:$0xff]
    %v1849 = vld [vmem:[#allocation14 + $0x148] sm:$0xff]
    %v1850 = vld [vmem:[#allocation14 + $0x150] sm:$0xff]
    %v1851 = vld [vmem:[#allocation14 + $0x158] sm:$0xff]
    %v1852 = vld [vmem:[#allocation14 + $0x160] sm:$0xff]
    %v1853 = vld [vmem:[#allocation14 + $0x168] sm:$0xff]
    %v1854 = vld [vmem:[#allocation14 + $0x170] sm:$0xff]
    %v1855 = vld [vmem:[#allocation14 + $0x178] sm:$0xff]
    %v1856 = vld [vmem:[#allocation14 + $0x180] sm:$0xff]
    %v1857 = vld [vmem:[#allocation14 + $0x188] sm:$0xff]
    %v1858 = vld [vmem:[#allocation14 + $0x190] sm:$0xff]
    %v1859 = vld [vmem:[#allocation14 + $0x198] sm:$0xff]
    %v1860 = vld [vmem:[#allocation14 + $0x1a0] sm:$0xff]
    %v1861 = vld [vmem:[#allocation14 + $0x1a8] sm:$0xff]
    %v1862 = vld [vmem:[#allocation14 + $0x1b0] sm:$0xff]
    %v1863 = vld [vmem:[#allocation14 + $0x1b8] sm:$0xff]
    %v1864 = vld [vmem:[#allocation14 + $0x1c0] sm:$0xff]
    %v1865 = vld [vmem:[#allocation14 + $0x1c8] sm:$0xff]
    %v1866 = vld [vmem:[#allocation14 + $0x1d0] sm:$0xff]
    %v1867 = vld [vmem:[#allocation14 + $0x1d8] sm:$0xff]
    %v1868 = vld [vmem:[#allocation14 + $0x1e0] sm:$0xff]
    %v1869 = vld [vmem:[#allocation14 + $0x1e8] sm:$0xff]
    %v1870 = vld [vmem:[#allocation14 + $0x1f0] sm:$0xff]
    %v1871 = vld [vmem:[#allocation14 + $0x1f8] sm:$0xff]
    %v1872 = vld [vmem:[#allocation14 + $0x200] sm:$0xff]
    %v1873 = vld [vmem:[#allocation14 + $0x208] sm:$0xff]
    %v1874 = vld [vmem:[#allocation14 + $0x210] sm:$0xff]
    %v1875 = vld [vmem:[#allocation14 + $0x218] sm:$0xff]
    %v1876 = vld [vmem:[#allocation14 + $0x220] sm:$0xff]
    %v1877 = vld [vmem:[#allocation14 + $0x228] sm:$0xff]
    %v1878 = vld [vmem:[#allocation14 + $0x230] sm:$0xff]
    %v1879 = vld [vmem:[#allocation14 + $0x238] sm:$0xff]
    %v1880 = vld [vmem:[#allocation14 + $0x240] sm:$0xff]
    %v1881 = vld [vmem:[#allocation14 + $0x248] sm:$0xff]
    %v1882 = vld [vmem:[#allocation14 + $0x250] sm:$0xff]
    %v1883 = vld [vmem:[#allocation14 + $0x258] sm:$0xff]
    %v1884 = vld [vmem:[#allocation14 + $0x260] sm:$0xff]
    %v1885 = vld [vmem:[#allocation14 + $0x268] sm:$0xff]
    %v1886 = vld [vmem:[#allocation14 + $0x270] sm:$0xff]
    %v1887 = vld [vmem:[#allocation14 + $0x278] sm:$0xff]
    %v1888 = vld [vmem:[#allocation14 + $0x280] sm:$0xff]
    %v1889 = vld [vmem:[#allocation14 + $0x288] sm:$0xff]
    %v1890 = vld [vmem:[#allocation14 + $0x290] sm:$0xff]
    %v1891 = vld [vmem:[#allocation14 + $0x298] sm:$0xff]
    %v1892 = vld [vmem:[#allocation14 + $0x2a0] sm:$0xff]
    %v1893 = vld [vmem:[#allocation14 + $0x2a8] sm:$0xff]
    %v1894 = vld [vmem:[#allocation14 + $0x2b0] sm:$0xff]
    %v1895 = vld [vmem:[#allocation14 + $0x2b8] sm:$0xff]
    %v1896 = vld [vmem:[#allocation14 + $0x2c0] sm:$0xff]
    %v1897 = vld [vmem:[#allocation14 + $0x2c8] sm:$0xff]
    %v1898 = vld [vmem:[#allocation14 + $0x2d0] sm:$0xff]
    %v1899 = vld [vmem:[#allocation14 + $0x2d8] sm:$0xff]
    %v1900 = vld [vmem:[#allocation14 + $0x2e0] sm:$0xff]
    %v1901 = vld [vmem:[#allocation14 + $0x2e8] sm:$0xff]
    %v1902 = vld [vmem:[#allocation14 + $0x2f0] sm:$0xff]
    %v1903 = vld [vmem:[#allocation14 + $0x2f8] sm:$0xff]
    %v1904 = vld [vmem:[#allocation14 + $0x300] sm:$0xff]
    %v1905 = vld [vmem:[#allocation14 + $0x308] sm:$0xff]
    %v1906 = vld [vmem:[#allocation14 + $0x310] sm:$0xff]
    %v1907 = vld [vmem:[#allocation14 + $0x318] sm:$0xff]
    %v1908 = vld [vmem:[#allocation14 + $0x320] sm:$0xff]
    %v1909 = vld [vmem:[#allocation14 + $0x328] sm:$0xff]
    %v1910 = vld [vmem:[#allocation14 + $0x330] sm:$0xff]
    %v1911 = vld [vmem:[#allocation14 + $0x338] sm:$0xff]
    %v1912 = vld [vmem:[#allocation14 + $0x340] sm:$0xff]
    %v1913 = vld [vmem:[#allocation14 + $0x348] sm:$0xff]
    %v1914 = vld [vmem:[#allocation14 + $0x350] sm:$0xff]
    %v1915 = vld [vmem:[#allocation14 + $0x358] sm:$0xff]
    %v1916 = vld [vmem:[#allocation14 + $0x360] sm:$0xff]
    %v1917 = vld [vmem:[#allocation14 + $0x368] sm:$0xff]
    %v1918 = vld [vmem:[#allocation14 + $0x370] sm:$0xff]
    %v1919 = vld [vmem:[#allocation14 + $0x378] sm:$0xff]
    %v1920 = vld [vmem:[#allocation14 + $0x380] sm:$0xff]
    %v1921 = vld [vmem:[#allocation14 + $0x388] sm:$0xff]
    %v1922 = vld [vmem:[#allocation14 + $0x390] sm:$0xff]
    %v1923 = vld [vmem:[#allocation14 + $0x398] sm:$0xff]
    %v1924 = vld [vmem:[#allocation14 + $0x3a0] sm:$0xff]
    %v1925 = vld [vmem:[#allocation14 + $0x3a8] sm:$0xff]
    %v1926 = vld [vmem:[#allocation14 + $0x3b0] sm:$0xff]
    %v1927 = vld [vmem:[#allocation14 + $0x3b8] sm:$0xff]
    %v1928 = vld [vmem:[#allocation14 + $0x3c0] sm:$0xff]
    %v1929 = vld [vmem:[#allocation14 + $0x3c8] sm:$0xff]
    %v1930 = vld [vmem:[#allocation14 + $0x3d0] sm:$0xff]
    %v1931 = vld [vmem:[#allocation14 + $0x3d8] sm:$0xff]
    %v1932 = vld [vmem:[#allocation14 + $0x3e0] sm:$0xff]
    %v1933 = vld [vmem:[#allocation14 + $0x3e8] sm:$0xff]
    %v1934 = vld [vmem:[#allocation14 + $0x3f0] sm:$0xff]
    %v1935 = vld [vmem:[#allocation14 + $0x3f8] sm:$0xff]
    %v1936 = vld [vmem:[#allocation14 + $0x400] sm:$0xff]
    %v1937 = vld [vmem:[#allocation14 + $0x408] sm:$0xff]
    %v1938 = vld [vmem:[#allocation14 + $0x410] sm:$0xff]
    %v1939 = vld [vmem:[#allocation14 + $0x418] sm:$0xff]
    %v1940 = vld [vmem:[#allocation14 + $0x420] sm:$0xff]
    %v1941 = vld [vmem:[#allocation14 + $0x428] sm:$0xff]
    %v1942 = vld [vmem:[#allocation14 + $0x430] sm:$0xff]
    %v1943 = vld [vmem:[#allocation14 + $0x438] sm:$0xff]
    %v1944 = vld [vmem:[#allocation14 + $0x440] sm:$0xff]
    %v1945 = vld [vmem:[#allocation14 + $0x448] sm:$0xff]
    %v1946 = vld [vmem:[#allocation14 + $0x450] sm:$0xff]
    %v1947 = vld [vmem:[#allocation14 + $0x458] sm:$0xff]
    %v1948 = vld [vmem:[#allocation14 + $0x460] sm:$0xff]
    %v1949 = vld [vmem:[#allocation14 + $0x468] sm:$0xff]
    %v1950 = vld [vmem:[#allocation14 + $0x470] sm:$0xff]
    %v1951 = vld [vmem:[#allocation14 + $0x478] sm:$0xff]
    %v1952 = vld [vmem:[#allocation14 + $0x480] sm:$0xff]
    %v1953 = vld [vmem:[#allocation14 + $0x488] sm:$0xff]
    %v1954 = vld [vmem:[#allocation14 + $0x490] sm:$0xff]
    %v1955 = vld [vmem:[#allocation14 + $0x498] sm:$0xff]
    %v1956 = vld [vmem:[#allocation14 + $0x4a0] sm:$0xff]
    %v1957 = vld [vmem:[#allocation14 + $0x4a8] sm:$0xff]
    %v1958 = vld [vmem:[#allocation14 + $0x4b0] sm:$0xff]
    %v1959 = vld [vmem:[#allocation14 + $0x4b8] sm:$0xff]
    %v1960 = vld [vmem:[#allocation14 + $0x4c0] sm:$0xff]
    %v1961 = vld [vmem:[#allocation14 + $0x4c8] sm:$0xff]
    %v1962 = vld [vmem:[#allocation14 + $0x4d0] sm:$0xff]
    %v1963 = vld [vmem:[#allocation14 + $0x4d8] sm:$0xff]
    %v1964 = vld [vmem:[#allocation14 + $0x4e0] sm:$0xff]
    %v1965 = vld [vmem:[#allocation14 + $0x4e8] sm:$0xff]
    %v1966 = vld [vmem:[#allocation14 + $0x4f0] sm:$0xff]
    %v1967 = vld [vmem:[#allocation14 + $0x4f8] sm:$0xff]
    %v1968 = vld [vmem:[#allocation14 + $0x500] sm:$0xff]
    %v1969 = vld [vmem:[#allocation14 + $0x508] sm:$0xff]
    %v1970 = vld [vmem:[#allocation14 + $0x510] sm:$0xff]
    %v1971 = vld [vmem:[#allocation14 + $0x518] sm:$0xff]
    %v1972 = vld [vmem:[#allocation14 + $0x520] sm:$0xff]
    %v1973 = vld [vmem:[#allocation14 + $0x528] sm:$0xff]
    %v1974 = vld [vmem:[#allocation14 + $0x530] sm:$0xff]
    %v1975 = vld [vmem:[#allocation14 + $0x538] sm:$0xff]
    %v1976 = vld [vmem:[#allocation14 + $0x540] sm:$0xff]
    %v1977 = vld [vmem:[#allocation14 + $0x548] sm:$0xff]
    %v1978 = vld [vmem:[#allocation14 + $0x550] sm:$0xff]
    %v1979 = vld [vmem:[#allocation14 + $0x558] sm:$0xff]
    %v1980 = vld [vmem:[#allocation14 + $0x560] sm:$0xff]
    %v1981 = vld [vmem:[#allocation14 + $0x568] sm:$0xff]
    %v1982 = vld [vmem:[#allocation14 + $0x570] sm:$0xff]
    %v1983 = vld [vmem:[#allocation14 + $0x578] sm:$0xff]
    %v1984 = vld [vmem:[#allocation14 + $0x580] sm:$0xff]
    %v1985 = vld [vmem:[#allocation14 + $0x588] sm:$0xff]
    %v1986 = vld [vmem:[#allocation14 + $0x590] sm:$0xff]
    %v1987 = vld [vmem:[#allocation14 + $0x598] sm:$0xff]
    %v1988 = vld [vmem:[#allocation14 + $0x5a0] sm:$0xff]
    %v1989 = vld [vmem:[#allocation14 + $0x5a8] sm:$0xff]
    %v1990 = vld [vmem:[#allocation14 + $0x5b0] sm:$0xff]
    %v1991 = vld [vmem:[#allocation14 + $0x5b8] sm:$0xff]
    %v1992 = vld [vmem:[#allocation14 + $0x5c0] sm:$0xff]
    %v1993 = vld [vmem:[#allocation14 + $0x5c8] sm:$0xff]
    %v1994 = vld [vmem:[#allocation14 + $0x5d0] sm:$0xff]
    %v1995 = vld [vmem:[#allocation14 + $0x5d8] sm:$0xff]
    %v1996 = vld [vmem:[#allocation14 + $0x5e0] sm:$0xff]
    %v1997 = vld [vmem:[#allocation14 + $0x5e8] sm:$0xff]
    %v1998 = vld [vmem:[#allocation14 + $0x5f0] sm:$0xff]
    %v1999 = vld [vmem:[#allocation14 + $0x5f8] sm:$0xff]
    %v2000 = vld [vmem:[#allocation14 + $0x600] sm:$0xff]
    %v2001 = vld [vmem:[#allocation14 + $0x608] sm:$0xff]
    %v2002 = vld [vmem:[#allocation14 + $0x610] sm:$0xff]
    %v2003 = vld [vmem:[#allocation14 + $0x618] sm:$0xff]
    %v2004 = vld [vmem:[#allocation14 + $0x620] sm:$0xff]
    %v2005 = vld [vmem:[#allocation14 + $0x628] sm:$0xff]
    %v2006 = vld [vmem:[#allocation14 + $0x630] sm:$0xff]
    %v2007 = vld [vmem:[#allocation14 + $0x638] sm:$0xff]
    %v2008 = vld [vmem:[#allocation14 + $0x640] sm:$0xff]
    %v2009 = vld [vmem:[#allocation14 + $0x648] sm:$0xff]
    %v2010 = vld [vmem:[#allocation14 + $0x650] sm:$0xff]
    %v2011 = vld [vmem:[#allocation14 + $0x658] sm:$0xff]
    %v2012 = vld [vmem:[#allocation14 + $0x660] sm:$0xff]
    %v2013 = vld [vmem:[#allocation14 + $0x668] sm:$0xff]
    %v2014 = vld [vmem:[#allocation14 + $0x670] sm:$0xff]
    %v2015 = vld [vmem:[#allocation14 + $0x678] sm:$0xff]
    %v2016 = vld [vmem:[#allocation14 + $0x680] sm:$0xff]
    %v2017 = vld [vmem:[#allocation14 + $0x688] sm:$0xff]
    %v2018 = vld [vmem:[#allocation14 + $0x690] sm:$0xff]
    %v2019 = vld [vmem:[#allocation14 + $0x698] sm:$0xff]
    %v2020 = vld [vmem:[#allocation14 + $0x6a0] sm:$0xff]
    %v2021 = vld [vmem:[#allocation14 + $0x6a8] sm:$0xff]
    %v2022 = vld [vmem:[#allocation14 + $0x6b0] sm:$0xff]
    %v2023 = vld [vmem:[#allocation14 + $0x6b8] sm:$0xff]
    %v2024 = vld [vmem:[#allocation14 + $0x6c0] sm:$0xff]
    %v2025 = vld [vmem:[#allocation14 + $0x6c8] sm:$0xff]
    %v2026 = vld [vmem:[#allocation14 + $0x6d0] sm:$0xff]
    %v2027 = vld [vmem:[#allocation14 + $0x6d8] sm:$0xff]
    %v2028 = vld [vmem:[#allocation14 + $0x6e0] sm:$0xff]
    %v2029 = vld [vmem:[#allocation14 + $0x6e8] sm:$0xff]
    %v2030 = vld [vmem:[#allocation14 + $0x6f0] sm:$0xff]
    %v2031 = vld [vmem:[#allocation14 + $0x6f8] sm:$0xff]
    %v2032 = vld [vmem:[#allocation14 + $0x700] sm:$0xff]
    %v2033 = vld [vmem:[#allocation14 + $0x708] sm:$0xff]
    %v2034 = vld [vmem:[#allocation14 + $0x710] sm:$0xff]
    %v2035 = vld [vmem:[#allocation14 + $0x718] sm:$0xff]
    %v2036 = vld [vmem:[#allocation14 + $0x720] sm:$0xff]
    %v2037 = vld [vmem:[#allocation14 + $0x728] sm:$0xff]
    %v2038 = vld [vmem:[#allocation14 + $0x730] sm:$0xff]
    %v2039 = vld [vmem:[#allocation14 + $0x738] sm:$0xff]
    %v2040 = vld [vmem:[#allocation14 + $0x740] sm:$0xff]
    %v2041 = vld [vmem:[#allocation14 + $0x748] sm:$0xff]
    %v2042 = vld [vmem:[#allocation14 + $0x750] sm:$0xff]
    %v2043 = vld [vmem:[#allocation14 + $0x758] sm:$0xff]
    %v2044 = vld [vmem:[#allocation14 + $0x760] sm:$0xff]
    %v2045 = vld [vmem:[#allocation14 + $0x768] sm:$0xff]
    %v2046 = vld [vmem:[#allocation14 + $0x770] sm:$0xff]
    %v2047 = vld [vmem:[#allocation14 + $0x778] sm:$0xff]
    %v2048 = vld [vmem:[#allocation14 + $0x780] sm:$0xff]
    %v2049 = vld [vmem:[#allocation14 + $0x788] sm:$0xff]
    %v2050 = vld [vmem:[#allocation14 + $0x790] sm:$0xff]
    %v2051 = vld [vmem:[#allocation14 + $0x798] sm:$0xff]
    %v2052 = vld [vmem:[#allocation14 + $0x7a0] sm:$0xff]
    %v2053 = vld [vmem:[#allocation14 + $0x7a8] sm:$0xff]
    %v2054 = vld [vmem:[#allocation14 + $0x7b0] sm:$0xff]
    %v2055 = vld [vmem:[#allocation14 + $0x7b8] sm:$0xff]
    %v2056 = vld [vmem:[#allocation14 + $0x7c0] sm:$0xff]
    %v2057 = vld [vmem:[#allocation14 + $0x7c8] sm:$0xff]
    %v2058 = vld [vmem:[#allocation14 + $0x7d0] sm:$0xff]
    %v2059 = vld [vmem:[#allocation14 + $0x7d8] sm:$0xff]
    %v2060 = vld [vmem:[#allocation14 + $0x7e0] sm:$0xff]
    %v2061 = vld [vmem:[#allocation14 + $0x7e8] sm:$0xff]
    %v2062 = vld [vmem:[#allocation14 + $0x7f0] sm:$0xff]
    %v2063 = vld [vmem:[#allocation14 + $0x7f8] sm:$0xff]
    %v2064 = vld [vmem:[%s10] sm:$0xff]
    %v2066 = vlaneseq
    %v2067 = vshrl.u32 %v2066, 7
    %v2068 = vsub.s32 0, %v2067
    %v2069 = vrot.slane %v2064, %v2068
    %v2070 = vlaneseq
    %v2071 = vshrl.u32 %v2070, 7
    %v2072 = vsub.s32 1, %v2071
    %v2073 = vrot.slane %v2064, %v2072
    %v2074 = vlaneseq
    %v2075 = vshrl.u32 %v2074, 7
    %v2076 = vsub.s32 2, %v2075
    %v2077 = vrot.slane %v2064, %v2076
    %v2078 = vlaneseq
    %v2079 = vshrl.u32 %v2078, 7
    %v2080 = vsub.s32 3, %v2079
    %v2081 = vrot.slane %v2064, %v2080
    %v2082 = vlaneseq
    %v2083 = vshrl.u32 %v2082, 7
    %v2084 = vsub.s32 4, %v2083
    %v2085 = vrot.slane %v2064, %v2084
    %v2086 = vlaneseq
    %v2087 = vshrl.u32 %v2086, 7
    %v2088 = vsub.s32 5, %v2087
    %v2089 = vrot.slane %v2064, %v2088
    %v2090 = vlaneseq
    %v2091 = vshrl.u32 %v2090, 7
    %v2092 = vsub.s32 6, %v2091
    %v2093 = vrot.slane %v2064, %v2092
    %v2094 = vlaneseq
    %v2095 = vshrl.u32 %v2094, 7
    %v2096 = vsub.s32 7, %v2095
    %v2097 = vrot.slane %v2064, %v2096
    %v2362 = vunpack.c.l.b16 %v1808
    %v2363 = vunpack.c.h.b16 %v1808
    %v2364 = vunpack.c.l.b16 %v1809
    %v2365 = vunpack.c.h.b16 %v1809
    %v2366 = vunpack.c.l.b16 %v1810
    %v2367 = vunpack.c.h.b16 %v1810
    %v2368 = vunpack.c.l.b16 %v1811
    %v2369 = vunpack.c.h.b16 %v1811
    %v2370 = vunpack.c.l.b16 %v1812
    %v2371 = vunpack.c.h.b16 %v1812
    %v2372 = vunpack.c.l.b16 %v1813
    %v2373 = vunpack.c.h.b16 %v1813
    %v2374 = vunpack.c.l.b16 %v1814
    %v2375 = vunpack.c.h.b16 %v1814
    %v2376 = vunpack.c.l.b16 %v1815
    %v2377 = vunpack.c.h.b16 %v1815
    %v2378 = vunpack.c.l.b16 %v1816
    %v2379 = vunpack.c.h.b16 %v1816
    %v2380 = vunpack.c.l.b16 %v1817
    %v2381 = vunpack.c.h.b16 %v1817
    %v2382 = vunpack.c.l.b16 %v1818
    %v2383 = vunpack.c.h.b16 %v1818
    %v2384 = vunpack.c.l.b16 %v1819
    %v2385 = vunpack.c.h.b16 %v1819
    %v2386 = vunpack.c.l.b16 %v1820
    %v2387 = vunpack.c.h.b16 %v1820
    %v2388 = vunpack.c.l.b16 %v1821
    %v2389 = vunpack.c.h.b16 %v1821
    %v2390 = vunpack.c.l.b16 %v1822
    %v2391 = vunpack.c.h.b16 %v1822
    %v2392 = vunpack.c.l.b16 %v1823
    %v2393 = vunpack.c.h.b16 %v1823
    %v2394 = vunpack.c.l.b16 %v1824
    %v2395 = vunpack.c.h.b16 %v1824
    %v2396 = vunpack.c.l.b16 %v1825
    %v2397 = vunpack.c.h.b16 %v1825
    %v2398 = vunpack.c.l.b16 %v1826
    %v2399 = vunpack.c.h.b16 %v1826
    %v2400 = vunpack.c.l.b16 %v1827
    %v2401 = vunpack.c.h.b16 %v1827
    %v2402 = vunpack.c.l.b16 %v1828
    %v2403 = vunpack.c.h.b16 %v1828
    %v2404 = vunpack.c.l.b16 %v1829
    %v2405 = vunpack.c.h.b16 %v1829
    %v2406 = vunpack.c.l.b16 %v1830
    %v2407 = vunpack.c.h.b16 %v1830
    %v2408 = vunpack.c.l.b16 %v1831
    %v2409 = vunpack.c.h.b16 %v1831
    %v2410 = vunpack.c.l.b16 %v1832
    %v2411 = vunpack.c.h.b16 %v1832
    %v2412 = vunpack.c.l.b16 %v1833
    %v2413 = vunpack.c.h.b16 %v1833
    %v2414 = vunpack.c.l.b16 %v1834
    %v2415 = vunpack.c.h.b16 %v1834
    %v2416 = vunpack.c.l.b16 %v1835
    %v2417 = vunpack.c.h.b16 %v1835
    %v2418 = vunpack.c.l.b16 %v1836
    %v2419 = vunpack.c.h.b16 %v1836
    %v2420 = vunpack.c.l.b16 %v1837
    %v2421 = vunpack.c.h.b16 %v1837
    %v2422 = vunpack.c.l.b16 %v1838
    %v2423 = vunpack.c.h.b16 %v1838
    %v2424 = vunpack.c.l.b16 %v1839
    %v2425 = vunpack.c.h.b16 %v1839
    %v2426 = vunpack.c.l.b16 %v1840
    %v2427 = vunpack.c.h.b16 %v1840
    %v2428 = vunpack.c.l.b16 %v1841
    %v2429 = vunpack.c.h.b16 %v1841
    %v2430 = vunpack.c.l.b16 %v1842
    %v2431 = vunpack.c.h.b16 %v1842
    %v2432 = vunpack.c.l.b16 %v1843
    %v2433 = vunpack.c.h.b16 %v1843
    %v2434 = vunpack.c.l.b16 %v1844
    %v2435 = vunpack.c.h.b16 %v1844
    %v2436 = vunpack.c.l.b16 %v1845
    %v2437 = vunpack.c.h.b16 %v1845
    %v2438 = vunpack.c.l.b16 %v1846
    %v2439 = vunpack.c.h.b16 %v1846
    %v2440 = vunpack.c.l.b16 %v1847
    %v2441 = vunpack.c.h.b16 %v1847
    %v2442 = vunpack.c.l.b16 %v1848
    %v2443 = vunpack.c.h.b16 %v1848
    %v2444 = vunpack.c.l.b16 %v1849
    %v2445 = vunpack.c.h.b16 %v1849
    %v2446 = vunpack.c.l.b16 %v1850
    %v2447 = vunpack.c.h.b16 %v1850
    %v2448 = vunpack.c.l.b16 %v1851
    %v2449 = vunpack.c.h.b16 %v1851
    %v2450 = vunpack.c.l.b16 %v1852
    %v2451 = vunpack.c.h.b16 %v1852
    %v2452 = vunpack.c.l.b16 %v1853
    %v2453 = vunpack.c.h.b16 %v1853
    %v2454 = vunpack.c.l.b16 %v1854
    %v2455 = vunpack.c.h.b16 %v1854
    %v2456 = vunpack.c.l.b16 %v1855
    %v2457 = vunpack.c.h.b16 %v1855
    %v2458 = vunpack.c.l.b16 %v1856
    %v2459 = vunpack.c.h.b16 %v1856
    %v2460 = vunpack.c.l.b16 %v1857
    %v2461 = vunpack.c.h.b16 %v1857
    %v2462 = vunpack.c.l.b16 %v1858
    %v2463 = vunpack.c.h.b16 %v1858
    %v2464 = vunpack.c.l.b16 %v1859
    %v2465 = vunpack.c.h.b16 %v1859
    %v2466 = vunpack.c.l.b16 %v1860
    %v2467 = vunpack.c.h.b16 %v1860
    %v2468 = vunpack.c.l.b16 %v1861
    %v2469 = vunpack.c.h.b16 %v1861
    %v2470 = vunpack.c.l.b16 %v1862
    %v2471 = vunpack.c.h.b16 %v1862
    %v2472 = vunpack.c.l.b16 %v1863
    %v2473 = vunpack.c.h.b16 %v1863
    %v2474 = vunpack.c.l.b16 %v1864
    %v2475 = vunpack.c.h.b16 %v1864
    %v2476 = vunpack.c.l.b16 %v1865
    %v2477 = vunpack.c.h.b16 %v1865
    %v2478 = vunpack.c.l.b16 %v1866
    %v2479 = vunpack.c.h.b16 %v1866
    %v2480 = vunpack.c.l.b16 %v1867
    %v2481 = vunpack.c.h.b16 %v1867
    %v2482 = vunpack.c.l.b16 %v1868
    %v2483 = vunpack.c.h.b16 %v1868
    %v2484 = vunpack.c.l.b16 %v1869
    %v2485 = vunpack.c.h.b16 %v1869
    %v2486 = vunpack.c.l.b16 %v1870
    %v2487 = vunpack.c.h.b16 %v1870
    %v2488 = vunpack.c.l.b16 %v1871
    %v2489 = vunpack.c.h.b16 %v1871
    %v2490 = vunpack.c.l.b16 %v1872
    %v2491 = vunpack.c.h.b16 %v1872
    %v2492 = vunpack.c.l.b16 %v1873
    %v2493 = vunpack.c.h.b16 %v1873
    %v2494 = vunpack.c.l.b16 %v1874
    %v2495 = vunpack.c.h.b16 %v1874
    %v2496 = vunpack.c.l.b16 %v1875
    %v2497 = vunpack.c.h.b16 %v1875
    %v2498 = vunpack.c.l.b16 %v1876
    %v2499 = vunpack.c.h.b16 %v1876
    %v2500 = vunpack.c.l.b16 %v1877
    %v2501 = vunpack.c.h.b16 %v1877
    %v2502 = vunpack.c.l.b16 %v1878
    %v2503 = vunpack.c.h.b16 %v1878
    %v2504 = vunpack.c.l.b16 %v1879
    %v2505 = vunpack.c.h.b16 %v1879
    %v2506 = vunpack.c.l.b16 %v1880
    %v2507 = vunpack.c.h.b16 %v1880
    %v2508 = vunpack.c.l.b16 %v1881
    %v2509 = vunpack.c.h.b16 %v1881
    %v2510 = vunpack.c.l.b16 %v1882
    %v2511 = vunpack.c.h.b16 %v1882
    %v2512 = vunpack.c.l.b16 %v1883
    %v2513 = vunpack.c.h.b16 %v1883
    %v2514 = vunpack.c.l.b16 %v1884
    %v2515 = vunpack.c.h.b16 %v1884
    %v2516 = vunpack.c.l.b16 %v1885
    %v2517 = vunpack.c.h.b16 %v1885
    %v2518 = vunpack.c.l.b16 %v1886
    %v2519 = vunpack.c.h.b16 %v1886
    %v2520 = vunpack.c.l.b16 %v1887
    %v2521 = vunpack.c.h.b16 %v1887
    %v2522 = vunpack.c.l.b16 %v1888
    %v2523 = vunpack.c.h.b16 %v1888
    %v2524 = vunpack.c.l.b16 %v1889
    %v2525 = vunpack.c.h.b16 %v1889
    %v2526 = vunpack.c.l.b16 %v1890
    %v2527 = vunpack.c.h.b16 %v1890
    %v2528 = vunpack.c.l.b16 %v1891
    %v2529 = vunpack.c.h.b16 %v1891
    %v2530 = vunpack.c.l.b16 %v1892
    %v2531 = vunpack.c.h.b16 %v1892
    %v2532 = vunpack.c.l.b16 %v1893
    %v2533 = vunpack.c.h.b16 %v1893
    %v2534 = vunpack.c.l.b16 %v1894
    %v2535 = vunpack.c.h.b16 %v1894
    %v2536 = vunpack.c.l.b16 %v1895
    %v2537 = vunpack.c.h.b16 %v1895
    %v2538 = vunpack.c.l.b16 %v1896
    %v2539 = vunpack.c.h.b16 %v1896
    %v2540 = vunpack.c.l.b16 %v1897
    %v2541 = vunpack.c.h.b16 %v1897
    %v2542 = vunpack.c.l.b16 %v1898
    %v2543 = vunpack.c.h.b16 %v1898
    %v2544 = vunpack.c.l.b16 %v1899
    %v2545 = vunpack.c.h.b16 %v1899
    %v2546 = vunpack.c.l.b16 %v1900
    %v2547 = vunpack.c.h.b16 %v1900
    %v2548 = vunpack.c.l.b16 %v1901
    %v2549 = vunpack.c.h.b16 %v1901
    %v2550 = vunpack.c.l.b16 %v1902
    %v2551 = vunpack.c.h.b16 %v1902
    %v2552 = vunpack.c.l.b16 %v1903
    %v2553 = vunpack.c.h.b16 %v1903
    %v2554 = vunpack.c.l.b16 %v1904
    %v2555 = vunpack.c.h.b16 %v1904
    %v2556 = vunpack.c.l.b16 %v1905
    %v2557 = vunpack.c.h.b16 %v1905
    %v2558 = vunpack.c.l.b16 %v1906
    %v2559 = vunpack.c.h.b16 %v1906
    %v2560 = vunpack.c.l.b16 %v1907
    %v2561 = vunpack.c.h.b16 %v1907
    %v2562 = vunpack.c.l.b16 %v1908
    %v2563 = vunpack.c.h.b16 %v1908
    %v2564 = vunpack.c.l.b16 %v1909
    %v2565 = vunpack.c.h.b16 %v1909
    %v2566 = vunpack.c.l.b16 %v1910
    %v2567 = vunpack.c.h.b16 %v1910
    %v2568 = vunpack.c.l.b16 %v1911
    %v2569 = vunpack.c.h.b16 %v1911
    %v2570 = vunpack.c.l.b16 %v1912
    %v2571 = vunpack.c.h.b16 %v1912
    %v2572 = vunpack.c.l.b16 %v1913
    %v2573 = vunpack.c.h.b16 %v1913
    %v2574 = vunpack.c.l.b16 %v1914
    %v2575 = vunpack.c.h.b16 %v1914
    %v2576 = vunpack.c.l.b16 %v1915
    %v2577 = vunpack.c.h.b16 %v1915
    %v2578 = vunpack.c.l.b16 %v1916
    %v2579 = vunpack.c.h.b16 %v1916
    %v2580 = vunpack.c.l.b16 %v1917
    %v2581 = vunpack.c.h.b16 %v1917
    %v2582 = vunpack.c.l.b16 %v1918
    %v2583 = vunpack.c.h.b16 %v1918
    %v2584 = vunpack.c.l.b16 %v1919
    %v2585 = vunpack.c.h.b16 %v1919
    %v2586 = vunpack.c.l.b16 %v1920
    %v2587 = vunpack.c.h.b16 %v1920
    %v2588 = vunpack.c.l.b16 %v1921
    %v2589 = vunpack.c.h.b16 %v1921
    %v2590 = vunpack.c.l.b16 %v1922
    %v2591 = vunpack.c.h.b16 %v1922
    %v2592 = vunpack.c.l.b16 %v1923
    %v2593 = vunpack.c.h.b16 %v1923
    %v2594 = vunpack.c.l.b16 %v1924
    %v2595 = vunpack.c.h.b16 %v1924
    %v2596 = vunpack.c.l.b16 %v1925
    %v2597 = vunpack.c.h.b16 %v1925
    %v2598 = vunpack.c.l.b16 %v1926
    %v2599 = vunpack.c.h.b16 %v1926
    %v2600 = vunpack.c.l.b16 %v1927
    %v2601 = vunpack.c.h.b16 %v1927
    %v2602 = vunpack.c.l.b16 %v1928
    %v2603 = vunpack.c.h.b16 %v1928
    %v2604 = vunpack.c.l.b16 %v1929
    %v2605 = vunpack.c.h.b16 %v1929
    %v2606 = vunpack.c.l.b16 %v1930
    %v2607 = vunpack.c.h.b16 %v1930
    %v2608 = vunpack.c.l.b16 %v1931
    %v2609 = vunpack.c.h.b16 %v1931
    %v2610 = vunpack.c.l.b16 %v1932
    %v2611 = vunpack.c.h.b16 %v1932
    %v2612 = vunpack.c.l.b16 %v1933
    %v2613 = vunpack.c.h.b16 %v1933
    %v2614 = vunpack.c.l.b16 %v1934
    %v2615 = vunpack.c.h.b16 %v1934
    %v2616 = vunpack.c.l.b16 %v1935
    %v2617 = vunpack.c.h.b16 %v1935
    %v2618 = vunpack.c.l.b16 %v1936
    %v2619 = vunpack.c.h.b16 %v1936
    %v2620 = vunpack.c.l.b16 %v1937
    %v2621 = vunpack.c.h.b16 %v1937
    %v2622 = vunpack.c.l.b16 %v1938
    %v2623 = vunpack.c.h.b16 %v1938
    %v2624 = vunpack.c.l.b16 %v1939
    %v2625 = vunpack.c.h.b16 %v1939
    %v2626 = vunpack.c.l.b16 %v1940
    %v2627 = vunpack.c.h.b16 %v1940
    %v2628 = vunpack.c.l.b16 %v1941
    %v2629 = vunpack.c.h.b16 %v1941
    %v2630 = vunpack.c.l.b16 %v1942
    %v2631 = vunpack.c.h.b16 %v1942
    %v2632 = vunpack.c.l.b16 %v1943
    %v2633 = vunpack.c.h.b16 %v1943
    %v2634 = vunpack.c.l.b16 %v1944
    %v2635 = vunpack.c.h.b16 %v1944
    %v2636 = vunpack.c.l.b16 %v1945
    %v2637 = vunpack.c.h.b16 %v1945
    %v2638 = vunpack.c.l.b16 %v1946
    %v2639 = vunpack.c.h.b16 %v1946
    %v2640 = vunpack.c.l.b16 %v1947
    %v2641 = vunpack.c.h.b16 %v1947
    %v2642 = vunpack.c.l.b16 %v1948
    %v2643 = vunpack.c.h.b16 %v1948
    %v2644 = vunpack.c.l.b16 %v1949
    %v2645 = vunpack.c.h.b16 %v1949
    %v2646 = vunpack.c.l.b16 %v1950
    %v2647 = vunpack.c.h.b16 %v1950
    %v2648 = vunpack.c.l.b16 %v1951
    %v2649 = vunpack.c.h.b16 %v1951
    %v2650 = vunpack.c.l.b16 %v1952
    %v2651 = vunpack.c.h.b16 %v1952
    %v2652 = vunpack.c.l.b16 %v1953
    %v2653 = vunpack.c.h.b16 %v1953
    %v2654 = vunpack.c.l.b16 %v1954
    %v2655 = vunpack.c.h.b16 %v1954
    %v2656 = vunpack.c.l.b16 %v1955
    %v2657 = vunpack.c.h.b16 %v1955
    %v2658 = vunpack.c.l.b16 %v1956
    %v2659 = vunpack.c.h.b16 %v1956
    %v2660 = vunpack.c.l.b16 %v1957
    %v2661 = vunpack.c.h.b16 %v1957
    %v2662 = vunpack.c.l.b16 %v1958
    %v2663 = vunpack.c.h.b16 %v1958
    %v2664 = vunpack.c.l.b16 %v1959
    %v2665 = vunpack.c.h.b16 %v1959
    %v2666 = vunpack.c.l.b16 %v1960
    %v2667 = vunpack.c.h.b16 %v1960
    %v2668 = vunpack.c.l.b16 %v1961
    %v2669 = vunpack.c.h.b16 %v1961
    %v2670 = vunpack.c.l.b16 %v1962
    %v2671 = vunpack.c.h.b16 %v1962
    %v2672 = vunpack.c.l.b16 %v1963
    %v2673 = vunpack.c.h.b16 %v1963
    %v2674 = vunpack.c.l.b16 %v1964
    %v2675 = vunpack.c.h.b16 %v1964
    %v2676 = vunpack.c.l.b16 %v1965
    %v2677 = vunpack.c.h.b16 %v1965
    %v2678 = vunpack.c.l.b16 %v1966
    %v2679 = vunpack.c.h.b16 %v1966
    %v2680 = vunpack.c.l.b16 %v1967
    %v2681 = vunpack.c.h.b16 %v1967
    %v2682 = vunpack.c.l.b16 %v1968
    %v2683 = vunpack.c.h.b16 %v1968
    %v2684 = vunpack.c.l.b16 %v1969
    %v2685 = vunpack.c.h.b16 %v1969
    %v2686 = vunpack.c.l.b16 %v1970
    %v2687 = vunpack.c.h.b16 %v1970
    %v2688 = vunpack.c.l.b16 %v1971
    %v2689 = vunpack.c.h.b16 %v1971
    %v2690 = vunpack.c.l.b16 %v1972
    %v2691 = vunpack.c.h.b16 %v1972
    %v2692 = vunpack.c.l.b16 %v1973
    %v2693 = vunpack.c.h.b16 %v1973
    %v2694 = vunpack.c.l.b16 %v1974
    %v2695 = vunpack.c.h.b16 %v1974
    %v2696 = vunpack.c.l.b16 %v1975
    %v2697 = vunpack.c.h.b16 %v1975
    %v2698 = vunpack.c.l.b16 %v1976
    %v2699 = vunpack.c.h.b16 %v1976
    %v2700 = vunpack.c.l.b16 %v1977
    %v2701 = vunpack.c.h.b16 %v1977
    %v2702 = vunpack.c.l.b16 %v1978
    %v2703 = vunpack.c.h.b16 %v1978
    %v2704 = vunpack.c.l.b16 %v1979
    %v2705 = vunpack.c.h.b16 %v1979
    %v2706 = vunpack.c.l.b16 %v1980
    %v2707 = vunpack.c.h.b16 %v1980
    %v2708 = vunpack.c.l.b16 %v1981
    %v2709 = vunpack.c.h.b16 %v1981
    %v2710 = vunpack.c.l.b16 %v1982
    %v2711 = vunpack.c.h.b16 %v1982
    %v2712 = vunpack.c.l.b16 %v1983
    %v2713 = vunpack.c.h.b16 %v1983
    %v2714 = vunpack.c.l.b16 %v1984
    %v2715 = vunpack.c.h.b16 %v1984
    %v2716 = vunpack.c.l.b16 %v1985
    %v2717 = vunpack.c.h.b16 %v1985
    %v2718 = vunpack.c.l.b16 %v1986
    %v2719 = vunpack.c.h.b16 %v1986
    %v2720 = vunpack.c.l.b16 %v1987
    %v2721 = vunpack.c.h.b16 %v1987
    %v2722 = vunpack.c.l.b16 %v1988
    %v2723 = vunpack.c.h.b16 %v1988
    %v2724 = vunpack.c.l.b16 %v1989
    %v2725 = vunpack.c.h.b16 %v1989
    %v2726 = vunpack.c.l.b16 %v1990
    %v2727 = vunpack.c.h.b16 %v1990
    %v2728 = vunpack.c.l.b16 %v1991
    %v2729 = vunpack.c.h.b16 %v1991
    %v2730 = vunpack.c.l.b16 %v1992
    %v2731 = vunpack.c.h.b16 %v1992
    %v2732 = vunpack.c.l.b16 %v1993
    %v2733 = vunpack.c.h.b16 %v1993
    %v2734 = vunpack.c.l.b16 %v1994
    %v2735 = vunpack.c.h.b16 %v1994
    %v2736 = vunpack.c.l.b16 %v1995
    %v2737 = vunpack.c.h.b16 %v1995
    %v2738 = vunpack.c.l.b16 %v1996
    %v2739 = vunpack.c.h.b16 %v1996
    %v2740 = vunpack.c.l.b16 %v1997
    %v2741 = vunpack.c.h.b16 %v1997
    %v2742 = vunpack.c.l.b16 %v1998
    %v2743 = vunpack.c.h.b16 %v1998
    %v2744 = vunpack.c.l.b16 %v1999
    %v2745 = vunpack.c.h.b16 %v1999
    %v2746 = vunpack.c.l.b16 %v2000
    %v2747 = vunpack.c.h.b16 %v2000
    %v2748 = vunpack.c.l.b16 %v2001
    %v2749 = vunpack.c.h.b16 %v2001
    %v2750 = vunpack.c.l.b16 %v2002
    %v2751 = vunpack.c.h.b16 %v2002
    %v2752 = vunpack.c.l.b16 %v2003
    %v2753 = vunpack.c.h.b16 %v2003
    %v2754 = vunpack.c.l.b16 %v2004
    %v2755 = vunpack.c.h.b16 %v2004
    %v2756 = vunpack.c.l.b16 %v2005
    %v2757 = vunpack.c.h.b16 %v2005
    %v2758 = vunpack.c.l.b16 %v2006
    %v2759 = vunpack.c.h.b16 %v2006
    %v2760 = vunpack.c.l.b16 %v2007
    %v2761 = vunpack.c.h.b16 %v2007
    %v2762 = vunpack.c.l.b16 %v2008
    %v2763 = vunpack.c.h.b16 %v2008
    %v2764 = vunpack.c.l.b16 %v2009
    %v2765 = vunpack.c.h.b16 %v2009
    %v2766 = vunpack.c.l.b16 %v2010
    %v2767 = vunpack.c.h.b16 %v2010
    %v2768 = vunpack.c.l.b16 %v2011
    %v2769 = vunpack.c.h.b16 %v2011
    %v2770 = vunpack.c.l.b16 %v2012
    %v2771 = vunpack.c.h.b16 %v2012
    %v2772 = vunpack.c.l.b16 %v2013
    %v2773 = vunpack.c.h.b16 %v2013
    %v2774 = vunpack.c.l.b16 %v2014
    %v2775 = vunpack.c.h.b16 %v2014
    %v2776 = vunpack.c.l.b16 %v2015
    %v2777 = vunpack.c.h.b16 %v2015
    %v2778 = vunpack.c.l.b16 %v2016
    %v2779 = vunpack.c.h.b16 %v2016
    %v2780 = vunpack.c.l.b16 %v2017
    %v2781 = vunpack.c.h.b16 %v2017
    %v2782 = vunpack.c.l.b16 %v2018
    %v2783 = vunpack.c.h.b16 %v2018
    %v2784 = vunpack.c.l.b16 %v2019
    %v2785 = vunpack.c.h.b16 %v2019
    %v2786 = vunpack.c.l.b16 %v2020
    %v2787 = vunpack.c.h.b16 %v2020
    %v2788 = vunpack.c.l.b16 %v2021
    %v2789 = vunpack.c.h.b16 %v2021
    %v2790 = vunpack.c.l.b16 %v2022
    %v2791 = vunpack.c.h.b16 %v2022
    %v2792 = vunpack.c.l.b16 %v2023
    %v2793 = vunpack.c.h.b16 %v2023
    %v2794 = vunpack.c.l.b16 %v2024
    %v2795 = vunpack.c.h.b16 %v2024
    %v2796 = vunpack.c.l.b16 %v2025
    %v2797 = vunpack.c.h.b16 %v2025
    %v2798 = vunpack.c.l.b16 %v2026
    %v2799 = vunpack.c.h.b16 %v2026
    %v2800 = vunpack.c.l.b16 %v2027
    %v2801 = vunpack.c.h.b16 %v2027
    %v2802 = vunpack.c.l.b16 %v2028
    %v2803 = vunpack.c.h.b16 %v2028
    %v2804 = vunpack.c.l.b16 %v2029
    %v2805 = vunpack.c.h.b16 %v2029
    %v2806 = vunpack.c.l.b16 %v2030
    %v2807 = vunpack.c.h.b16 %v2030
    %v2808 = vunpack.c.l.b16 %v2031
    %v2809 = vunpack.c.h.b16 %v2031
    %v2810 = vunpack.c.l.b16 %v2032
    %v2811 = vunpack.c.h.b16 %v2032
    %v2812 = vunpack.c.l.b16 %v2033
    %v2813 = vunpack.c.h.b16 %v2033
    %v2814 = vunpack.c.l.b16 %v2034
    %v2815 = vunpack.c.h.b16 %v2034
    %v2816 = vunpack.c.l.b16 %v2035
    %v2817 = vunpack.c.h.b16 %v2035
    %v2818 = vunpack.c.l.b16 %v2036
    %v2819 = vunpack.c.h.b16 %v2036
    %v2820 = vunpack.c.l.b16 %v2037
    %v2821 = vunpack.c.h.b16 %v2037
    %v2822 = vunpack.c.l.b16 %v2038
    %v2823 = vunpack.c.h.b16 %v2038
    %v2824 = vunpack.c.l.b16 %v2039
    %v2825 = vunpack.c.h.b16 %v2039
    %v2826 = vunpack.c.l.b16 %v2040
    %v2827 = vunpack.c.h.b16 %v2040
    %v2828 = vunpack.c.l.b16 %v2041
    %v2829 = vunpack.c.h.b16 %v2041
    %v2830 = vunpack.c.l.b16 %v2042
    %v2831 = vunpack.c.h.b16 %v2042
    %v2832 = vunpack.c.l.b16 %v2043
    %v2833 = vunpack.c.h.b16 %v2043
    %v2834 = vunpack.c.l.b16 %v2044
    %v2835 = vunpack.c.h.b16 %v2044
    %v2836 = vunpack.c.l.b16 %v2045
    %v2837 = vunpack.c.h.b16 %v2045
    %v2838 = vunpack.c.l.b16 %v2046
    %v2839 = vunpack.c.h.b16 %v2046
    %v2840 = vunpack.c.l.b16 %v2047
    %v2841 = vunpack.c.h.b16 %v2047
    %v2842 = vunpack.c.l.b16 %v2048
    %v2843 = vunpack.c.h.b16 %v2048
    %v2844 = vunpack.c.l.b16 %v2049
    %v2845 = vunpack.c.h.b16 %v2049
    %v2846 = vunpack.c.l.b16 %v2050
    %v2847 = vunpack.c.h.b16 %v2050
    %v2848 = vunpack.c.l.b16 %v2051
    %v2849 = vunpack.c.h.b16 %v2051
    %v2850 = vunpack.c.l.b16 %v2052
    %v2851 = vunpack.c.h.b16 %v2052
    %v2852 = vunpack.c.l.b16 %v2053
    %v2853 = vunpack.c.h.b16 %v2053
    %v2854 = vunpack.c.l.b16 %v2054
    %v2855 = vunpack.c.h.b16 %v2054
    %v2856 = vunpack.c.l.b16 %v2055
    %v2857 = vunpack.c.h.b16 %v2055
    %v2858 = vunpack.c.l.b16 %v2056
    %v2859 = vunpack.c.h.b16 %v2056
    %v2860 = vunpack.c.l.b16 %v2057
    %v2861 = vunpack.c.h.b16 %v2057
    %v2862 = vunpack.c.l.b16 %v2058
    %v2863 = vunpack.c.h.b16 %v2058
    %v2864 = vunpack.c.l.b16 %v2059
    %v2865 = vunpack.c.h.b16 %v2059
    %v2866 = vunpack.c.l.b16 %v2060
    %v2867 = vunpack.c.h.b16 %v2060
    %v2868 = vunpack.c.l.b16 %v2061
    %v2869 = vunpack.c.h.b16 %v2061
    %v2870 = vunpack.c.l.b16 %v2062
    %v2871 = vunpack.c.h.b16 %v2062
    %v2872 = vunpack.c.l.b16 %v2063
    %v2873 = vunpack.c.h.b16 %v2063
    %v2874 = vpack.c.b16 %v2370, %v2362
    %v2875 = vpack.c.b16 %v2371, %v2363
    %v2876 = vpack.c.b16 %v2372, %v2364
    %v2877 = vpack.c.b16 %v2373, %v2365
    %v2878 = vpack.c.b16 %v2374, %v2366
    %v2879 = vpack.c.b16 %v2375, %v2367
    %v2880 = vpack.c.b16 %v2376, %v2368
    %v2881 = vpack.c.b16 %v2377, %v2369
    %v2882 = vpack.c.b16 %v2386, %v2378
    %v2883 = vpack.c.b16 %v2387, %v2379
    %v2884 = vpack.c.b16 %v2388, %v2380
    %v2885 = vpack.c.b16 %v2389, %v2381
    %v2886 = vpack.c.b16 %v2390, %v2382
    %v2887 = vpack.c.b16 %v2391, %v2383
    %v2888 = vpack.c.b16 %v2392, %v2384
    %v2889 = vpack.c.b16 %v2393, %v2385
    %v2890 = vpack.c.b16 %v2402, %v2394
    %v2891 = vpack.c.b16 %v2403, %v2395
    %v2892 = vpack.c.b16 %v2404, %v2396
    %v2893 = vpack.c.b16 %v2405, %v2397
    %v2894 = vpack.c.b16 %v2406, %v2398
    %v2895 = vpack.c.b16 %v2407, %v2399
    %v2896 = vpack.c.b16 %v2408, %v2400
    %v2897 = vpack.c.b16 %v2409, %v2401
    %v2898 = vpack.c.b16 %v2418, %v2410
    %v2899 = vpack.c.b16 %v2419, %v2411
    %v2900 = vpack.c.b16 %v2420, %v2412
    %v2901 = vpack.c.b16 %v2421, %v2413
    %v2902 = vpack.c.b16 %v2422, %v2414
    %v2903 = vpack.c.b16 %v2423, %v2415
    %v2904 = vpack.c.b16 %v2424, %v2416
    %v2905 = vpack.c.b16 %v2425, %v2417
    %v2906 = vpack.c.b16 %v2434, %v2426
    %v2907 = vpack.c.b16 %v2435, %v2427
    %v2908 = vpack.c.b16 %v2436, %v2428
    %v2909 = vpack.c.b16 %v2437, %v2429
    %v2910 = vpack.c.b16 %v2438, %v2430
    %v2911 = vpack.c.b16 %v2439, %v2431
    %v2912 = vpack.c.b16 %v2440, %v2432
    %v2913 = vpack.c.b16 %v2441, %v2433
    %v2914 = vpack.c.b16 %v2450, %v2442
    %v2915 = vpack.c.b16 %v2451, %v2443
    %v2916 = vpack.c.b16 %v2452, %v2444
    %v2917 = vpack.c.b16 %v2453, %v2445
    %v2918 = vpack.c.b16 %v2454, %v2446
    %v2919 = vpack.c.b16 %v2455, %v2447
    %v2920 = vpack.c.b16 %v2456, %v2448
    %v2921 = vpack.c.b16 %v2457, %v2449
    %v2922 = vpack.c.b16 %v2466, %v2458
    %v2923 = vpack.c.b16 %v2467, %v2459
    %v2924 = vpack.c.b16 %v2468, %v2460
    %v2925 = vpack.c.b16 %v2469, %v2461
    %v2926 = vpack.c.b16 %v2470, %v2462
    %v2927 = vpack.c.b16 %v2471, %v2463
    %v2928 = vpack.c.b16 %v2472, %v2464
    %v2929 = vpack.c.b16 %v2473, %v2465
    %v2930 = vpack.c.b16 %v2482, %v2474
    %v2931 = vpack.c.b16 %v2483, %v2475
    %v2932 = vpack.c.b16 %v2484, %v2476
    %v2933 = vpack.c.b16 %v2485, %v2477
    %v2934 = vpack.c.b16 %v2486, %v2478
    %v2935 = vpack.c.b16 %v2487, %v2479
    %v2936 = vpack.c.b16 %v2488, %v2480
    %v2937 = vpack.c.b16 %v2489, %v2481
    %v2938 = vpack.c.b16 %v2498, %v2490
    %v2939 = vpack.c.b16 %v2499, %v2491
    %v2940 = vpack.c.b16 %v2500, %v2492
    %v2941 = vpack.c.b16 %v2501, %v2493
    %v2942 = vpack.c.b16 %v2502, %v2494
    %v2943 = vpack.c.b16 %v2503, %v2495
    %v2944 = vpack.c.b16 %v2504, %v2496
    %v2945 = vpack.c.b16 %v2505, %v2497
    %v2946 = vpack.c.b16 %v2514, %v2506
    %v2947 = vpack.c.b16 %v2515, %v2507
    %v2948 = vpack.c.b16 %v2516, %v2508
    %v2949 = vpack.c.b16 %v2517, %v2509
    %v2950 = vpack.c.b16 %v2518, %v2510
    %v2951 = vpack.c.b16 %v2519, %v2511
    %v2952 = vpack.c.b16 %v2520, %v2512
    %v2953 = vpack.c.b16 %v2521, %v2513
    %v2954 = vpack.c.b16 %v2530, %v2522
    %v2955 = vpack.c.b16 %v2531, %v2523
    %v2956 = vpack.c.b16 %v2532, %v2524
    %v2957 = vpack.c.b16 %v2533, %v2525
    %v2958 = vpack.c.b16 %v2534, %v2526
    %v2959 = vpack.c.b16 %v2535, %v2527
    %v2960 = vpack.c.b16 %v2536, %v2528
    %v2961 = vpack.c.b16 %v2537, %v2529
    %v2962 = vpack.c.b16 %v2546, %v2538
    %v2963 = vpack.c.b16 %v2547, %v2539
    %v2964 = vpack.c.b16 %v2548, %v2540
    %v2965 = vpack.c.b16 %v2549, %v2541
    %v2966 = vpack.c.b16 %v2550, %v2542
    %v2967 = vpack.c.b16 %v2551, %v2543
    %v2968 = vpack.c.b16 %v2552, %v2544
    %v2969 = vpack.c.b16 %v2553, %v2545
    %v2970 = vpack.c.b16 %v2562, %v2554
    %v2971 = vpack.c.b16 %v2563, %v2555
    %v2972 = vpack.c.b16 %v2564, %v2556
    %v2973 = vpack.c.b16 %v2565, %v2557
    %v2974 = vpack.c.b16 %v2566, %v2558
    %v2975 = vpack.c.b16 %v2567, %v2559
    %v2976 = vpack.c.b16 %v2568, %v2560
    %v2977 = vpack.c.b16 %v2569, %v2561
    %v2978 = vpack.c.b16 %v2578, %v2570
    %v2979 = vpack.c.b16 %v2579, %v2571
    %v2980 = vpack.c.b16 %v2580, %v2572
    %v2981 = vpack.c.b16 %v2581, %v2573
    %v2982 = vpack.c.b16 %v2582, %v2574
    %v2983 = vpack.c.b16 %v2583, %v2575
    %v2984 = vpack.c.b16 %v2584, %v2576
    %v2985 = vpack.c.b16 %v2585, %v2577
    %v2986 = vpack.c.b16 %v2594, %v2586
    %v2987 = vpack.c.b16 %v2595, %v2587
    %v2988 = vpack.c.b16 %v2596, %v2588
    %v2989 = vpack.c.b16 %v2597, %v2589
    %v2990 = vpack.c.b16 %v2598, %v2590
    %v2991 = vpack.c.b16 %v2599, %v2591
    %v2992 = vpack.c.b16 %v2600, %v2592
    %v2993 = vpack.c.b16 %v2601, %v2593
    %v2994 = vpack.c.b16 %v2610, %v2602
    %v2995 = vpack.c.b16 %v2611, %v2603
    %v2996 = vpack.c.b16 %v2612, %v2604
    %v2997 = vpack.c.b16 %v2613, %v2605
    %v2998 = vpack.c.b16 %v2614, %v2606
    %v2999 = vpack.c.b16 %v2615, %v2607
    %v3000 = vpack.c.b16 %v2616, %v2608
    %v3001 = vpack.c.b16 %v2617, %v2609
    %v3002 = vpack.c.b16 %v2626, %v2618
    %v3003 = vpack.c.b16 %v2627, %v2619
    %v3004 = vpack.c.b16 %v2628, %v2620
    %v3005 = vpack.c.b16 %v2629, %v2621
    %v3006 = vpack.c.b16 %v2630, %v2622
    %v3007 = vpack.c.b16 %v2631, %v2623
    %v3008 = vpack.c.b16 %v2632, %v2624
    %v3009 = vpack.c.b16 %v2633, %v2625
    %v3010 = vpack.c.b16 %v2642, %v2634
    %v3011 = vpack.c.b16 %v2643, %v2635
    %v3012 = vpack.c.b16 %v2644, %v2636
    %v3013 = vpack.c.b16 %v2645, %v2637
    %v3014 = vpack.c.b16 %v2646, %v2638
    %v3015 = vpack.c.b16 %v2647, %v2639
    %v3016 = vpack.c.b16 %v2648, %v2640
    %v3017 = vpack.c.b16 %v2649, %v2641
    %v3018 = vpack.c.b16 %v2658, %v2650
    %v3019 = vpack.c.b16 %v2659, %v2651
    %v3020 = vpack.c.b16 %v2660, %v2652
    %v3021 = vpack.c.b16 %v2661, %v2653
    %v3022 = vpack.c.b16 %v2662, %v2654
    %v3023 = vpack.c.b16 %v2663, %v2655
    %v3024 = vpack.c.b16 %v2664, %v2656
    %v3025 = vpack.c.b16 %v2665, %v2657
    %v3026 = vpack.c.b16 %v2674, %v2666
    %v3027 = vpack.c.b16 %v2675, %v2667
    %v3028 = vpack.c.b16 %v2676, %v2668
    %v3029 = vpack.c.b16 %v2677, %v2669
    %v3030 = vpack.c.b16 %v2678, %v2670
    %v3031 = vpack.c.b16 %v2679, %v2671
    %v3032 = vpack.c.b16 %v2680, %v2672
    %v3033 = vpack.c.b16 %v2681, %v2673
    %v3034 = vpack.c.b16 %v2690, %v2682
    %v3035 = vpack.c.b16 %v2691, %v2683
    %v3036 = vpack.c.b16 %v2692, %v2684
    %v3037 = vpack.c.b16 %v2693, %v2685
    %v3038 = vpack.c.b16 %v2694, %v2686
    %v3039 = vpack.c.b16 %v2695, %v2687
    %v3040 = vpack.c.b16 %v2696, %v2688
    %v3041 = vpack.c.b16 %v2697, %v2689
    %v3042 = vpack.c.b16 %v2706, %v2698
    %v3043 = vpack.c.b16 %v2707, %v2699
    %v3044 = vpack.c.b16 %v2708, %v2700
    %v3045 = vpack.c.b16 %v2709, %v2701
    %v3046 = vpack.c.b16 %v2710, %v2702
    %v3047 = vpack.c.b16 %v2711, %v2703
    %v3048 = vpack.c.b16 %v2712, %v2704
    %v3049 = vpack.c.b16 %v2713, %v2705
    %v3050 = vpack.c.b16 %v2722, %v2714
    %v3051 = vpack.c.b16 %v2723, %v2715
    %v3052 = vpack.c.b16 %v2724, %v2716
    %v3053 = vpack.c.b16 %v2725, %v2717
    %v3054 = vpack.c.b16 %v2726, %v2718
    %v3055 = vpack.c.b16 %v2727, %v2719
    %v3056 = vpack.c.b16 %v2728, %v2720
    %v3057 = vpack.c.b16 %v2729, %v2721
    %v3058 = vpack.c.b16 %v2738, %v2730
    %v3059 = vpack.c.b16 %v2739, %v2731
    %v3060 = vpack.c.b16 %v2740, %v2732
    %v3061 = vpack.c.b16 %v2741, %v2733
    %v3062 = vpack.c.b16 %v2742, %v2734
    %v3063 = vpack.c.b16 %v2743, %v2735
    %v3064 = vpack.c.b16 %v2744, %v2736
    %v3065 = vpack.c.b16 %v2745, %v2737
    %v3066 = vpack.c.b16 %v2754, %v2746
    %v3067 = vpack.c.b16 %v2755, %v2747
    %v3068 = vpack.c.b16 %v2756, %v2748
    %v3069 = vpack.c.b16 %v2757, %v2749
    %v3070 = vpack.c.b16 %v2758, %v2750
    %v3071 = vpack.c.b16 %v2759, %v2751
    %v3072 = vpack.c.b16 %v2760, %v2752
    %v3073 = vpack.c.b16 %v2761, %v2753
    %v3074 = vpack.c.b16 %v2770, %v2762
    %v3075 = vpack.c.b16 %v2771, %v2763
    %v3076 = vpack.c.b16 %v2772, %v2764
    %v3077 = vpack.c.b16 %v2773, %v2765
    %v3078 = vpack.c.b16 %v2774, %v2766
    %v3079 = vpack.c.b16 %v2775, %v2767
    %v3080 = vpack.c.b16 %v2776, %v2768
    %v3081 = vpack.c.b16 %v2777, %v2769
    %v3082 = vpack.c.b16 %v2786, %v2778
    %v3083 = vpack.c.b16 %v2787, %v2779
    %v3084 = vpack.c.b16 %v2788, %v2780
    %v3085 = vpack.c.b16 %v2789, %v2781
    %v3086 = vpack.c.b16 %v2790, %v2782
    %v3087 = vpack.c.b16 %v2791, %v2783
    %v3088 = vpack.c.b16 %v2792, %v2784
    %v3089 = vpack.c.b16 %v2793, %v2785
    %v3090 = vpack.c.b16 %v2802, %v2794
    %v3091 = vpack.c.b16 %v2803, %v2795
    %v3092 = vpack.c.b16 %v2804, %v2796
    %v3093 = vpack.c.b16 %v2805, %v2797
    %v3094 = vpack.c.b16 %v2806, %v2798
    %v3095 = vpack.c.b16 %v2807, %v2799
    %v3096 = vpack.c.b16 %v2808, %v2800
    %v3097 = vpack.c.b16 %v2809, %v2801
    %v3098 = vpack.c.b16 %v2818, %v2810
    %v3099 = vpack.c.b16 %v2819, %v2811
    %v3100 = vpack.c.b16 %v2820, %v2812
    %v3101 = vpack.c.b16 %v2821, %v2813
    %v3102 = vpack.c.b16 %v2822, %v2814
    %v3103 = vpack.c.b16 %v2823, %v2815
    %v3104 = vpack.c.b16 %v2824, %v2816
    %v3105 = vpack.c.b16 %v2825, %v2817
    %v3106 = vpack.c.b16 %v2834, %v2826
    %v3107 = vpack.c.b16 %v2835, %v2827
    %v3108 = vpack.c.b16 %v2836, %v2828
    %v3109 = vpack.c.b16 %v2837, %v2829
    %v3110 = vpack.c.b16 %v2838, %v2830
    %v3111 = vpack.c.b16 %v2839, %v2831
    %v3112 = vpack.c.b16 %v2840, %v2832
    %v3113 = vpack.c.b16 %v2841, %v2833
    %v3114 = vpack.c.b16 %v2850, %v2842
    %v3115 = vpack.c.b16 %v2851, %v2843
    %v3116 = vpack.c.b16 %v2852, %v2844
    %v3117 = vpack.c.b16 %v2853, %v2845
    %v3118 = vpack.c.b16 %v2854, %v2846
    %v3119 = vpack.c.b16 %v2855, %v2847
    %v3120 = vpack.c.b16 %v2856, %v2848
    %v3121 = vpack.c.b16 %v2857, %v2849
    %v3122 = vpack.c.b16 %v2866, %v2858
    %v3123 = vpack.c.b16 %v2867, %v2859
    %v3124 = vpack.c.b16 %v2868, %v2860
    %v3125 = vpack.c.b16 %v2869, %v2861
    %v3126 = vpack.c.b16 %v2870, %v2862
    %v3127 = vpack.c.b16 %v2871, %v2863
    %v3128 = vpack.c.b16 %v2872, %v2864
    %v3129 = vpack.c.b16 %v2873, %v2865
    %3386 = vmatprep.subr.bf16.mxu0 %v2931
    %3387 = vmatpush1.bf16.msra.mxu0 %v2930
    %3388 = vmatprep.subr.bf16.mxu0 %v2923
    %3389 = vmatpush1.bf16.msra.mxu0 %v2922
    %3390 = vmatprep.subr.bf16.mxu0 %v2915
    %3391 = vmatpush1.bf16.msra.mxu0 %v2914
    %3392 = vmatprep.subr.bf16.mxu0 %v2907
    %3393 = vmatpush1.bf16.msra.mxu0 %v2906
    %3394 = vmatprep.subr.bf16.mxu0 %v2899
    %3395 = vmatpush1.bf16.msra.mxu0 %v2898
    %3396 = vmatprep.subr.bf16.mxu0 %v2891
    %3397 = vmatpush1.bf16.msra.mxu0 %v2890
    %3398 = vmatprep.subr.bf16.mxu0 %v2883
    %3399 = vmatpush1.bf16.msra.mxu0 %v2882
    %3400 = vmatprep.subr.bf16.mxu0 %v2875
    %3401 = vmatpush1.bf16.msra.mxu0 %v2874
    %3402 = vmatprep.subr.bf16.mxu0 %v2995
    %3403 = vmatpush2.bf16.msra.mxu0 %v2994
    %3404 = vmatprep.subr.bf16.mxu0 %v2987
    %3405 = vmatpush2.bf16.msra.mxu0 %v2986
    %3406 = vmatprep.subr.bf16.mxu0 %v2979
    %3407 = vmatpush2.bf16.msra.mxu0 %v2978
    %3408 = vmatprep.subr.bf16.mxu0 %v2971
    %3409 = vmatpush2.bf16.msra.mxu0 %v2970
    %3410 = vmatprep.subr.bf16.mxu0 %v2963
    %3411 = vmatpush2.bf16.msra.mxu0 %v2962
    %3412 = vmatprep.subr.bf16.mxu0 %v2955
    %3413 = vmatpush2.bf16.msra.mxu0 %v2954
    %3414 = vmatprep.subr.bf16.mxu0 %v2947
    %3415 = vmatpush2.bf16.msra.mxu0 %v2946
    %3416 = vmatprep.subr.bf16.mxu0 %v2939
    %3417 = vmatpush2.bf16.msra.mxu0 %v2938
    %3418 = vmatprep.mubr.bf16.mxu0 %v1805
    %3419 = vmatmul.mubr.bf16.gmra.mxu0 %v1804
    %v3420 = vpop.f32.mrf.mxu0
    %v3421 = vadd.f32 %v2069, %v3420
    %v3422 = vpop.f32.mrf.mxu0
    %v3423 = vadd.f32 %v2073, %v3422
    %v3424 = vpop.f32.mrf.mxu0
    %v3425 = vpop.f32.mrf.mxu0
    %3426 = vdwg.mxu0
    %3427 = vmatprep.subr.bf16.mxu0 %v3059
    %3428 = vmatpush1.bf16.msra.mxu0 %v3058
    %3429 = vmatprep.subr.bf16.mxu0 %v3051
    %3430 = vmatpush1.bf16.msra.mxu0 %v3050
    %3431 = vmatprep.subr.bf16.mxu0 %v3043
    %3432 = vmatpush1.bf16.msra.mxu0 %v3042
    %3433 = vmatprep.subr.bf16.mxu0 %v3035
    %3434 = vmatpush1.bf16.msra.mxu0 %v3034
    %3435 = vmatprep.subr.bf16.mxu0 %v3027
    %3436 = vmatpush1.bf16.msra.mxu0 %v3026
    %3437 = vmatprep.subr.bf16.mxu0 %v3019
    %3438 = vmatpush1.bf16.msra.mxu0 %v3018
    %3439 = vmatprep.subr.bf16.mxu0 %v3011
    %3440 = vmatpush1.bf16.msra.mxu0 %v3010
    %3441 = vmatprep.subr.bf16.mxu0 %v3003
    %3442 = vmatpush1.bf16.msra.mxu0 %v3002
    %3443 = vmatprep.subr.bf16.mxu0 %v3123
    %3444 = vmatpush2.bf16.msra.mxu0 %v3122
    %3445 = vmatprep.subr.bf16.mxu0 %v3115
    %3446 = vmatpush2.bf16.msra.mxu0 %v3114
    %3447 = vmatprep.subr.bf16.mxu0 %v3107
    %3448 = vmatpush2.bf16.msra.mxu0 %v3106
    %3449 = vmatprep.subr.bf16.mxu0 %v3099
    %3450 = vmatpush2.bf16.msra.mxu0 %v3098
    %3451 = vmatprep.subr.bf16.mxu0 %v3091
    %3452 = vmatpush2.bf16.msra.mxu0 %v3090
    %3453 = vmatprep.subr.bf16.mxu0 %v3083
    %3454 = vmatpush2.bf16.msra.mxu0 %v3082
    %3455 = vmatprep.subr.bf16.mxu0 %v3075
    %3456 = vmatpush2.bf16.msra.mxu0 %v3074
    %3457 = vmatprep.subr.bf16.mxu0 %v3067
    %3458 = vmatpush2.bf16.msra.mxu0 %v3066
    %3459 = vmatprep.mubr.bf16.mxu0 %v1807
    %3460 = vmatmul.mubr.bf16.gmra.mxu0 %v1806
    %v3461 = vpop.f32.mrf.mxu0
    %v3462 = vadd.f32 %v3421, %v3461
    %v3463 = vpop.f32.mrf.mxu0
    %v3464 = vadd.f32 %v3423, %v3463
    %v3465 = vpop.f32.mrf.mxu0
    %v3466 = vpop.f32.mrf.mxu0
    %3467 = vdwg.mxu0
    %3468 = vmatprep.subr.bf16.mxu0 %v2933
    %3469 = vmatpush1.bf16.msra.mxu0 %v2932
    %3470 = vmatprep.subr.bf16.mxu0 %v2925
    %3471 = vmatpush1.bf16.msra.mxu0 %v2924
    %3472 = vmatprep.subr.bf16.mxu0 %v2917
    %3473 = vmatpush1.bf16.msra.mxu0 %v2916
    %3474 = vmatprep.subr.bf16.mxu0 %v2909
    %3475 = vmatpush1.bf16.msra.mxu0 %v2908
    %3476 = vmatprep.subr.bf16.mxu0 %v2901
    %3477 = vmatpush1.bf16.msra.mxu0 %v2900
    %3478 = vmatprep.subr.bf16.mxu0 %v2893
    %3479 = vmatpush1.bf16.msra.mxu0 %v2892
    %3480 = vmatprep.subr.bf16.mxu0 %v2885
    %3481 = vmatpush1.bf16.msra.mxu0 %v2884
    %3482 = vmatprep.subr.bf16.mxu0 %v2877
    %3483 = vmatpush1.bf16.msra.mxu0 %v2876
    %3484 = vmatprep.subr.bf16.mxu0 %v2997
    %3485 = vmatpush2.bf16.msra.mxu0 %v2996
    %3486 = vmatprep.subr.bf16.mxu0 %v2989
    %3487 = vmatpush2.bf16.msra.mxu0 %v2988
    %3488 = vmatprep.subr.bf16.mxu0 %v2981
    %3489 = vmatpush2.bf16.msra.mxu0 %v2980
    %3490 = vmatprep.subr.bf16.mxu0 %v2973
    %3491 = vmatpush2.bf16.msra.mxu0 %v2972
    %3492 = vmatprep.subr.bf16.mxu0 %v2965
    %3493 = vmatpush2.bf16.msra.mxu0 %v2964
    %3494 = vmatprep.subr.bf16.mxu0 %v2957
    %3495 = vmatpush2.bf16.msra.mxu0 %v2956
    %3496 = vmatprep.subr.bf16.mxu0 %v2949
    %3497 = vmatpush2.bf16.msra.mxu0 %v2948
    %3498 = vmatprep.subr.bf16.mxu0 %v2941
    %3499 = vmatpush2.bf16.msra.mxu0 %v2940
    %3500 = vmatprep.mubr.bf16.mxu0 %v1805
    %3501 = vmatmul.mubr.bf16.gmra.mxu0 %v1804
    %v3502 = vpop.f32.mrf.mxu0
    %v3503 = vadd.f32 %v2077, %v3502
    %v3504 = vpop.f32.mrf.mxu0
    %v3505 = vadd.f32 %v2081, %v3504
    %v3506 = vpop.f32.mrf.mxu0
    %v3507 = vpop.f32.mrf.mxu0
    %3508 = vdwg.mxu0
    %3509 = vmatprep.subr.bf16.mxu0 %v3061
    %3510 = vmatpush1.bf16.msra.mxu0 %v3060
    %3511 = vmatprep.subr.bf16.mxu0 %v3053
    %3512 = vmatpush1.bf16.msra.mxu0 %v3052
    %3513 = vmatprep.subr.bf16.mxu0 %v3045
    %3514 = vmatpush1.bf16.msra.mxu0 %v3044
    %3515 = vmatprep.subr.bf16.mxu0 %v3037
    %3516 = vmatpush1.bf16.msra.mxu0 %v3036
    %3517 = vmatprep.subr.bf16.mxu0 %v3029
    %3518 = vmatpush1.bf16.msra.mxu0 %v3028
    %3519 = vmatprep.subr.bf16.mxu0 %v3021
    %3520 = vmatpush1.bf16.msra.mxu0 %v3020
    %3521 = vmatprep.subr.bf16.mxu0 %v3013
    %3522 = vmatpush1.bf16.msra.mxu0 %v3012
    %3523 = vmatprep.subr.bf16.mxu0 %v3005
    %3524 = vmatpush1.bf16.msra.mxu0 %v3004
    %3525 = vmatprep.subr.bf16.mxu0 %v3125
    %3526 = vmatpush2.bf16.msra.mxu0 %v3124
    %3527 = vmatprep.subr.bf16.mxu0 %v3117
    %3528 = vmatpush2.bf16.msra.mxu0 %v3116
    %3529 = vmatprep.subr.bf16.mxu0 %v3109
    %3530 = vmatpush2.bf16.msra.mxu0 %v3108
    %3531 = vmatprep.subr.bf16.mxu0 %v3101
    %3532 = vmatpush2.bf16.msra.mxu0 %v3100
    %3533 = vmatprep.subr.bf16.mxu0 %v3093
    %3534 = vmatpush2.bf16.msra.mxu0 %v3092
    %3535 = vmatprep.subr.bf16.mxu0 %v3085
    %3536 = vmatpush2.bf16.msra.mxu0 %v3084
    %3537 = vmatprep.subr.bf16.mxu0 %v3077
    %3538 = vmatpush2.bf16.msra.mxu0 %v3076
    %3539 = vmatprep.subr.bf16.mxu0 %v3069
    %3540 = vmatpush2.bf16.msra.mxu0 %v3068
    %3541 = vmatprep.mubr.bf16.mxu0 %v1807
    %3542 = vmatmul.mubr.bf16.gmra.mxu0 %v1806
    %v3543 = vpop.f32.mrf.mxu0
    %v3544 = vadd.f32 %v3503, %v3543
    %v3545 = vpop.f32.mrf.mxu0
    %v3546 = vadd.f32 %v3505, %v3545
    %v3547 = vpop.f32.mrf.mxu0
    %v3548 = vpop.f32.mrf.mxu0
    %3549 = vdwg.mxu0
    %3550 = vmatprep.subr.bf16.mxu0 %v2935
    %3551 = vmatpush1.bf16.msra.mxu0 %v2934
    %3552 = vmatprep.subr.bf16.mxu0 %v2927
    %3553 = vmatpush1.bf16.msra.mxu0 %v2926
    %3554 = vmatprep.subr.bf16.mxu0 %v2919
    %3555 = vmatpush1.bf16.msra.mxu0 %v2918
    %3556 = vmatprep.subr.bf16.mxu0 %v2911
    %3557 = vmatpush1.bf16.msra.mxu0 %v2910
    %3558 = vmatprep.subr.bf16.mxu0 %v2903
    %3559 = vmatpush1.bf16.msra.mxu0 %v2902
    %3560 = vmatprep.subr.bf16.mxu0 %v2895
    %3561 = vmatpush1.bf16.msra.mxu0 %v2894
    %3562 = vmatprep.subr.bf16.mxu0 %v2887
    %3563 = vmatpush1.bf16.msra.mxu0 %v2886
    %3564 = vmatprep.subr.bf16.mxu0 %v2879
    %3565 = vmatpush1.bf16.msra.mxu0 %v2878
    %3566 = vmatprep.subr.bf16.mxu0 %v2999
    %3567 = vmatpush2.bf16.msra.mxu0 %v2998
    %3568 = vmatprep.subr.bf16.mxu0 %v2991
    %3569 = vmatpush2.bf16.msra.mxu0 %v2990
    %3570 = vmatprep.subr.bf16.mxu0 %v2983
    %3571 = vmatpush2.bf16.msra.mxu0 %v2982
    %3572 = vmatprep.subr.bf16.mxu0 %v2975
    %3573 = vmatpush2.bf16.msra.mxu0 %v2974
    %3574 = vmatprep.subr.bf16.mxu0 %v2967
    %3575 = vmatpush2.bf16.msra.mxu0 %v2966
    %3576 = vmatprep.subr.bf16.mxu0 %v2959
    %3577 = vmatpush2.bf16.msra.mxu0 %v2958
    %3578 = vmatprep.subr.bf16.mxu0 %v2951
    %3579 = vmatpush2.bf16.msra.mxu0 %v2950
    %3580 = vmatprep.subr.bf16.mxu0 %v2943
    %3581 = vmatpush2.bf16.msra.mxu0 %v2942
    %3582 = vmatprep.mubr.bf16.mxu0 %v1805
    %3583 = vmatmul.mubr.bf16.gmra.mxu0 %v1804
    %v3584 = vpop.f32.mrf.mxu0
    %v3585 = vadd.f32 %v2085, %v3584
    %v3586 = vpop.f32.mrf.mxu0
    %v3587 = vadd.f32 %v2089, %v3586
    %v3588 = vpop.f32.mrf.mxu0
    %v3589 = vpop.f32.mrf.mxu0
    %3590 = vdwg.mxu0
    %3591 = vmatprep.subr.bf16.mxu0 %v3063
    %3592 = vmatpush1.bf16.msra.mxu0 %v3062
    %3593 = vmatprep.subr.bf16.mxu0 %v3055
    %3594 = vmatpush1.bf16.msra.mxu0 %v3054
    %3595 = vmatprep.subr.bf16.mxu0 %v3047
    %3596 = vmatpush1.bf16.msra.mxu0 %v3046
    %3597 = vmatprep.subr.bf16.mxu0 %v3039
    %3598 = vmatpush1.bf16.msra.mxu0 %v3038
    %3599 = vmatprep.subr.bf16.mxu0 %v3031
    %3600 = vmatpush1.bf16.msra.mxu0 %v3030
    %3601 = vmatprep.subr.bf16.mxu0 %v3023
    %3602 = vmatpush1.bf16.msra.mxu0 %v3022
    %3603 = vmatprep.subr.bf16.mxu0 %v3015
    %3604 = vmatpush1.bf16.msra.mxu0 %v3014
    %3605 = vmatprep.subr.bf16.mxu0 %v3007
    %3606 = vmatpush1.bf16.msra.mxu0 %v3006
    %3607 = vmatprep.subr.bf16.mxu0 %v3127
    %3608 = vmatpush2.bf16.msra.mxu0 %v3126
    %3609 = vmatprep.subr.bf16.mxu0 %v3119
    %3610 = vmatpush2.bf16.msra.mxu0 %v3118
    %3611 = vmatprep.subr.bf16.mxu0 %v3111
    %3612 = vmatpush2.bf16.msra.mxu0 %v3110
    %3613 = vmatprep.subr.bf16.mxu0 %v3103
    %3614 = vmatpush2.bf16.msra.mxu0 %v3102
    %3615 = vmatprep.subr.bf16.mxu0 %v3095
    %3616 = vmatpush2.bf16.msra.mxu0 %v3094
    %3617 = vmatprep.subr.bf16.mxu0 %v3087
    %3618 = vmatpush2.bf16.msra.mxu0 %v3086
    %3619 = vmatprep.subr.bf16.mxu0 %v3079
    %3620 = vmatpush2.bf16.msra.mxu0 %v3078
    %3621 = vmatprep.subr.bf16.mxu0 %v3071
    %3622 = vmatpush2.bf16.msra.mxu0 %v3070
    %3623 = vmatprep.mubr.bf16.mxu0 %v1807
    %3624 = vmatmul.mubr.bf16.gmra.mxu0 %v1806
    %v3625 = vpop.f32.mrf.mxu0
    %v3626 = vadd.f32 %v3585, %v3625
    %v3627 = vpop.f32.mrf.mxu0
    %v3628 = vadd.f32 %v3587, %v3627
    %v3629 = vpop.f32.mrf.mxu0
    %v3630 = vpop.f32.mrf.mxu0
    %3631 = vdwg.mxu0
    %3632 = vmatprep.subr.bf16.mxu0 %v2937
    %3633 = vmatpush1.bf16.msra.mxu0 %v2936
    %3634 = vmatprep.subr.bf16.mxu0 %v2929
    %3635 = vmatpush1.bf16.msra.mxu0 %v2928
    %3636 = vmatprep.subr.bf16.mxu0 %v2921
    %3637 = vmatpush1.bf16.msra.mxu0 %v2920
    %3638 = vmatprep.subr.bf16.mxu0 %v2913
    %3639 = vmatpush1.bf16.msra.mxu0 %v2912
    %3640 = vmatprep.subr.bf16.mxu0 %v2905
    %3641 = vmatpush1.bf16.msra.mxu0 %v2904
    %3642 = vmatprep.subr.bf16.mxu0 %v2897
    %3643 = vmatpush1.bf16.msra.mxu0 %v2896
    %3644 = vmatprep.subr.bf16.mxu0 %v2889
    %3645 = vmatpush1.bf16.msra.mxu0 %v2888
    %3646 = vmatprep.subr.bf16.mxu0 %v2881
    %3647 = vmatpush1.bf16.msra.mxu0 %v2880
    %3648 = vmatprep.subr.bf16.mxu0 %v3001
    %3649 = vmatpush2.bf16.msra.mxu0 %v3000
    %3650 = vmatprep.subr.bf16.mxu0 %v2993
    %3651 = vmatpush2.bf16.msra.mxu0 %v2992
    %3652 = vmatprep.subr.bf16.mxu0 %v2985
    %3653 = vmatpush2.bf16.msra.mxu0 %v2984
    %3654 = vmatprep.subr.bf16.mxu0 %v2977
    %3655 = vmatpush2.bf16.msra.mxu0 %v2976
    %3656 = vmatprep.subr.bf16.mxu0 %v2969
    %3657 = vmatpush2.bf16.msra.mxu0 %v2968
    %3658 = vmatprep.subr.bf16.mxu0 %v2961
    %3659 = vmatpush2.bf16.msra.mxu0 %v2960
    %3660 = vmatprep.subr.bf16.mxu0 %v2953
    %3661 = vmatpush2.bf16.msra.mxu0 %v2952
    %3662 = vmatprep.subr.bf16.mxu0 %v2945
    %3663 = vmatpush2.bf16.msra.mxu0 %v2944
    %3664 = vmatprep.mubr.bf16.mxu0 %v1805
    %3665 = vmatmul.mubr.bf16.gmra.mxu0 %v1804
    %v3666 = vpop.f32.mrf.mxu0
    %v3667 = vadd.f32 %v2093, %v3666
    %v3668 = vpop.f32.mrf.mxu0
    %v3669 = vadd.f32 %v2097, %v3668
    %v3670 = vpop.f32.mrf.mxu0
    %v3671 = vpop.f32.mrf.mxu0
    %3672 = vdwg.mxu0
    %3673 = vmatprep.subr.bf16.mxu0 %v3065
    %3674 = vmatpush1.bf16.msra.mxu0 %v3064
    %3675 = vmatprep.subr.bf16.mxu0 %v3057
    %3676 = vmatpush1.bf16.msra.mxu0 %v3056
    %3677 = vmatprep.subr.bf16.mxu0 %v3049
    %3678 = vmatpush1.bf16.msra.mxu0 %v3048
    %3679 = vmatprep.subr.bf16.mxu0 %v3041
    %3680 = vmatpush1.bf16.msra.mxu0 %v3040
    %3681 = vmatprep.subr.bf16.mxu0 %v3033
    %3682 = vmatpush1.bf16.msra.mxu0 %v3032
    %3683 = vmatprep.subr.bf16.mxu0 %v3025
    %3684 = vmatpush1.bf16.msra.mxu0 %v3024
    %3685 = vmatprep.subr.bf16.mxu0 %v3017
    %3686 = vmatpush1.bf16.msra.mxu0 %v3016
    %3687 = vmatprep.subr.bf16.mxu0 %v3009
    %3688 = vmatpush1.bf16.msra.mxu0 %v3008
    %3689 = vmatprep.subr.bf16.mxu0 %v3129
    %3690 = vmatpush2.bf16.msra.mxu0 %v3128
    %3691 = vmatprep.subr.bf16.mxu0 %v3121
    %3692 = vmatpush2.bf16.msra.mxu0 %v3120
    %3693 = vmatprep.subr.bf16.mxu0 %v3113
    %3694 = vmatpush2.bf16.msra.mxu0 %v3112
    %3695 = vmatprep.subr.bf16.mxu0 %v3105
    %3696 = vmatpush2.bf16.msra.mxu0 %v3104
    %3697 = vmatprep.subr.bf16.mxu0 %v3097
    %3698 = vmatpush2.bf16.msra.mxu0 %v3096
    %3699 = vmatprep.subr.bf16.mxu0 %v3089
    %3700 = vmatpush2.bf16.msra.mxu0 %v3088
    %3701 = vmatprep.subr.bf16.mxu0 %v3081
    %3702 = vmatpush2.bf16.msra.mxu0 %v3080
    %3703 = vmatprep.subr.bf16.mxu0 %v3073
    %3704 = vmatpush2.bf16.msra.mxu0 %v3072
    %3705 = vmatprep.mubr.bf16.mxu0 %v1807
    %3706 = vmatmul.mubr.bf16.gmra.mxu0 %v1806
    %v3707 = vpop.f32.mrf.mxu0
    %v3708 = vadd.f32 %v3667, %v3707
    %v3709 = vpop.f32.mrf.mxu0
    %v3710 = vadd.f32 %v3669, %v3709
    %v3711 = vpop.f32.mrf.mxu0
    %v3712 = vpop.f32.mrf.mxu0
    %3713 = vdwg.mxu0
    %v3714 = vsub.f32 0.0, %v3462
    %v3715 = vsub.f32 0.0, %v3464
    %v3716 = vsub.f32 0.0, %v3544
    %v3717 = vsub.f32 0.0, %v3546
    %v3718 = vsub.f32 0.0, %v3626
    %v3719 = vsub.f32 0.0, %v3628
    %v3720 = vsub.f32 0.0, %v3708
    %v3721 = vsub.f32 0.0, %v3710
    %v3722 = vmul.f32 %v3714, 1.442695
    %v3723 = vpow.pop %v3722
    %v3724 = vmul.f32 %v3715, 1.442695
    %v3725 = vpow.pop %v3724
    %v3726 = vmul.f32 %v3716, 1.442695
    %v3727 = vpow.pop %v3726
    %v3728 = vmul.f32 %v3717, 1.442695
    %v3729 = vpow.pop %v3728
    %v3730 = vmul.f32 %v3718, 1.442695
    %v3731 = vpow.pop %v3730
    %v3732 = vmul.f32 %v3719, 1.442695
    %v3733 = vpow.pop %v3732
    %v3734 = vmul.f32 %v3720, 1.442695
    %v3735 = vpow.pop %v3734
    %v3736 = vmul.f32 %v3721, 1.442695
    %v3737 = vpow.pop %v3736
    %v3738 = vadd.f32 %v3723, 1.0
    %v3739 = vadd.f32 %v3725, 1.0
    %v3740 = vadd.f32 %v3727, 1.0
    %v3741 = vadd.f32 %v3729, 1.0
    %v3742 = vadd.f32 %v3731, 1.0
    %v3743 = vadd.f32 %v3733, 1.0
    %v3744 = vadd.f32 %v3735, 1.0
    %v3745 = vadd.f32 %v3737, 1.0
    %v3746 = vrcp.pop %v3738
    %v3747 = vrcp.pop %v3739
    %v3748 = vrcp.pop %v3740
    %v3749 = vrcp.pop %v3741
    %v3750 = vrcp.pop %v3742
    %v3751 = vrcp.pop %v3743
    %v3752 = vrcp.pop %v3744
    %v3753 = vrcp.pop %v3745
    %v3754 = vmin.f32 %v3746, 1.0
    %v3755 = vmin.f32 %v3747, 1.0
    %v3756 = vmin.f32 %v3748, 1.0
    %v3757 = vmin.f32 %v3749, 1.0
    %v3758 = vmin.f32 %v3750, 1.0
    %v3759 = vmin.f32 %v3751, 1.0
    %v3760 = vmin.f32 %v3752, 1.0
    %v3761 = vmin.f32 %v3753, 1.0
    %3762 = vst [vmem:[#allocation16] sm:$0xff] %v3754
    %3763 = vst [vmem:[#allocation16 + $0x8] sm:$0xff] %v3755
    %3764 = vst [vmem:[#allocation16 + $0x10] sm:$0xff] %v3756
    %3765 = vst [vmem:[#allocation16 + $0x18] sm:$0xff] %v3757
    %3766 = vst [vmem:[#allocation16 + $0x20] sm:$0xff] %v3758
    %3767 = vst [vmem:[#allocation16 + $0x28] sm:$0xff] %v3759
    %3768 = vst [vmem:[#allocation16 + $0x30] sm:$0xff] %v3760
    %3769 = vst [vmem:[#allocation16 + $0x38] sm:$0xff] %v3761
    // Predicated region
    $region78: #{tpu_custom_call.1} parent=1 // pred_check
      _
    $region79: #{tpu_custom_call.1} parent=1 // pred_check_branch
      %3771 = sbr.rel (0) target = $region81
    $region80: #{tpu_custom_call.1} parent=1 // pred_region
      %s3773 = ssub.s32 1024, 1024
      %3774 = vsyncadd [#allocation4], %s3773
      %s3776 = sshll.u32 [#allocation16], 4
      %s3777 = int_to_ptr.vmem [resolvable:$true] %s3776
      %3779 = dma.vmem_to_hbm [thread:$0]  %s3777, 1024, %s11, [#allocation4]
    $region81: #{tpu_custom_call.1} parent=1 // pred_fallthru
      _
    // Predicated region
    $region82: #{tpu_custom_call.1} parent=1 // pred_check
      _
    $region83: #{tpu_custom_call.1} parent=1 // pred_check_branch
      %3781 = sbr.rel (0) target = $region85
    $region84: #{tpu_custom_call.1} parent=1 // pred_region
      %3782 = dma.done [#allocation4], 1024
    $region85: #{tpu_custom_call.1} parent=1 // pred_fallthru
      _
    %3783 = vsyncpa [#allocation3], 1
    %3784 = vsyncpa [#allocation6], 1
    %3785 = vsyncpa [#allocation9], 1
    %3786 = vsyncpa [#allocation12], 1
    %3787 = vsyncpa [#allocation15], 1
    %3788 = vsyncpa [#allocation4], 1

</llo_original>
